<compile_context>
chip_gen: v6e
topology: v6e:2x2x1
jax: 0.10.0
libtpu: 0.0.40
codegen_flags: <defaults>
</compile_context>

<pallas_src>
import functools

import jax
import jax.numpy as jnp
from jax.experimental import pallas as pl
from jax.experimental.pallas import tpu as pltpu

LN_EPS = 1e-5
MASK_NEG = -1e9          # additive key-padding mask value (f32-safe)
BF16 = jnp.bfloat16

# Abramowitz & Stegun 7.1.26 erf polynomial (|err| < 1.5e-7). Used instead of
# lax.erf so the kernel only needs exp/mul/add/where (guaranteed Mosaic ops).
_ERF_A1, _ERF_A2, _ERF_A3 = 0.254829592, -0.284496736, 1.421413741
_ERF_A4, _ERF_A5, _ERF_P = -1.453152027, 1.061405429, 0.3275911


def _erf(x):
    ax = jnp.abs(x)
    t = 1.0 / (1.0 + _ERF_P * ax)
    poly = ((((_ERF_A5 * t + _ERF_A4) * t + _ERF_A3) * t + _ERF_A2) * t + _ERF_A1) * t
    y = 1.0 - poly * jnp.exp(-ax * ax)
    return jnp.where(x < 0, -y, y)


def _gelu(x):
    # F.gelu default (erf-based).  Kept in f32 for the erf polynomial accuracy;
    # the result is cast to bf16 right before the second FFN matmul.
    return 0.5 * x * (1.0 + _erf(x * 0.7071067811865476))


def _layer_norm(x, gamma, beta):
    mean = jnp.mean(x, axis=-1, keepdims=True)
    var = jnp.mean((x - mean) ** 2, axis=-1, keepdims=True)
    return (x - mean) * jax.lax.rsqrt(var + LN_EPS) * gamma + beta


def _mha_core(qp, kp, vp, mask_1s, *, num_heads):
    """Head-batched attention for one batch element.

    qp/kp/vp: (S, E) f32 (q already pre-scaled via the weights); mask_1s: (1, S).
    """
    S, E = qp.shape
    head_dim = E // num_heads

    def to_heads(x):                                   # (S, E) -> (H, S, Hd)
        return jnp.swapaxes(x.reshape(S, num_heads, head_dim), 0, 1).astype(BF16)

    qh, kh, vh = to_heads(qp), to_heads(kp), to_heads(vp)

    s = jnp.einsum('hqd,hkd->hqk', qh, kh,
                   preferred_element_type=jnp.float32)            # (H, S, S)
    s = s + mask_1s[None]          # single broadcast add of the key-padding mask

    m = jnp.max(s, axis=-1, keepdims=True)
    p = jnp.exp(s - m)
    p = p / jnp.sum(p, axis=-1, keepdims=True)         # exact normalization
    ctx = jnp.einsum('hqk,hkd->hqd', p.astype(BF16), vh,
                     preferred_element_type=jnp.float32)          # (H, S, Hd)
    return jnp.swapaxes(ctx, 0, 1).reshape(S, E)                  # (S, E)


def _postnorm_layer(x_q, qp, kp, vp, mask_1s,
                    wo, bo, g1, be1, w1, b1, w2, b2, g2, be2, *, num_heads):
    """Post-norm TransformerEncoderLayer body (residual_strategy = 'sum')."""
    ctx = _mha_core(qp, kp, vp, mask_1s, num_heads=num_heads)
    attn = jnp.dot(ctx.astype(BF16), wo, preferred_element_type=jnp.float32) + bo
    x1 = _layer_norm(x_q + attn, g1, be1)                 # norm1(q + sa)

    h = jnp.dot(x1.astype(BF16), w1, preferred_element_type=jnp.float32) + b1
    h = _gelu(h)                                          # (S, FF)
    y = jnp.dot(h.astype(BF16), w2, preferred_element_type=jnp.float32) + b2
    return _layer_norm(x1 + y, g2, be2)                   # norm2(x1 + ff(x1))


def _encoder_stack_kernel(x_ref, mask_ref,
                          wqkv_ref, bqkv_ref, wo_ref, bo_ref, g1_ref, be1_ref,
                          w1_ref, b1_ref, w2_ref, b2_ref, g2_ref, be2_ref,
                          out_ref, *, num_heads):
    """Self-attention stack: grid = (batch, layer); activation resident in out_ref."""
    l = pl.program_id(1)

    @pl.when(l == 0)
    def _():
        out_ref[...] = x_ref[...]

    x = out_ref[0]                                        # (S, E) f32
    E = x.shape[-1]
    # fused Q/K/V projection: one bf16 MXU matmul, N = 3E (lane-dense output)
    qkv = (jnp.dot(x.astype(BF16), wqkv_ref[...],
                   preferred_element_type=jnp.float32) + bqkv_ref[...])
    y = _postnorm_layer(x, qkv[:, :E], qkv[:, E:2 * E], qkv[:, 2 * E:],
                        mask_ref[0],
                        wo_ref[...], bo_ref[...], g1_ref[...], be1_ref[...],
                        w1_ref[...], b1_ref[...], w2_ref[...], b2_ref[...],
                        g2_ref[...], be2_ref[...], num_heads=num_heads)
    out_ref[...] = y[None]


def _decoder_stack_kernel(x_ref, kv_ref, mask_ref,
                          wqkv_ref, bqkv_ref, wo_ref, bo_ref, g1_ref, be1_ref,
                          w1_ref, b1_ref, w2_ref, b2_ref, g2_ref, be2_ref,
                          out_ref, kvp_ref, *, num_heads):
    """Cross-attention stack: q = previous layer output, k = v = encoder output."""
    l = pl.program_id(1)
    E = out_ref.shape[-1]

    @pl.when(l == 0)
    def _():
        out_ref[...] = x_ref[...]
        # K/V come from the layer-invariant encoder output with clone-shared
        # weights: project once per batch element, keep resident in VMEM scratch.
        kv_proj = (jnp.dot(kv_ref[0].astype(BF16), wqkv_ref[...],
                           preferred_element_type=jnp.float32) + bqkv_ref[...])
        kvp_ref[...] = kv_proj[:, E:]                     # (S, 2E)

    x = out_ref[0]                                        # (S, E)
    qkv = (jnp.dot(x.astype(BF16), wqkv_ref[...],
                   preferred_element_type=jnp.float32) + bqkv_ref[...])
    kvp = kvp_ref[...]
    y = _postnorm_layer(x, qkv[:, :E], kvp[:, :E], kvp[:, E:],
                        mask_ref[0],
                        wo_ref[...], bo_ref[...], g1_ref[...], be1_ref[...],
                        w1_ref[...], b1_ref[...], w2_ref[...], b2_ref[...],
                        g2_ref[...], be2_ref[...], num_heads=num_heads)
    out_ref[...] = y[None]


_W_ORDER = ('wqkv', 'bqkv', 'wo', 'bo', 'g1', 'be1',
            'w1', 'b1', 'w2', 'b2', 'g2', 'be2')


def _stack_cost_estimate(B, S, E, FF, H, L, has_kv):
    flops = int(B * L * (2 * S * E * 3 * E      # fused qkv projection
                         + 4 * S * S * E        # scores + context
                         + 2 * S * E * E        # output projection
                         + 4 * S * E * FF))     # FFN
    transcendentals = int(B * L * (H * S * S + S * FF))
    act_bytes = 4 * B * S * E
    w_bytes = 2 * E * (3 * E + E) + 4 * E * FF + 4 * (4 * E + 3 * E + FF)
    bytes_accessed = int(act_bytes * (3 if has_kv else 2) + w_bytes)
    return pl.CostEstimate(flops=flops, transcendentals=transcendentals,
                           bytes_accessed=bytes_accessed)


def _run_stack(x, mask_add, params, *, num_layers, num_heads, kv=None,
               vmem_limit_bytes=32 * 1024 * 1024):
    """Run all `num_layers` layers of one stack in a single pallas_call."""
    B, S, E = x.shape
    FF = params['w1'].shape[-1]
    weights = [params[n] for n in _W_ORDER]

    # Clone-shared weights (deepcopy init): constant block index -> DMA'd once,
    # resident for the whole grid (no per-layer re-streaming from HBM).
    # TODO(synk): for per-layer checkpoints, stack a leading L axis and use
    #             index_map lambda b, l: (l, 0, 0) instead.
    def w_spec(w):
        return pl.BlockSpec(w.shape, lambda b, l: (0,) * w.ndim)

    act_spec = pl.BlockSpec((1, S, E), lambda b, l: (b, 0, 0))
    mask_spec = pl.BlockSpec((1, 1, S), lambda b, l: (b, 0, 0))

    if kv is None:
        kernel = functools.partial(_encoder_stack_kernel, num_heads=num_heads)
        inputs = [x, mask_add] + weights
        in_specs = [act_spec, mask_spec] + [w_spec(w) for w in weights]
        scratch = []
        io_aliases = {}
    else:
        kernel = functools.partial(_decoder_stack_kernel, num_heads=num_heads)
        inputs = [x, kv, mask_add] + weights
        in_specs = [act_spec, act_spec, mask_spec] + [w_spec(w) for w in weights]
        scratch = [pltpu.VMEM((S, 2 * E), jnp.float32)]     # cached K/V projections
        io_aliases = {0: 0}   # x is dead after this call -> alias it to the output

    return pl.pallas_call(
        kernel,
        out_shape=jax.ShapeDtypeStruct((B, S, E), jnp.float32),
        grid_spec=pltpu.PrefetchScalarGridSpec(
            num_scalar_prefetch=0,
            grid=(B, num_layers),                 # batch parallel, layers sequential
            in_specs=in_specs,
            out_specs=act_spec,
            scratch_shapes=scratch),
        input_output_aliases=io_aliases,
        compiler_params=pltpu.CompilerParams(
            dimension_semantics=("parallel", "arbitrary"),
            vmem_limit_bytes=vmem_limit_bytes),
        cost_estimate=_stack_cost_estimate(B, S, E, FF, num_heads, num_layers,
                                           kv is not None),
    )(*inputs)


def init_stack_params(key, embed_dim, num_heads, dim_feedforward):
    """Synthetic parameters, pre-arranged for the fused kernel.

    All clones in a stack share init (deepcopy semantics), so one parameter set
    is shared by every layer.  The Q third of the fused in-projection is
    pre-scaled by 1/sqrt(head_dim); MXU weights are stored bf16, the rest f32.
    """
    E, FF = embed_dim, dim_feedforward
    head_dim = E // num_heads
    ks = jax.random.split(key, 8)

    def rnd(k, shape, scale=0.05):
        return scale * jax.random.normal(k, shape, dtype=jnp.float32)

    # PyTorch-shaped parameters
    in_proj_w = rnd(ks[0], (3 * E, E))          # MultiheadAttention.in_proj_weight
    in_proj_b = rnd(ks[1], (3 * E,))
    out_proj_w = rnd(ks[2], (E, E))
    out_proj_b = rnd(ks[3], (E,))
    w1 = rnd(ks[4], (FF, E))                    # linear1.weight
    b1 = rnd(ks[5], (FF,))
    w2 = rnd(ks[6], (E, FF))                    # linear2.weight
    b2 = rnd(ks[7], (E,))

    scale = 1.0 / (float(head_dim) ** 0.5)
    wq, wk, wv = in_proj_w[:E], in_proj_w[E:2 * E], in_proj_w[2 * E:]
    bq, bk, bv = in_proj_b[:E], in_proj_b[E:2 * E], in_proj_b[2 * E:]
    wqkv = jnp.concatenate([wq.T * scale, wk.T, wv.T], axis=1)        # (E, 3E)
    bqkv = jnp.concatenate([bq * scale, bk, bv]).reshape(1, 3 * E)

    return dict(
        wqkv=wqkv.astype(BF16),
        bqkv=bqkv,
        wo=out_proj_w.T.astype(BF16), bo=out_proj_b.reshape(1, E),
        g1=jnp.ones((1, E), jnp.float32), be1=jnp.zeros((1, E), jnp.float32),
        w1=w1.T.astype(BF16), b1=b1.reshape(1, FF),
        w2=w2.T.astype(BF16), b2=b2.reshape(1, E),
        g2=jnp.ones((1, E), jnp.float32), be2=jnp.zeros((1, E), jnp.float32),
    )


def cross_attention_forward(x, key_padding_mask_bool, enc_params, dec_params,
                            num_layers, num_heads):
    """Mirrors CrossAttention.forward(x, src_key_padding_mask)."""
    B, S, E = x.shape
    mask_add = jnp.where(key_padding_mask_bool, MASK_NEG, 0.0) \
                  .astype(jnp.float32).reshape(B, 1, S)
    x = x.astype(jnp.float32)

    # TransformerEncoder: q=k=v=x, then q=k=v=output after each layer.
    enc_out = _run_stack(x, mask_add, enc_params,
                         num_layers=num_layers, num_heads=num_heads)

    # TransformerDecoder (built from encoder layers): q = running output
    # (starting at x), k = v = encoder output (fixed across layers).
    dec_out = _run_stack(x, mask_add, dec_params,
                         num_layers=num_layers, num_heads=num_heads, kv=enc_out)

    # need_weights=False in the reference -> per-layer attention weights are None
    decoder_weights = [None] * num_layers
    # TODO(synk): fully-masked rows yield uniform attention here; PyTorch yields NaN.
    return dec_out, decoder_weights


if __name__ == "__main__":
    B, S, E, H, L, FF = 2, 8, 32, 2, 2, 2048   # dim_feedforward=2048 (PyTorch default)

    key = jax.random.PRNGKey(0)
    kx, _ = jax.random.split(key)
    x = jax.random.normal(kx, (B, S, E), dtype=jnp.float32)
    # bool key-padding mask: True = padded (last 2 positions of sample 1 padded)
    pad_mask = jnp.array([[False] * S,
                          [False] * (S - 2) + [True] * 2], dtype=bool)

    # clones within a stack share init -> one shared parameter set per stack
    enc_params = init_stack_params(jax.random.PRNGKey(1), E, H, FF)
    dec_params = init_stack_params(jax.random.PRNGKey(2), E, H, FF)

    out, dec_weights = cross_attention_forward(x, pad_mask, enc_params,
                                               dec_params, L, H)
    out = jax.block_until_ready(out)

    assert out.shape == (B, S, E)
    assert bool(jnp.all(jnp.isfinite(out)))
    print("KERNEL_OK")
</pallas_src>

<mosaic_0001>
module attributes {stable_mosaic.version = 11 : i64} {
  func.func @_encoder_stack_kernel(%arg0: i32, %arg1: i32, %arg2: memref<1x8x32xf32, #tpu.memory_space<vmem>>, %arg3: memref<1x1x8xf32, #tpu.memory_space<vmem>>, %arg4: memref<32x96xbf16, #tpu.memory_space<vmem>>, %arg5: memref<1x96xf32, #tpu.memory_space<vmem>>, %arg6: memref<32x32xbf16, #tpu.memory_space<vmem>>, %arg7: memref<1x32xf32, #tpu.memory_space<vmem>>, %arg8: memref<1x32xf32, #tpu.memory_space<vmem>>, %arg9: memref<1x32xf32, #tpu.memory_space<vmem>>, %arg10: memref<32x2048xbf16, #tpu.memory_space<vmem>>, %arg11: memref<1x2048xf32, #tpu.memory_space<vmem>>, %arg12: memref<2048x32xbf16, #tpu.memory_space<vmem>>, %arg13: memref<1x32xf32, #tpu.memory_space<vmem>>, %arg14: memref<1x32xf32, #tpu.memory_space<vmem>>, %arg15: memref<1x32xf32, #tpu.memory_space<vmem>>, %arg16: memref<1x8x32xf32, #tpu.memory_space<vmem>>) attributes {dimension_semantics = [#tpu.dimension_semantics<parallel>, #tpu.dimension_semantics<arbitrary>], iteration_bounds = array<i64: 2, 2>, scalar_prefetch = 0 : i64, scratch_operands = 0 : i64, tpu.core_type = #tpu.core_type<tc>, window_params = [{transform_indices = @transform_0, window_bounds = array<i64: 1, 8, 32>}, {transform_indices = @transform_1, window_bounds = array<i64: 1, 1, 8>}, {pipeline_mode = #tpu.pipeline_mode<synchronous>, transform_indices = @transform_2, window_bounds = array<i64: 32, 96>}, {pipeline_mode = #tpu.pipeline_mode<synchronous>, transform_indices = @transform_3, window_bounds = array<i64: 1, 96>}, {pipeline_mode = #tpu.pipeline_mode<synchronous>, transform_indices = @transform_4, window_bounds = array<i64: 32, 32>}, {pipeline_mode = #tpu.pipeline_mode<synchronous>, transform_indices = @transform_5, window_bounds = array<i64: 1, 32>}, {pipeline_mode = #tpu.pipeline_mode<synchronous>, transform_indices = @transform_6, window_bounds = array<i64: 1, 32>}, {pipeline_mode = #tpu.pipeline_mode<synchronous>, transform_indices = @transform_7, window_bounds = array<i64: 1, 32>}, {pipeline_mode = #tpu.pipeline_mode<synchronous>, transform_indices = @transform_8, window_bounds = array<i64: 32, 2048>}, {pipeline_mode = #tpu.pipeline_mode<synchronous>, transform_indices = @transform_9, window_bounds = array<i64: 1, 2048>}, {pipeline_mode = #tpu.pipeline_mode<synchronous>, transform_indices = @transform_10, window_bounds = array<i64: 2048, 32>}, {pipeline_mode = #tpu.pipeline_mode<synchronous>, transform_indices = @transform_11, window_bounds = array<i64: 1, 32>}, {pipeline_mode = #tpu.pipeline_mode<synchronous>, transform_indices = @transform_12, window_bounds = array<i64: 1, 32>}, {pipeline_mode = #tpu.pipeline_mode<synchronous>, transform_indices = @transform_13, window_bounds = array<i64: 1, 32>}, {transform_indices = @transform_14, window_bounds = array<i64: 1, 8, 32>}]} {
    %c0_i32 = arith.constant 0 : i32
    %0 = arith.cmpi eq, %arg1, %c0_i32 : i32
    %1 = arith.extui %0 : i1 to i32
    %c0_i32_0 = arith.constant 0 : i32
    %2 = arith.cmpi ne, %1, %c0_i32_0 : i32
    scf.if %2 {
      %c0_65 = arith.constant 0 : index
      %c0_66 = arith.constant 0 : index
      %c0_67 = arith.constant 0 : index
      %152 = vector.load %arg2[%c0_65, %c0_66, %c0_67] : memref<1x8x32xf32, #tpu.memory_space<vmem>>, vector<1x8x32xf32>
      %c0_68 = arith.constant 0 : index
      %c0_69 = arith.constant 0 : index
      %c0_70 = arith.constant 0 : index
      %153 = vector.load %arg16[%c0_68, %c0_69, %c0_70] : memref<1x8x32xf32, #tpu.memory_space<vmem>>, vector<1x8x32xf32>
      tpu.vector_store %arg16[%c0_68, %c0_69, %c0_70], %152 {strides = array<i32>} : memref<1x8x32xf32, #tpu.memory_space<vmem>>, vector<1x8x32xf32>,
    } else {
    }
    %c0 = arith.constant 0 : index
    %c0_1 = arith.constant 0 : index
    %c0_2 = arith.constant 0 : index
    %3 = vector.load %arg16[%c0, %c0_1, %c0_2] : memref<1x8x32xf32, #tpu.memory_space<vmem>>, vector<1x8x32xf32>
    %4 = vector.shape_cast %3 : vector<1x8x32xf32> to vector<8x32xf32>
    %5 = arith.truncf %4 : vector<8x32xf32> to vector<8x32xbf16>
    %c0_3 = arith.constant 0 : index
    %c0_4 = arith.constant 0 : index
    %6 = vector.load %arg4[%c0_3, %c0_4] : memref<32x96xbf16, #tpu.memory_space<vmem>>, vector<32x96xbf16>
    %cst = arith.constant dense<0.000000e+00> : vector<8x96xf32>
    %7 = tpu.matmul %5, %6, %cst {dimension_numbers = #tpu.dot_dimension_numbers<[1], [0], [0], [1], [0, 0, 1, 1], [], []>} : vector<8x32xbf16>, vector<32x96xbf16>, vector<8x96xf32> -> vector<8x96xf32>
    %c0_5 = arith.constant 0 : index
    %c0_6 = arith.constant 0 : index
    %8 = vector.load %arg5[%c0_5, %c0_6] : memref<1x96xf32, #tpu.memory_space<vmem>>, vector<1x96xf32>
    %9 = vector.broadcast %8 : vector<1x96xf32> to vector<8x96xf32>
    %10 = arith.addf %7, %9 : vector<8x96xf32>
    %11 = vector.extract_strided_slice %10 {offsets = [0, 0], sizes = [8, 32], strides = [1, 1]} : vector<8x96xf32> to vector<8x32xf32>
    %12 = vector.extract_strided_slice %10 {offsets = [0, 32], sizes = [8, 32], strides = [1, 1]} : vector<8x96xf32> to vector<8x32xf32>
    %13 = vector.extract_strided_slice %10 {offsets = [0, 64], sizes = [8, 32], strides = [1, 1]} : vector<8x96xf32> to vector<8x32xf32>
    %c0_7 = arith.constant 0 : index
    %c0_8 = arith.constant 0 : index
    %c0_9 = arith.constant 0 : index
    %14 = vector.load %arg3[%c0_7, %c0_8, %c0_9] : memref<1x1x8xf32, #tpu.memory_space<vmem>>, vector<1x1x8xf32>
    %15 = vector.shape_cast %14 : vector<1x1x8xf32> to vector<1x8xf32>
    %c0_10 = arith.constant 0 : index
    %c0_11 = arith.constant 0 : index
    %16 = vector.load %arg6[%c0_10, %c0_11] : memref<32x32xbf16, #tpu.memory_space<vmem>>, vector<32x32xbf16>
    %c0_12 = arith.constant 0 : index
    %c0_13 = arith.constant 0 : index
    %17 = vector.load %arg7[%c0_12, %c0_13] : memref<1x32xf32, #tpu.memory_space<vmem>>, vector<1x32xf32>
    %c0_14 = arith.constant 0 : index
    %c0_15 = arith.constant 0 : index
    %18 = vector.load %arg8[%c0_14, %c0_15] : memref<1x32xf32, #tpu.memory_space<vmem>>, vector<1x32xf32>
    %c0_16 = arith.constant 0 : index
    %c0_17 = arith.constant 0 : index
    %19 = vector.load %arg9[%c0_16, %c0_17] : memref<1x32xf32, #tpu.memory_space<vmem>>, vector<1x32xf32>
    %c0_18 = arith.constant 0 : index
    %c0_19 = arith.constant 0 : index
    %20 = vector.load %arg10[%c0_18, %c0_19] : memref<32x2048xbf16, #tpu.memory_space<vmem>>, vector<32x2048xbf16>
    %c0_20 = arith.constant 0 : index
    %c0_21 = arith.constant 0 : index
    %21 = vector.load %arg11[%c0_20, %c0_21] : memref<1x2048xf32, #tpu.memory_space<vmem>>, vector<1x2048xf32>
    %c0_22 = arith.constant 0 : index
    %c0_23 = arith.constant 0 : index
    %22 = vector.load %arg12[%c0_22, %c0_23] : memref<2048x32xbf16, #tpu.memory_space<vmem>>, vector<2048x32xbf16>
    %c0_24 = arith.constant 0 : index
    %c0_25 = arith.constant 0 : index
    %23 = vector.load %arg13[%c0_24, %c0_25] : memref<1x32xf32, #tpu.memory_space<vmem>>, vector<1x32xf32>
    %c0_26 = arith.constant 0 : index
    %c0_27 = arith.constant 0 : index
    %24 = vector.load %arg14[%c0_26, %c0_27] : memref<1x32xf32, #tpu.memory_space<vmem>>, vector<1x32xf32>
    %c0_28 = arith.constant 0 : index
    %c0_29 = arith.constant 0 : index
    %25 = vector.load %arg15[%c0_28, %c0_29] : memref<1x32xf32, #tpu.memory_space<vmem>>, vector<1x32xf32>
    %26 = vector.shape_cast %11 : vector<8x32xf32> to vector<8x2x16xf32>
    %27 = tpu.transpose %26, [1, 0, 2] : vector<8x2x16xf32> -> vector<2x8x16xf32>
    %28 = arith.truncf %27 : vector<2x8x16xf32> to vector<2x8x16xbf16>
    %29 = vector.shape_cast %12 : vector<8x32xf32> to vector<8x2x16xf32>
    %30 = tpu.transpose %29, [1, 0, 2] : vector<8x2x16xf32> -> vector<2x8x16xf32>
    %31 = arith.truncf %30 : vector<2x8x16xf32> to vector<2x8x16xbf16>
    %32 = vector.shape_cast %13 : vector<8x32xf32> to vector<8x2x16xf32>
    %33 = tpu.transpose %32, [1, 0, 2] : vector<8x2x16xf32> -> vector<2x8x16xf32>
    %34 = arith.truncf %33 : vector<2x8x16xf32> to vector<2x8x16xbf16>
    "tpu.trace_start"() <{level = 10 : i32, message = "hqd,hkd->hqk"}> : () -> ()
    %cst_30 = arith.constant dense<0.000000e+00> : vector<2x8x8xf32>
    %35 = tpu.matmul %28, %31, %cst_30 {dimension_numbers = #tpu.dot_dimension_numbers<[2], [2], [1], [1], [0, 0, 0, 1, 1, 1], [0], [0]>} : vector<2x8x16xbf16>, vector<2x8x16xbf16>, vector<2x8x8xf32> -> vector<2x8x8xf32>
    "tpu.trace_stop"() : () -> ()
    %36 = vector.shape_cast %15 : vector<1x8xf32> to vector<1x1x8xf32>
    %37 = vector.broadcast %36 : vector<1x1x8xf32> to vector<2x8x8xf32>
    %38 = arith.addf %35, %37 : vector<2x8x8xf32>
    %cst_31 = arith.constant dense<0xFF800000> : vector<2x8xf32>
    %39 = vector.multi_reduction <maximumf>, %38, %cst_31 [2] : vector<2x8x8xf32> to vector<2x8xf32>
    %40 = vector.shape_cast %39 : vector<2x8xf32> to vector<2x8x1xf32>
    %41 = vector.broadcast %40 : vector<2x8x1xf32> to vector<2x8x8xf32>
    %42 = arith.subf %38, %41 : vector<2x8x8xf32>
    %43 = math.exp %42 : vector<2x8x8xf32>
    %cst_32 = arith.constant dense<0.000000e+00> : vector<2x8xf32>
    %44 = vector.multi_reduction <add>, %43, %cst_32 [2] : vector<2x8x8xf32> to vector<2x8xf32>
    %45 = vector.shape_cast %44 : vector<2x8xf32> to vector<2x8x1xf32>
    %46 = vector.broadcast %45 : vector<2x8x1xf32> to vector<2x8x8xf32>
    %47 = arith.divf %43, %46 : vector<2x8x8xf32>
    %48 = arith.truncf %47 : vector<2x8x8xf32> to vector<2x8x8xbf16>
    "tpu.trace_start"() <{level = 10 : i32, message = "hqk,hkd->hqd"}> : () -> ()
    %cst_33 = arith.constant dense<0.000000e+00> : vector<2x8x16xf32>
    %49 = tpu.matmul %48, %34, %cst_33 {dimension_numbers = #tpu.dot_dimension_numbers<[2], [1], [1], [2], [0, 0, 0, 1, 1, 2], [0], [0]>} : vector<2x8x8xbf16>, vector<2x8x16xbf16>, vector<2x8x16xf32> -> vector<2x8x16xf32>
    "tpu.trace_stop"() : () -> ()
    %50 = tpu.transpose %49, [1, 0, 2] : vector<2x8x16xf32> -> vector<8x2x16xf32>
    %51 = vector.shape_cast %50 : vector<8x2x16xf32> to vector<8x32xf32>
    %52 = arith.truncf %51 : vector<8x32xf32> to vector<8x32xbf16>
    %cst_34 = arith.constant dense<0.000000e+00> : vector<8x32xf32>
    %53 = tpu.matmul %52, %16, %cst_34 {dimension_numbers = #tpu.dot_dimension_numbers<[1], [0], [0], [1], [0, 0, 1, 1], [], []>} : vector<8x32xbf16>, vector<32x32xbf16>, vector<8x32xf32> -> vector<8x32xf32>
    %54 = vector.broadcast %17 : vector<1x32xf32> to vector<8x32xf32>
    %55 = arith.addf %53, %54 : vector<8x32xf32>
    %56 = arith.addf %4, %55 : vector<8x32xf32>
    %cst_35 = arith.constant dense<0.000000e+00> : vector<8xf32>
    %57 = vector.multi_reduction <add>, %56, %cst_35 [1] : vector<8x32xf32> to vector<8xf32>
    %58 = vector.shape_cast %57 : vector<8xf32> to vector<8x1xf32>
    %cst_36 = arith.constant 3.200000e+01 : f32
    %59 = vector.broadcast %cst_36 : f32 to vector<8x1xf32>
    %60 = arith.divf %58, %59 : vector<8x1xf32>
    %61 = vector.broadcast %60 : vector<8x1xf32> to vector<8x32xf32>
    %62 = arith.subf %56, %61 : vector<8x32xf32>
    %63 = arith.mulf %62, %62 : vector<8x32xf32>
    %cst_37 = arith.constant dense<0.000000e+00> : vector<8xf32>
    %64 = vector.multi_reduction <add>, %63, %cst_37 [1] : vector<8x32xf32> to vector<8xf32>
    %65 = vector.shape_cast %64 : vector<8xf32> to vector<8x1xf32>
    %cst_38 = arith.constant 3.200000e+01 : f32
    %66 = vector.broadcast %cst_38 : f32 to vector<8x1xf32>
    %67 = arith.divf %65, %66 : vector<8x1xf32>
    %68 = vector.broadcast %60 : vector<8x1xf32> to vector<8x32xf32>
    %69 = arith.subf %56, %68 : vector<8x32xf32>
    %cst_39 = arith.constant 9.99999974E-6 : f32
    %70 = vector.broadcast %cst_39 : f32 to vector<8x1xf32>
    %71 = arith.addf %67, %70 : vector<8x1xf32>
    %72 = math.rsqrt %71 : vector<8x1xf32>
    %73 = vector.broadcast %72 : vector<8x1xf32> to vector<8x32xf32>
    %74 = arith.mulf %69, %73 : vector<8x32xf32>
    %75 = vector.broadcast %18 : vector<1x32xf32> to vector<8x32xf32>
    %76 = arith.mulf %74, %75 : vector<8x32xf32>
    %77 = vector.broadcast %19 : vector<1x32xf32> to vector<8x32xf32>
    %78 = arith.addf %76, %77 : vector<8x32xf32>
    %79 = arith.truncf %78 : vector<8x32xf32> to vector<8x32xbf16>
    %cst_40 = arith.constant dense<0.000000e+00> : vector<8x2048xf32>
    %80 = tpu.matmul %79, %20, %cst_40 {dimension_numbers = #tpu.dot_dimension_numbers<[1], [0], [0], [1], [0, 0, 1, 1], [], []>} : vector<8x32xbf16>, vector<32x2048xbf16>, vector<8x2048xf32> -> vector<8x2048xf32>
    %81 = vector.broadcast %21 : vector<1x2048xf32> to vector<8x2048xf32>
    %82 = arith.addf %80, %81 : vector<8x2048xf32>
    %cst_41 = arith.constant 5.000000e-01 : f32
    %83 = vector.broadcast %cst_41 : f32 to vector<8x2048xf32>
    %84 = arith.mulf %83, %82 : vector<8x2048xf32>
    %cst_42 = arith.constant 0.707106769 : f32
    %85 = vector.broadcast %cst_42 : f32 to vector<8x2048xf32>
    %86 = arith.mulf %82, %85 : vector<8x2048xf32>
    %87 = math.absf %86 : vector<8x2048xf32>
    %cst_43 = arith.constant 0.327591091 : f32
    %88 = vector.broadcast %cst_43 : f32 to vector<8x2048xf32>
    %89 = arith.mulf %88, %87 : vector<8x2048xf32>
    %cst_44 = arith.constant 1.000000e+00 : f32
    %90 = vector.broadcast %cst_44 : f32 to vector<8x2048xf32>
    %91 = arith.addf %90, %89 : vector<8x2048xf32>
    %cst_45 = arith.constant 1.000000e+00 : f32
    %92 = vector.broadcast %cst_45 : f32 to vector<8x2048xf32>
    %93 = arith.divf %92, %91 : vector<8x2048xf32>
    %cst_46 = arith.constant 1.06140542 : f32
    %94 = vector.broadcast %cst_46 : f32 to vector<8x2048xf32>
    %95 = arith.mulf %94, %93 : vector<8x2048xf32>
    %cst_47 = arith.constant -1.45315206 : f32
    %96 = vector.broadcast %cst_47 : f32 to vector<8x2048xf32>
    %97 = arith.addf %95, %96 : vector<8x2048xf32>
    %98 = arith.mulf %97, %93 : vector<8x2048xf32>
    %cst_48 = arith.constant 1.42141378 : f32
    %99 = vector.broadcast %cst_48 : f32 to vector<8x2048xf32>
    %100 = arith.addf %98, %99 : vector<8x2048xf32>
    %101 = arith.mulf %100, %93 : vector<8x2048xf32>
    %cst_49 = arith.constant -0.284496725 : f32
    %102 = vector.broadcast %cst_49 : f32 to vector<8x2048xf32>
    %103 = arith.addf %101, %102 : vector<8x2048xf32>
    %104 = arith.mulf %103, %93 : vector<8x2048xf32>
    %cst_50 = arith.constant 0.254829586 : f32
    %105 = vector.broadcast %cst_50 : f32 to vector<8x2048xf32>
    %106 = arith.addf %104, %105 : vector<8x2048xf32>
    %107 = arith.mulf %106, %93 : vector<8x2048xf32>
    %cst_51 = arith.constant 0.000000e+00 : f32
    %108 = vector.broadcast %cst_51 : f32 to vector<8x2048xf32>
    %109 = arith.subf %108, %87 : vector<8x2048xf32>
    %110 = arith.mulf %109, %87 : vector<8x2048xf32>
    %111 = math.exp %110 : vector<8x2048xf32>
    %112 = arith.mulf %107, %111 : vector<8x2048xf32>
    %cst_52 = arith.constant 1.000000e+00 : f32
    %113 = vector.broadcast %cst_52 : f32 to vector<8x2048xf32>
    %114 = arith.subf %113, %112 : vector<8x2048xf32>
    %cst_53 = arith.constant 0.000000e+00 : f32
    %115 = vector.broadcast %cst_53 : f32 to vector<8x2048xf32>
    %116 = arith.cmpf olt, %86, %115 : vector<8x2048xf32>
    %cst_54 = arith.constant 0.000000e+00 : f32
    %117 = vector.broadcast %cst_54 : f32 to vector<8x2048xf32>
    %118 = arith.subf %117, %114 : vector<8x2048xf32>
    %119 = arith.select %116, %118, %114 : vector<8x2048xi1>, vector<8x2048xf32>
    %cst_55 = arith.constant 1.000000e+00 : f32
    %120 = vector.broadcast %cst_55 : f32 to vector<8x2048xf32>
    %121 = arith.addf %120, %119 : vector<8x2048xf32>
    %122 = arith.mulf %84, %121 : vector<8x2048xf32>
    %123 = arith.truncf %122 : vector<8x2048xf32> to vector<8x2048xbf16>
    %cst_56 = arith.constant dense<0.000000e+00> : vector<8x32xf32>
    %124 = tpu.matmul %123, %22, %cst_56 {dimension_numbers = #tpu.dot_dimension_numbers<[1], [0], [0], [1], [0, 0, 1, 1], [], []>} : vector<8x2048xbf16>, vector<2048x32xbf16>, vector<8x32xf32> -> vector<8x32xf32>
    %125 = vector.broadcast %23 : vector<1x32xf32> to vector<8x32xf32>
    %126 = arith.addf %124, %125 : vector<8x32xf32>
    %127 = arith.addf %78, %126 : vector<8x32xf32>
    %cst_57 = arith.constant dense<0.000000e+00> : vector<8xf32>
    %128 = vector.multi_reduction <add>, %127, %cst_57 [1] : vector<8x32xf32> to vector<8xf32>
    %129 = vector.shape_cast %128 : vector<8xf32> to vector<8x1xf32>
    %cst_58 = arith.constant 3.200000e+01 : f32
    %130 = vector.broadcast %cst_58 : f32 to vector<8x1xf32>
    %131 = arith.divf %129, %130 : vector<8x1xf32>
    %132 = vector.broadcast %131 : vector<8x1xf32> to vector<8x32xf32>
    %133 = arith.subf %127, %132 : vector<8x32xf32>
    %134 = arith.mulf %133, %133 : vector<8x32xf32>
    %cst_59 = arith.constant dense<0.000000e+00> : vector<8xf32>
    %135 = vector.multi_reduction <add>, %134, %cst_59 [1] : vector<8x32xf32> to vector<8xf32>
    %136 = vector.shape_cast %135 : vector<8xf32> to vector<8x1xf32>
    %cst_60 = arith.constant 3.200000e+01 : f32
    %137 = vector.broadcast %cst_60 : f32 to vector<8x1xf32>
    %138 = arith.divf %136, %137 : vector<8x1xf32>
    %139 = vector.broadcast %131 : vector<8x1xf32> to vector<8x32xf32>
    %140 = arith.subf %127, %139 : vector<8x32xf32>
    %cst_61 = arith.constant 9.99999974E-6 : f32
    %141 = vector.broadcast %cst_61 : f32 to vector<8x1xf32>
    %142 = arith.addf %138, %141 : vector<8x1xf32>
    %143 = math.rsqrt %142 : vector<8x1xf32>
    %144 = vector.broadcast %143 : vector<8x1xf32> to vector<8x32xf32>
    %145 = arith.mulf %140, %144 : vector<8x32xf32>
    %146 = vector.broadcast %24 : vector<1x32xf32> to vector<8x32xf32>
    %147 = arith.mulf %145, %146 : vector<8x32xf32>
    %148 = vector.broadcast %25 : vector<1x32xf32> to vector<8x32xf32>
    %149 = arith.addf %147, %148 : vector<8x32xf32>
    %150 = vector.shape_cast %149 : vector<8x32xf32> to vector<1x8x32xf32>
    %c0_62 = arith.constant 0 : index
    %c0_63 = arith.constant 0 : index
    %c0_64 = arith.constant 0 : index
    %151 = vector.load %arg16[%c0_62, %c0_63, %c0_64] : memref<1x8x32xf32, #tpu.memory_space<vmem>>, vector<1x8x32xf32>
    tpu.vector_store %arg16[%c0_62, %c0_63, %c0_64], %150 {strides = array<i32>} : memref<1x8x32xf32, #tpu.memory_space<vmem>>, vector<1x8x32xf32>,
    return
  }
  func.func @transform_0(%arg0: i32, %arg1: i32) -> (i32, i32, i32) {
    %c0_i32 = arith.constant 0 : i32
    %c0_i32_0 = arith.constant 0 : i32
    %c0_i32_1 = arith.constant 0 : i32
    return %arg0, %c0_i32, %c0_i32_0 : i32, i32, i32
  }
  func.func @transform_1(%arg0: i32, %arg1: i32) -> (i32, i32, i32) {
    %c0_i32 = arith.constant 0 : i32
    %c0_i32_0 = arith.constant 0 : i32
    %c0_i32_1 = arith.constant 0 : i32
    return %arg0, %c0_i32, %c0_i32_0 : i32, i32, i32
  }
  func.func @transform_2(%arg0: i32, %arg1: i32) -> (i32, i32) {
    %c0_i32 = arith.constant 0 : i32
    %c0_i32_0 = arith.constant 0 : i32
    %c0_i32_1 = arith.constant 0 : i32
    return %c0_i32, %c0_i32_0 : i32, i32
  }
  func.func @transform_3(%arg0: i32, %arg1: i32) -> (i32, i32) {
    %c0_i32 = arith.constant 0 : i32
    %c0_i32_0 = arith.constant 0 : i32
    %c0_i32_1 = arith.constant 0 : i32
    return %c0_i32, %c0_i32_0 : i32, i32
  }
  func.func @transform_4(%arg0: i32, %arg1: i32) -> (i32, i32) {
    %c0_i32 = arith.constant 0 : i32
    %c0_i32_0 = arith.constant 0 : i32
    %c0_i32_1 = arith.constant 0 : i32
    return %c0_i32, %c0_i32_0 : i32, i32
  }
  func.func @transform_5(%arg0: i32, %arg1: i32) -> (i32, i32) {
    %c0_i32 = arith.constant 0 : i32
    %c0_i32_0 = arith.constant 0 : i32
    %c0_i32_1 = arith.constant 0 : i32
    return %c0_i32, %c0_i32_0 : i32, i32
  }
  func.func @transform_6(%arg0: i32, %arg1: i32) -> (i32, i32) {
    %c0_i32 = arith.constant 0 : i32
    %c0_i32_0 = arith.constant 0 : i32
    %c0_i32_1 = arith.constant 0 : i32
    return %c0_i32, %c0_i32_0 : i32, i32
  }
  func.func @transform_7(%arg0: i32, %arg1: i32) -> (i32, i32) {
    %c0_i32 = arith.constant 0 : i32
    %c0_i32_0 = arith.constant 0 : i32
    %c0_i32_1 = arith.constant 0 : i32
    return %c0_i32, %c0_i32_0 : i32, i32
  }
  func.func @transform_8(%arg0: i32, %arg1: i32) -> (i32, i32) {
    %c0_i32 = arith.constant 0 : i32
    %c0_i32_0 = arith.constant 0 : i32
    %c0_i32_1 = arith.constant 0 : i32
    return %c0_i32, %c0_i32_0 : i32, i32
  }
  func.func @transform_9(%arg0: i32, %arg1: i32) -> (i32, i32) {
    %c0_i32 = arith.constant 0 : i32
    %c0_i32_0 = arith.constant 0 : i32
    %c0_i32_1 = arith.constant 0 : i32
    return %c0_i32, %c0_i32_0 : i32, i32
  }
  func.func @transform_10(%arg0: i32, %arg1: i32) -> (i32, i32) {
    %c0_i32 = arith.constant 0 : i32
    %c0_i32_0 = arith.constant 0 : i32
    %c0_i32_1 = arith.constant 0 : i32
    return %c0_i32, %c0_i32_0 : i32, i32
  }
  func.func @transform_11(%arg0: i32, %arg1: i32) -> (i32, i32) {
    %c0_i32 = arith.constant 0 : i32
    %c0_i32_0 = arith.constant 0 : i32
    %c0_i32_1 = arith.constant 0 : i32
    return %c0_i32, %c0_i32_0 : i32, i32
  }
  func.func @transform_12(%arg0: i32, %arg1: i32) -> (i32, i32) {
    %c0_i32 = arith.constant 0 : i32
    %c0_i32_0 = arith.constant 0 : i32
    %c0_i32_1 = arith.constant 0 : i32
    return %c0_i32, %c0_i32_0 : i32, i32
  }
  func.func @transform_13(%arg0: i32, %arg1: i32) -> (i32, i32) {
    %c0_i32 = arith.constant 0 : i32
    %c0_i32_0 = arith.constant 0 : i32
    %c0_i32_1 = arith.constant 0 : i32
    return %c0_i32, %c0_i32_0 : i32, i32
  }
  func.func @transform_14(%arg0: i32, %arg1: i32) -> (i32, i32, i32) {
    %c0_i32 = arith.constant 0 : i32
    %c0_i32_0 = arith.constant 0 : i32
    %c0_i32_1 = arith.constant 0 : i32
    return %arg0, %c0_i32, %c0_i32_0 : i32, i32, i32
  }
}

</mosaic_0001>

<llo_original>
// kernel: tpu_custom_call.1
$region0: #{tpu_custom_call.1}
  #allocation0 [shape = 'u32[]', space=smem, size = 0x4, offset = 0x4, fixed_abs, tag = 'smem constant byte address 0x4 - core index']
  #allocation1 [shape = 'u32[144,128]{1,0:T(1,128)}', space=vmem, size = 0x12000, scoped, tag = 'internal scratch']
  %s0 = inlined_call_operand.vmem [shape: f32[2,8,32], index: 0, kind: input, shape index: {}]
  %s1 = inlined_call_operand.vmem [shape: f32[2,1,8], index: 1, kind: input, shape index: {}]
  %s2 = inlined_call_operand.vmem [shape: bf16[32,96], index: 2, kind: input, shape index: {}]
  %s3 = inlined_call_operand.vmem [shape: f32[1,96], index: 3, kind: input, shape index: {}]
  %s4 = inlined_call_operand.vmem [shape: bf16[32,32], index: 4, kind: input, shape index: {}]
  %s5 = inlined_call_operand.vmem [shape: f32[1,32], index: 5, kind: input, shape index: {}]
  %s6 = inlined_call_operand.vmem [shape: f32[1,32], index: 6, kind: input, shape index: {}]
  %s7 = inlined_call_operand.vmem [shape: f32[1,32], index: 7, kind: input, shape index: {}]
  %s8 = inlined_call_operand.vmem [shape: bf16[32,2048], index: 8, kind: input, shape index: {}]
  %s9 = inlined_call_operand.vmem [shape: f32[1,2048], index: 9, kind: input, shape index: {}]
  %s10 = inlined_call_operand.vmem [shape: bf16[2048,32], index: 10, kind: input, shape index: {}]
  %s11 = inlined_call_operand.vmem [shape: f32[1,32], index: 11, kind: input, shape index: {}]
  %s12 = inlined_call_operand.vmem [shape: f32[1,32], index: 12, kind: input, shape index: {}]
  %s13 = inlined_call_operand.vmem [shape: f32[1,32], index: 13, kind: input, shape index: {}]
  %s14 = inlined_call_operand.hbm [shape: f32[2,8,32], index: 14, kind: output, shape index: {}]
  %s15 = sld [smem:[#allocation0]]
  $region93: #{tpu_custom_call.1} parent=0
    _
  %s17 = ssub.s32 1, %s15
  %s18 = scalar_select 0, %s17, %s15
  $region1: #{tpu_custom_call.1} parent=0
    #allocation2 [shape = 'u8[8192]{0}', space=vmem, size = 0x2000, scoped, tag = 'output window, operand 0']
    #allocation3 [shape = 's32[2]{0}', space=sflag, size = 0x8, scoped, tag = 'scoped memory for tpu_custom_call.1']
    %19 = vsyncpa [#allocation3], 0
    %s20 = scalar_lea.sflag [#allocation3], 1
    %21 = vsyncpa %s20, 0
    loop: start=0, step=1, limit=6
    $region2: #{tpu_custom_call.1} parent=1 // loop_pre_header
      _
    $region3: #{tpu_custom_call.1} parent=1 // loop_header
      %s23 = sphi 0, %s27
      %p24 = scmp.ge.s32.totalorder %s23, 6
      %s30 = sphi 0, %s42
      %s31 = sphi 0, %s38
      %s32 = sphi 0, %s30
      %s33 = sphi 0, %s31
      %s34 = sphi 0, %s32
      %s35 = sphi 0, %s33
      %s45 = sphi 0, %s47
      %s48 = sphi 0, %s45
      %s49 = sphi 0, %s48
      %s65 = sphi 0, %s49
      %s71 = sphi 0, %s73
      %s74 = sphi 0, %s71
      %s75 = sphi 0, %s74
      %s91 = sphi 0, %s75
      %s95 = sphi 0, %s95
      %s97 = sphi 0, %s95
      %s98 = sphi 0, %s97
      %s112 = sphi 0, %s98
      %s116 = sphi 0, %s116
      %s118 = sphi 0, %s116
      %s119 = sphi 0, %s118
      %s133 = sphi 0, %s119
      %s137 = sphi 0, %s137
      %s139 = sphi 0, %s137
      %s140 = sphi 0, %s139
      %s154 = sphi 0, %s140
      %s158 = sphi 0, %s158
      %s160 = sphi 0, %s158
      %s161 = sphi 0, %s160
      %s175 = sphi 0, %s161
      %s179 = sphi 0, %s179
      %s181 = sphi 0, %s179
      %s182 = sphi 0, %s181
      %s196 = sphi 0, %s182
      %s200 = sphi 0, %s200
      %s202 = sphi 0, %s200
      %s203 = sphi 0, %s202
      %s217 = sphi 0, %s203
      %s221 = sphi 0, %s221
      %s223 = sphi 0, %s221
      %s224 = sphi 0, %s223
      %s238 = sphi 0, %s224
      %s242 = sphi 0, %s242
      %s244 = sphi 0, %s242
      %s245 = sphi 0, %s244
      %s259 = sphi 0, %s245
      %s263 = sphi 0, %s263
      %s265 = sphi 0, %s263
      %s266 = sphi 0, %s265
      %s280 = sphi 0, %s266
      %s284 = sphi 0, %s284
      %s286 = sphi 0, %s284
      %s287 = sphi 0, %s286
      %s301 = sphi 0, %s287
      %s305 = sphi 0, %s305
      %s307 = sphi 0, %s305
      %s308 = sphi 0, %s307
      %s322 = sphi 0, %s308
      %s326 = sphi 0, %s326
      %s328 = sphi 0, %s326
      %s329 = sphi 0, %s328
      %s343 = sphi 0, %s329
      %s349 = sphi 0, %s351
      %s352 = sphi 0, %s349
      %s353 = sphi 0, %s352
      %s369 = sphi 0, %s353
    $region4: #{tpu_custom_call.1} parent=1 // loop_header_branch
      %26 = sbr.rel (%p24) target = $region8
    $region5: #{tpu_custom_call.1} parent=1 // loop_body
      %s28 = ssub.s32 %s23, 1
      %s29 = ssub.s32 %s23, 2
      %s36 = sadd.s32 1, %s31
      %p37 = scmp.ge.s32.totalorder %s36, 2
      %s38 = scalar_select %p37, 0, %s36
      %s39 = sadd.s32 1, %s30
      %s40 = scalar_select %p37, %s39, %s30
      %p41 = scmp.ge.s32.totalorder %s40, 2
      %s42 = scalar_select %p41, 0, %s40
      %s43 = ssub.s32 %s30, %s42
      %p44 = scmp.eq.s32.totalorder %s43, 0
      %s46 = sadd.s32 %s45, 1
      %s47 = scalar_select %p44, %s45, %s46
      %p50 = pneg %p44
      %p51 = scmp.eq.s32.totalorder %s23, 3
      %p52 = por %p50, %p51
      %p53 = scmp.ne.s32.totalorder %s45, %s48
      %p54 = scmp.eq.s32.totalorder %s23, 0
      %p55 = por %p53, %p54
      %p56 = scmp.ne.s32.totalorder %s45, %s48
      %p57 = scmp.eq.s32.totalorder %s28, 3
      %p58 = por %p56, %p57
      %p59 = scmp.ne.s32.totalorder %s48, %s49
      %p60 = scmp.eq.s32.totalorder %s28, 0
      %p61 = por %p59, %p60
      %p62 = scmp.ne.s32.totalorder %s48, %s49
      %p63 = scmp.eq.s32.totalorder %s29, 3
      %p64 = por %p62, %p63
      %p66 = scmp.ne.s32.totalorder %s49, %s65
      %p67 = scmp.eq.s32.totalorder %s29, 0
      %p68 = por %p66, %p67
      %s69 = ssub.s32 %s30, %s42
      %p70 = scmp.eq.s32.totalorder %s69, 0
      %s72 = sadd.s32 %s71, 1
      %s73 = scalar_select %p70, %s71, %s72
      %p76 = pneg %p70
      %p77 = scmp.eq.s32.totalorder %s23, 3
      %p78 = por %p76, %p77
      %p79 = scmp.ne.s32.totalorder %s71, %s74
      %p80 = scmp.eq.s32.totalorder %s23, 0
      %p81 = por %p79, %p80
      %p82 = scmp.ne.s32.totalorder %s71, %s74
      %p83 = scmp.eq.s32.totalorder %s28, 3
      %p84 = por %p82, %p83
      %p85 = scmp.ne.s32.totalorder %s74, %s75
      %p86 = scmp.eq.s32.totalorder %s28, 0
      %p87 = por %p85, %p86
      %p88 = scmp.ne.s32.totalorder %s74, %s75
      %p89 = scmp.eq.s32.totalorder %s29, 3
      %p90 = por %p88, %p89
      %p92 = scmp.ne.s32.totalorder %s75, %s91
      %p93 = scmp.eq.s32.totalorder %s29, 0
      %p94 = por %p92, %p93
      %s96 = sadd.s32 %s95, 1
      %p99 = scmp.eq.s32.totalorder %s23, 3
      %p100 = scmp.ne.s32.totalorder %s95, %s97
      %p101 = scmp.eq.s32.totalorder %s23, 0
      %p102 = por %p100, %p101
      %p103 = scmp.ne.s32.totalorder %s95, %s97
      %p104 = scmp.eq.s32.totalorder %s28, 3
      %p105 = por %p103, %p104
      %p106 = scmp.ne.s32.totalorder %s97, %s98
      %p107 = scmp.eq.s32.totalorder %s28, 0
      %p108 = por %p106, %p107
      %p109 = scmp.ne.s32.totalorder %s97, %s98
      %p110 = scmp.eq.s32.totalorder %s29, 3
      %p111 = por %p109, %p110
      %p113 = scmp.ne.s32.totalorder %s98, %s112
      %p114 = scmp.eq.s32.totalorder %s29, 0
      %p115 = por %p113, %p114
      %s117 = sadd.s32 %s116, 1
      %p120 = scmp.eq.s32.totalorder %s23, 3
      %p121 = scmp.ne.s32.totalorder %s116, %s118
      %p122 = scmp.eq.s32.totalorder %s23, 0
      %p123 = por %p121, %p122
      %p124 = scmp.ne.s32.totalorder %s116, %s118
      %p125 = scmp.eq.s32.totalorder %s28, 3
      %p126 = por %p124, %p125
      %p127 = scmp.ne.s32.totalorder %s118, %s119
      %p128 = scmp.eq.s32.totalorder %s28, 0
      %p129 = por %p127, %p128
      %p130 = scmp.ne.s32.totalorder %s118, %s119
      %p131 = scmp.eq.s32.totalorder %s29, 3
      %p132 = por %p130, %p131
      %p134 = scmp.ne.s32.totalorder %s119, %s133
      %p135 = scmp.eq.s32.totalorder %s29, 0
      %p136 = por %p134, %p135
      %s138 = sadd.s32 %s137, 1
      %p141 = scmp.eq.s32.totalorder %s23, 3
      %p142 = scmp.ne.s32.totalorder %s137, %s139
      %p143 = scmp.eq.s32.totalorder %s23, 0
      %p144 = por %p142, %p143
      %p145 = scmp.ne.s32.totalorder %s137, %s139
      %p146 = scmp.eq.s32.totalorder %s28, 3
      %p147 = por %p145, %p146
      %p148 = scmp.ne.s32.totalorder %s139, %s140
      %p149 = scmp.eq.s32.totalorder %s28, 0
      %p150 = por %p148, %p149
      %p151 = scmp.ne.s32.totalorder %s139, %s140
      %p152 = scmp.eq.s32.totalorder %s29, 3
      %p153 = por %p151, %p152
      %p155 = scmp.ne.s32.totalorder %s140, %s154
      %p156 = scmp.eq.s32.totalorder %s29, 0
      %p157 = por %p155, %p156
      %s159 = sadd.s32 %s158, 1
      %p162 = scmp.eq.s32.totalorder %s23, 3
      %p163 = scmp.ne.s32.totalorder %s158, %s160
      %p164 = scmp.eq.s32.totalorder %s23, 0
      %p165 = por %p163, %p164
      %p166 = scmp.ne.s32.totalorder %s158, %s160
      %p167 = scmp.eq.s32.totalorder %s28, 3
      %p168 = por %p166, %p167
      %p169 = scmp.ne.s32.totalorder %s160, %s161
      %p170 = scmp.eq.s32.totalorder %s28, 0
      %p171 = por %p169, %p170
      %p172 = scmp.ne.s32.totalorder %s160, %s161
      %p173 = scmp.eq.s32.totalorder %s29, 3
      %p174 = por %p172, %p173
      %p176 = scmp.ne.s32.totalorder %s161, %s175
      %p177 = scmp.eq.s32.totalorder %s29, 0
      %p178 = por %p176, %p177
      %s180 = sadd.s32 %s179, 1
      %p183 = scmp.eq.s32.totalorder %s23, 3
      %p184 = scmp.ne.s32.totalorder %s179, %s181
      %p185 = scmp.eq.s32.totalorder %s23, 0
      %p186 = por %p184, %p185
      %p187 = scmp.ne.s32.totalorder %s179, %s181
      %p188 = scmp.eq.s32.totalorder %s28, 3
      %p189 = por %p187, %p188
      %p190 = scmp.ne.s32.totalorder %s181, %s182
      %p191 = scmp.eq.s32.totalorder %s28, 0
      %p192 = por %p190, %p191
      %p193 = scmp.ne.s32.totalorder %s181, %s182
      %p194 = scmp.eq.s32.totalorder %s29, 3
      %p195 = por %p193, %p194
      %p197 = scmp.ne.s32.totalorder %s182, %s196
      %p198 = scmp.eq.s32.totalorder %s29, 0
      %p199 = por %p197, %p198
      %s201 = sadd.s32 %s200, 1
      %p204 = scmp.eq.s32.totalorder %s23, 3
      %p205 = scmp.ne.s32.totalorder %s200, %s202
      %p206 = scmp.eq.s32.totalorder %s23, 0
      %p207 = por %p205, %p206
      %p208 = scmp.ne.s32.totalorder %s200, %s202
      %p209 = scmp.eq.s32.totalorder %s28, 3
      %p210 = por %p208, %p209
      %p211 = scmp.ne.s32.totalorder %s202, %s203
      %p212 = scmp.eq.s32.totalorder %s28, 0
      %p213 = por %p211, %p212
      %p214 = scmp.ne.s32.totalorder %s202, %s203
      %p215 = scmp.eq.s32.totalorder %s29, 3
      %p216 = por %p214, %p215
      %p218 = scmp.ne.s32.totalorder %s203, %s217
      %p219 = scmp.eq.s32.totalorder %s29, 0
      %p220 = por %p218, %p219
      %s222 = sadd.s32 %s221, 1
      %p225 = scmp.eq.s32.totalorder %s23, 3
      %p226 = scmp.ne.s32.totalorder %s221, %s223
      %p227 = scmp.eq.s32.totalorder %s23, 0
      %p228 = por %p226, %p227
      %p229 = scmp.ne.s32.totalorder %s221, %s223
      %p230 = scmp.eq.s32.totalorder %s28, 3
      %p231 = por %p229, %p230
      %p232 = scmp.ne.s32.totalorder %s223, %s224
      %p233 = scmp.eq.s32.totalorder %s28, 0
      %p234 = por %p232, %p233
      %p235 = scmp.ne.s32.totalorder %s223, %s224
      %p236 = scmp.eq.s32.totalorder %s29, 3
      %p237 = por %p235, %p236
      %p239 = scmp.ne.s32.totalorder %s224, %s238
      %p240 = scmp.eq.s32.totalorder %s29, 0
      %p241 = por %p239, %p240
      %s243 = sadd.s32 %s242, 1
      %p246 = scmp.eq.s32.totalorder %s23, 3
      %p247 = scmp.ne.s32.totalorder %s242, %s244
      %p248 = scmp.eq.s32.totalorder %s23, 0
      %p249 = por %p247, %p248
      %p250 = scmp.ne.s32.totalorder %s242, %s244
      %p251 = scmp.eq.s32.totalorder %s28, 3
      %p252 = por %p250, %p251
      %p253 = scmp.ne.s32.totalorder %s244, %s245
      %p254 = scmp.eq.s32.totalorder %s28, 0
      %p255 = por %p253, %p254
      %p256 = scmp.ne.s32.totalorder %s244, %s245
      %p257 = scmp.eq.s32.totalorder %s29, 3
      %p258 = por %p256, %p257
      %p260 = scmp.ne.s32.totalorder %s245, %s259
      %p261 = scmp.eq.s32.totalorder %s29, 0
      %p262 = por %p260, %p261
      %s264 = sadd.s32 %s263, 1
      %p267 = scmp.eq.s32.totalorder %s23, 3
      %p268 = scmp.ne.s32.totalorder %s263, %s265
      %p269 = scmp.eq.s32.totalorder %s23, 0
      %p270 = por %p268, %p269
      %p271 = scmp.ne.s32.totalorder %s263, %s265
      %p272 = scmp.eq.s32.totalorder %s28, 3
      %p273 = por %p271, %p272
      %p274 = scmp.ne.s32.totalorder %s265, %s266
      %p275 = scmp.eq.s32.totalorder %s28, 0
      %p276 = por %p274, %p275
      %p277 = scmp.ne.s32.totalorder %s265, %s266
      %p278 = scmp.eq.s32.totalorder %s29, 3
      %p279 = por %p277, %p278
      %p281 = scmp.ne.s32.totalorder %s266, %s280
      %p282 = scmp.eq.s32.totalorder %s29, 0
      %p283 = por %p281, %p282
      %s285 = sadd.s32 %s284, 1
      %p288 = scmp.eq.s32.totalorder %s23, 3
      %p289 = scmp.ne.s32.totalorder %s284, %s286
      %p290 = scmp.eq.s32.totalorder %s23, 0
      %p291 = por %p289, %p290
      %p292 = scmp.ne.s32.totalorder %s284, %s286
      %p293 = scmp.eq.s32.totalorder %s28, 3
      %p294 = por %p292, %p293
      %p295 = scmp.ne.s32.totalorder %s286, %s287
      %p296 = scmp.eq.s32.totalorder %s28, 0
      %p297 = por %p295, %p296
      %p298 = scmp.ne.s32.totalorder %s286, %s287
      %p299 = scmp.eq.s32.totalorder %s29, 3
      %p300 = por %p298, %p299
      %p302 = scmp.ne.s32.totalorder %s287, %s301
      %p303 = scmp.eq.s32.totalorder %s29, 0
      %p304 = por %p302, %p303
      %s306 = sadd.s32 %s305, 1
      %p309 = scmp.eq.s32.totalorder %s23, 3
      %p310 = scmp.ne.s32.totalorder %s305, %s307
      %p311 = scmp.eq.s32.totalorder %s23, 0
      %p312 = por %p310, %p311
      %p313 = scmp.ne.s32.totalorder %s305, %s307
      %p314 = scmp.eq.s32.totalorder %s28, 3
      %p315 = por %p313, %p314
      %p316 = scmp.ne.s32.totalorder %s307, %s308
      %p317 = scmp.eq.s32.totalorder %s28, 0
      %p318 = por %p316, %p317
      %p319 = scmp.ne.s32.totalorder %s307, %s308
      %p320 = scmp.eq.s32.totalorder %s29, 3
      %p321 = por %p319, %p320
      %p323 = scmp.ne.s32.totalorder %s308, %s322
      %p324 = scmp.eq.s32.totalorder %s29, 0
      %p325 = por %p323, %p324
      %s327 = sadd.s32 %s326, 1
      %p330 = scmp.eq.s32.totalorder %s23, 3
      %p331 = scmp.ne.s32.totalorder %s326, %s328
      %p332 = scmp.eq.s32.totalorder %s23, 0
      %p333 = por %p331, %p332
      %p334 = scmp.ne.s32.totalorder %s326, %s328
      %p335 = scmp.eq.s32.totalorder %s28, 3
      %p336 = por %p334, %p335
      %p337 = scmp.ne.s32.totalorder %s328, %s329
      %p338 = scmp.eq.s32.totalorder %s28, 0
      %p339 = por %p337, %p338
      %p340 = scmp.ne.s32.totalorder %s328, %s329
      %p341 = scmp.eq.s32.totalorder %s29, 3
      %p342 = por %p340, %p341
      %p344 = scmp.ne.s32.totalorder %s329, %s343
      %p345 = scmp.eq.s32.totalorder %s29, 0
      %p346 = por %p344, %p345
      %s347 = ssub.s32 %s30, %s42
      %p348 = scmp.eq.s32.totalorder %s347, 0
      %s350 = sadd.s32 %s349, 1
      %s351 = scalar_select %p348, %s349, %s350
      %p354 = pneg %p348
      %p355 = scmp.eq.s32.totalorder %s23, 3
      %p356 = por %p354, %p355
      %p357 = scmp.ne.s32.totalorder %s349, %s352
      %p358 = scmp.eq.s32.totalorder %s23, 0
      %p359 = por %p357, %p358
      %p360 = scmp.ne.s32.totalorder %s349, %s352
      %p361 = scmp.eq.s32.totalorder %s28, 3
      %p362 = por %p360, %p361
      %p363 = scmp.ne.s32.totalorder %s352, %s353
      %p364 = scmp.eq.s32.totalorder %s28, 0
      %p365 = por %p363, %p364
      %p366 = scmp.ne.s32.totalorder %s352, %s353
      %p367 = scmp.eq.s32.totalorder %s29, 3
      %p368 = por %p366, %p367
      %p370 = scmp.ne.s32.totalorder %s353, %s369
      %p371 = scmp.eq.s32.totalorder %s29, 0
      %p372 = por %p370, %p371
      %p373 = scmp.le.s32.totalorder 1, %s23
      %p374 = scmp.lt.s32.totalorder %s23, 5
      %p375 = pnand %p373, %p374
      %p376 = pneg %p375
      // Predicated region
      $region9: #{tpu_custom_call.1} parent=5 // pred_check
        _
      $region10: #{tpu_custom_call.1} parent=5 // pred_check_branch
        %378 = sbr.rel (%p375) target = $region12
      $region11: #{tpu_custom_call.1} parent=5 // pred_region
        %s379 = ssub.s32 %s23, 1
        // Predicated region
        $region13: #{tpu_custom_call.1} parent=11 // pred_check
          %p380 = pneg %p108
        $region14: #{tpu_custom_call.1} parent=11 // pred_check_branch
          %382 = sbr.rel (%p380) target = $region16
        $region15: #{tpu_custom_call.1} parent=11 // pred_region
          _
        $region16: #{tpu_custom_call.1} parent=11 // pred_fallthru
          _
        // Predicated region
        $region17: #{tpu_custom_call.1} parent=11 // pred_check
          %p383 = pneg %p129
        $region18: #{tpu_custom_call.1} parent=11 // pred_check_branch
          %385 = sbr.rel (%p383) target = $region20
        $region19: #{tpu_custom_call.1} parent=11 // pred_region
          _
        $region20: #{tpu_custom_call.1} parent=11 // pred_fallthru
          _
        // Predicated region
        $region21: #{tpu_custom_call.1} parent=11 // pred_check
          %p386 = pneg %p150
        $region22: #{tpu_custom_call.1} parent=11 // pred_check_branch
          %388 = sbr.rel (%p386) target = $region24
        $region23: #{tpu_custom_call.1} parent=11 // pred_region
          _
        $region24: #{tpu_custom_call.1} parent=11 // pred_fallthru
          _
        // Predicated region
        $region25: #{tpu_custom_call.1} parent=11 // pred_check
          %p389 = pneg %p171
        $region26: #{tpu_custom_call.1} parent=11 // pred_check_branch
          %391 = sbr.rel (%p389) target = $region28
        $region27: #{tpu_custom_call.1} parent=11 // pred_region
          _
        $region28: #{tpu_custom_call.1} parent=11 // pred_fallthru
          _
        // Predicated region
        $region29: #{tpu_custom_call.1} parent=11 // pred_check
          %p392 = pneg %p192
        $region30: #{tpu_custom_call.1} parent=11 // pred_check_branch
          %394 = sbr.rel (%p392) target = $region32
        $region31: #{tpu_custom_call.1} parent=11 // pred_region
          _
        $region32: #{tpu_custom_call.1} parent=11 // pred_fallthru
          _
        // Predicated region
        $region33: #{tpu_custom_call.1} parent=11 // pred_check
          %p395 = pneg %p213
        $region34: #{tpu_custom_call.1} parent=11 // pred_check_branch
          %397 = sbr.rel (%p395) target = $region36
        $region35: #{tpu_custom_call.1} parent=11 // pred_region
          _
        $region36: #{tpu_custom_call.1} parent=11 // pred_fallthru
          _
        // Predicated region
        $region37: #{tpu_custom_call.1} parent=11 // pred_check
          %p398 = pneg %p234
        $region38: #{tpu_custom_call.1} parent=11 // pred_check_branch
          %400 = sbr.rel (%p398) target = $region40
        $region39: #{tpu_custom_call.1} parent=11 // pred_region
          _
        $region40: #{tpu_custom_call.1} parent=11 // pred_fallthru
          _
        // Predicated region
        $region41: #{tpu_custom_call.1} parent=11 // pred_check
          %p401 = pneg %p255
        $region42: #{tpu_custom_call.1} parent=11 // pred_check_branch
          %403 = sbr.rel (%p401) target = $region44
        $region43: #{tpu_custom_call.1} parent=11 // pred_region
          _
        $region44: #{tpu_custom_call.1} parent=11 // pred_fallthru
          _
        // Predicated region
        $region45: #{tpu_custom_call.1} parent=11 // pred_check
          %p404 = pneg %p276
        $region46: #{tpu_custom_call.1} parent=11 // pred_check_branch
          %406 = sbr.rel (%p404) target = $region48
        $region47: #{tpu_custom_call.1} parent=11 // pred_region
          _
        $region48: #{tpu_custom_call.1} parent=11 // pred_fallthru
          _
        // Predicated region
        $region49: #{tpu_custom_call.1} parent=11 // pred_check
          %p407 = pneg %p297
        $region50: #{tpu_custom_call.1} parent=11 // pred_check_branch
          %409 = sbr.rel (%p407) target = $region52
        $region51: #{tpu_custom_call.1} parent=11 // pred_region
          _
        $region52: #{tpu_custom_call.1} parent=11 // pred_fallthru
          _
        // Predicated region
        $region53: #{tpu_custom_call.1} parent=11 // pred_check
          %p410 = pneg %p318
        $region54: #{tpu_custom_call.1} parent=11 // pred_check_branch
          %412 = sbr.rel (%p410) target = $region56
        $region55: #{tpu_custom_call.1} parent=11 // pred_region
          _
        $region56: #{tpu_custom_call.1} parent=11 // pred_fallthru
          _
        // Predicated region
        $region57: #{tpu_custom_call.1} parent=11 // pred_check
          %p413 = pneg %p339
        $region58: #{tpu_custom_call.1} parent=11 // pred_check_branch
          %415 = sbr.rel (%p413) target = $region60
        $region59: #{tpu_custom_call.1} parent=11 // pred_region
          _
        $region60: #{tpu_custom_call.1} parent=11 // pred_fallthru
          _
      $region12: #{tpu_custom_call.1} parent=5 // pred_fallthru
        _
      %p416 = scmp.lt.s32.totalorder %s23, 4
      // Predicated region
      $region61: #{tpu_custom_call.1} parent=5 // pred_check
        %p417 = pneg %p416
      $region62: #{tpu_custom_call.1} parent=5 // pred_check_branch
        %419 = sbr.rel (%p417) target = $region64
      $region63: #{tpu_custom_call.1} parent=5 // pred_region
        // Predicated region
        $region65: #{tpu_custom_call.1} parent=63 // pred_check
          %p420 = pneg %p55
        $region66: #{tpu_custom_call.1} parent=63 // pred_check_branch
          %422 = sbr.rel (%p420) target = $region68
        $region67: #{tpu_custom_call.1} parent=63 // pred_region
          %p423 = scmp.lt.s32.totalorder %s30, 1
          %s424 = scalar_select %p423, %s30, 1
          %s425 = smul.addr %s424, 8
          %s426 = scalar_lea.vmem %s0, %s425
        $region68: #{tpu_custom_call.1} parent=63 // pred_fallthru
          _
        // Predicated region
        $region69: #{tpu_custom_call.1} parent=63 // pred_check
          %p427 = pneg %p81
        $region70: #{tpu_custom_call.1} parent=63 // pred_check_branch
          %429 = sbr.rel (%p427) target = $region72
        $region71: #{tpu_custom_call.1} parent=63 // pred_region
          %p430 = scmp.lt.s32.totalorder %s30, 1
          %s431 = scalar_select %p430, %s30, 1
          %s432 = scalar_lea.vmem %s1, %s431
        $region72: #{tpu_custom_call.1} parent=63 // pred_fallthru
          _
      $region64: #{tpu_custom_call.1} parent=5 // pred_fallthru
        _
      %p433 = scmp.le.s32.totalorder 1, %s23
      %p434 = scmp.lt.s32.totalorder %s23, 5
      %p435 = pnand %p433, %p434
      %p436 = pneg %p435
      // Predicated region
      $region73: #{tpu_custom_call.1} parent=5 // pred_check
        _
      $region74: #{tpu_custom_call.1} parent=5 // pred_check_branch
        %438 = sbr.rel (%p435) target = $region76
      $region75: #{tpu_custom_call.1} parent=5 // pred_region
        %s439 = ssub.s32 %s23, 1
        %p440 = scmp.lt.s32.totalorder %s32, 1
        %s441 = scalar_select %p440, %s32, 1
        %s442 = smul.addr %s441, 8
        %s443 = scalar_lea.vmem %s0, %s442
        %p444 = pneg %p61
        %p445 = pneg %p58
        %p446 = scmp.lt.s32.totalorder %s32, 1
        %s447 = scalar_select %p446, %s32, 1
        %s448 = scalar_lea.vmem %s1, %s447
        %p449 = pneg %p87
        %p450 = pneg %p84
        %p451 = pneg %p108
        %p452 = pneg %p105
        %p453 = pneg %p129
        %p454 = pneg %p126
        %p455 = pneg %p150
        %p456 = pneg %p147
        %p457 = pneg %p171
        %p458 = pneg %p168
        %p459 = pneg %p192
        %p460 = pneg %p189
        %p461 = pneg %p213
        %p462 = pneg %p210
        %p463 = pneg %p234
        %p464 = pneg %p231
        %p465 = pneg %p255
        %p466 = pneg %p252
        %p467 = pneg %p276
        %p468 = pneg %p273
        %p469 = pneg %p297
        %p470 = pneg %p294
        %p471 = pneg %p318
        %p472 = pneg %p315
        %p473 = pneg %p339
        %p474 = pneg %p336
        %p475 = pneg %p365
        %p476 = pneg %p362
        %s477 = sand.u32 %s352, 1
        %s478 = scalar_lea.sflag [#allocation3], %s477
        %s479 = sand.u32 %s352, 1
        %s480 = smul.addr %s479, 8
        %s481 = scalar_lea.vmem [#allocation2], %s480
        %p482 = scmp.lt.s32.totalorder %s32, 1
        %s483 = scalar_select %p482, %s32, 1
        %s484 = smul.addr %s483, 8
        %s485 = scalar_lea.vmem %s0, %s484
        %p486 = scmp.lt.s32.totalorder %s32, 1
        %s487 = scalar_select %p486, %s32, 1
        %s488 = scalar_lea.vmem %s1, %s487
        %p490 = scmp.eq.s32.totalorder %s33, 0
        // Predicated region
        $region77: #{tpu_custom_call.1} parent=75 // pred_check
          %p491 = pneg %p490
        $region78: #{tpu_custom_call.1} parent=75 // pred_check_branch
          %493 = sbr.rel (%p491) target = $region80
        $region79: #{tpu_custom_call.1} parent=75 // pred_region
          %v494 = vld [vmem:[%s485] sm:$0xff]
          %vm495 = vcmask 261120
          %496 = vst.msk [vmem:[%s481] sm:$0xff] %vm495, %v494
        $region80: #{tpu_custom_call.1} parent=75 // pred_fallthru
          _
        %v497 = vld [vmem:[%s481] sm:$0xff]
        %v498 = vpack.c.bf16 %v497, %v497
        %v499 = vld [vmem:[%s2] sm:$0xf]
        %v500 = vld [vmem:[%s2 + $0x4] sm:$0xf]
        %v501 = vld [vmem:[%s2 + $0x8] sm:$0xf]
        %v502 = vld [vmem:[%s2 + $0xc] sm:$0xf]
        %v503 = vld [vmem:[%s3] sm:$0x1]
        %v505 = vlaneseq
        %v506 = vshrl.u32 %v505, 7
        %v507 = vsub.s32 0, %v506
        %v508 = vrot.slane %v503, %v507
        %v514 = vunpack.c.l.b16 %v499
        %v515 = vunpack.c.l.b16 %v500
        %v516 = vunpack.c.l.b16 %v501
        %v517 = vunpack.c.l.b16 %v502
        %v518 = vpack.c.b16 %v515, %v514
        %v519 = vpack.c.b16 %v517, %v516
        %vm522 = vcmask 261120
        %v524 = vsel %vm522, %v498, 0
        %526 = vmatprep.subr.bf16.mxu0 0
        %527 = vmatpush1.bf16.msra.mxu0 0
        %528 = vmatprep.subr.bf16.mxu0 0
        %529 = vmatpush1.bf16.msra.mxu0 0
        %530 = vmatprep.subr.bf16.mxu0 0
        %531 = vmatpush1.bf16.msra.mxu0 0
        %532 = vmatprep.subr.bf16.mxu0 0
        %533 = vmatpush1.bf16.msra.mxu0 0
        %534 = vmatprep.subr.bf16.mxu0 0
        %535 = vmatpush1.bf16.msra.mxu0 0
        %536 = vmatprep.subr.bf16.mxu0 0
        %537 = vmatpush1.bf16.msra.mxu0 0
        %538 = vmatprep.subr.bf16.mxu0 0
        %539 = vmatpush1.bf16.msra.mxu0 %v519
        %540 = vmatprep.subr.bf16.mxu0 0
        %541 = vmatpush1.bf16.msra.mxu0 %v518
        %542 = vmatprep.subr.bf16.mxu0 0
        %543 = vmatpush2.bf16.msra.mxu0 0
        %544 = vmatprep.subr.bf16.mxu0 0
        %545 = vmatpush2.bf16.msra.mxu0 0
        %546 = vmatprep.subr.bf16.mxu0 0
        %547 = vmatpush2.bf16.msra.mxu0 0
        %548 = vmatprep.subr.bf16.mxu0 0
        %549 = vmatpush2.bf16.msra.mxu0 0
        %550 = vmatprep.subr.bf16.mxu0 0
        %551 = vmatpush2.bf16.msra.mxu0 0
        %552 = vmatprep.subr.bf16.mxu0 0
        %553 = vmatpush2.bf16.msra.mxu0 0
        %554 = vmatprep.subr.bf16.mxu0 0
        %555 = vmatpush2.bf16.msra.mxu0 0
        %556 = vmatprep.subr.bf16.mxu0 0
        %557 = vmatpush2.bf16.msra.mxu0 0
        %558 = vmatprep.mubr.bf16.mxu0 0
        %559 = vmatmul.mubr.bf16.gmra.mxu0 %v524
        %v560 = vpop.f32.mrf.mxu0
        %v561 = vadd.f32 %v508, %v560
        %v562 = vpop.f32.mrf.mxu0
        %v563 = vpop.f32.mrf.mxu0
        %v564 = vpop.f32.mrf.mxu0
        %565 = vdwg.mxu0
        %v566 = vld [vmem:[%s488] sm:$0x1]
        %v567 = vld [vmem:[%s4] sm:$0xf]
        %v568 = vld [vmem:[%s4 + $0x4] sm:$0xf]
        %v569 = vld [vmem:[%s4 + $0x8] sm:$0xf]
        %v570 = vld [vmem:[%s4 + $0xc] sm:$0xf]
        %v571 = vld [vmem:[%s5] sm:$0x1]
        %v572 = vld [vmem:[%s6] sm:$0x1]
        %v573 = vld [vmem:[%s7] sm:$0x1]
        %v574 = vld [vmem:[%s8] sm:$0xff]
        %v575 = vld [vmem:[%s8 + $0x8] sm:$0xff]
        %v576 = vld [vmem:[%s8 + $0x10] sm:$0xff]
        %v577 = vld [vmem:[%s8 + $0x18] sm:$0xff]
        %v578 = vld [vmem:[%s8 + $0x20] sm:$0xff]
        %v579 = vld [vmem:[%s8 + $0x28] sm:$0xff]
        %v580 = vld [vmem:[%s8 + $0x30] sm:$0xff]
        %v581 = vld [vmem:[%s8 + $0x38] sm:$0xff]
        %v582 = vld [vmem:[%s8 + $0x40] sm:$0xff]
        %v583 = vld [vmem:[%s8 + $0x48] sm:$0xff]
        %v584 = vld [vmem:[%s8 + $0x50] sm:$0xff]
        %v585 = vld [vmem:[%s8 + $0x58] sm:$0xff]
        %v586 = vld [vmem:[%s8 + $0x60] sm:$0xff]
        %v587 = vld [vmem:[%s8 + $0x68] sm:$0xff]
        %v588 = vld [vmem:[%s8 + $0x70] sm:$0xff]
        %v589 = vld [vmem:[%s8 + $0x78] sm:$0xff]
        %v590 = vld [vmem:[%s8 + $0x80] sm:$0xff]
        %v591 = vld [vmem:[%s8 + $0x88] sm:$0xff]
        %v592 = vld [vmem:[%s8 + $0x90] sm:$0xff]
        %v593 = vld [vmem:[%s8 + $0x98] sm:$0xff]
        %v594 = vld [vmem:[%s8 + $0xa0] sm:$0xff]
        %v595 = vld [vmem:[%s8 + $0xa8] sm:$0xff]
        %v596 = vld [vmem:[%s8 + $0xb0] sm:$0xff]
        %v597 = vld [vmem:[%s8 + $0xb8] sm:$0xff]
        %v598 = vld [vmem:[%s8 + $0xc0] sm:$0xff]
        %v599 = vld [vmem:[%s8 + $0xc8] sm:$0xff]
        %v600 = vld [vmem:[%s8 + $0xd0] sm:$0xff]
        %v601 = vld [vmem:[%s8 + $0xd8] sm:$0xff]
        %v602 = vld [vmem:[%s8 + $0xe0] sm:$0xff]
        %v603 = vld [vmem:[%s8 + $0xe8] sm:$0xff]
        %v604 = vld [vmem:[%s8 + $0xf0] sm:$0xff]
        %v605 = vld [vmem:[%s8 + $0xf8] sm:$0xff]
        %v606 = vld [vmem:[%s9] sm:$0xff]
        %v607 = vld [vmem:[%s9 + $0x8] sm:$0xff]
        %v608 = vld [vmem:[%s10] sm:$0xf]
        %v609 = vld [vmem:[%s10 + $0x4] sm:$0xf]
        %v610 = vld [vmem:[%s10 + $0x8] sm:$0xf]
        %v611 = vld [vmem:[%s10 + $0xc] sm:$0xf]
        %v612 = vld [vmem:[%s10 + $0x10] sm:$0xf]
        %v613 = vld [vmem:[%s10 + $0x14] sm:$0xf]
        %v614 = vld [vmem:[%s10 + $0x18] sm:$0xf]
        %v615 = vld [vmem:[%s10 + $0x1c] sm:$0xf]
        %v616 = vld [vmem:[%s10 + $0x20] sm:$0xf]
        %v617 = vld [vmem:[%s10 + $0x24] sm:$0xf]
        %v618 = vld [vmem:[%s10 + $0x28] sm:$0xf]
        %v619 = vld [vmem:[%s10 + $0x2c] sm:$0xf]
        %v620 = vld [vmem:[%s10 + $0x30] sm:$0xf]
        %v621 = vld [vmem:[%s10 + $0x34] sm:$0xf]
        %v622 = vld [vmem:[%s10 + $0x38] sm:$0xf]
        %v623 = vld [vmem:[%s10 + $0x3c] sm:$0xf]
        %v624 = vld [vmem:[%s10 + $0x40] sm:$0xf]
        %v625 = vld [vmem:[%s10 + $0x44] sm:$0xf]
        %v626 = vld [vmem:[%s10 + $0x48] sm:$0xf]
        %v627 = vld [vmem:[%s10 + $0x4c] sm:$0xf]
        %v628 = vld [vmem:[%s10 + $0x50] sm:$0xf]
        %v629 = vld [vmem:[%s10 + $0x54] sm:$0xf]
        %v630 = vld [vmem:[%s10 + $0x58] sm:$0xf]
        %v631 = vld [vmem:[%s10 + $0x5c] sm:$0xf]
        %v632 = vld [vmem:[%s10 + $0x60] sm:$0xf]
        %v633 = vld [vmem:[%s10 + $0x64] sm:$0xf]
        %v634 = vld [vmem:[%s10 + $0x68] sm:$0xf]
        %v635 = vld [vmem:[%s10 + $0x6c] sm:$0xf]
        %v636 = vld [vmem:[%s10 + $0x70] sm:$0xf]
        %v637 = vld [vmem:[%s10 + $0x74] sm:$0xf]
        %v638 = vld [vmem:[%s10 + $0x78] sm:$0xf]
        %v639 = vld [vmem:[%s10 + $0x7c] sm:$0xf]
        %v640 = vld [vmem:[%s10 + $0x80] sm:$0xf]
        %v641 = vld [vmem:[%s10 + $0x84] sm:$0xf]
        %v642 = vld [vmem:[%s10 + $0x88] sm:$0xf]
        %v643 = vld [vmem:[%s10 + $0x8c] sm:$0xf]
        %v644 = vld [vmem:[%s10 + $0x90] sm:$0xf]
        %v645 = vld [vmem:[%s10 + $0x94] sm:$0xf]
        %v646 = vld [vmem:[%s10 + $0x98] sm:$0xf]
        %v647 = vld [vmem:[%s10 + $0x9c] sm:$0xf]
        %v648 = vld [vmem:[%s10 + $0xa0] sm:$0xf]
        %v649 = vld [vmem:[%s10 + $0xa4] sm:$0xf]
        %v650 = vld [vmem:[%s10 + $0xa8] sm:$0xf]
        %v651 = vld [vmem:[%s10 + $0xac] sm:$0xf]
        %v652 = vld [vmem:[%s10 + $0xb0] sm:$0xf]
        %v653 = vld [vmem:[%s10 + $0xb4] sm:$0xf]
        %v654 = vld [vmem:[%s10 + $0xb8] sm:$0xf]
        %v655 = vld [vmem:[%s10 + $0xbc] sm:$0xf]
        %v656 = vld [vmem:[%s10 + $0xc0] sm:$0xf]
        %v657 = vld [vmem:[%s10 + $0xc4] sm:$0xf]
        %v658 = vld [vmem:[%s10 + $0xc8] sm:$0xf]
        %v659 = vld [vmem:[%s10 + $0xcc] sm:$0xf]
        %v660 = vld [vmem:[%s10 + $0xd0] sm:$0xf]
        %v661 = vld [vmem:[%s10 + $0xd4] sm:$0xf]
        %v662 = vld [vmem:[%s10 + $0xd8] sm:$0xf]
        %v663 = vld [vmem:[%s10 + $0xdc] sm:$0xf]
        %v664 = vld [vmem:[%s10 + $0xe0] sm:$0xf]
        %v665 = vld [vmem:[%s10 + $0xe4] sm:$0xf]
        %v666 = vld [vmem:[%s10 + $0xe8] sm:$0xf]
        %v667 = vld [vmem:[%s10 + $0xec] sm:$0xf]
        %v668 = vld [vmem:[%s10 + $0xf0] sm:$0xf]
        %v669 = vld [vmem:[%s10 + $0xf4] sm:$0xf]
        %v670 = vld [vmem:[%s10 + $0xf8] sm:$0xf]
        %v671 = vld [vmem:[%s10 + $0xfc] sm:$0xf]
        %v672 = vld [vmem:[%s10 + $0x100] sm:$0xf]
        %v673 = vld [vmem:[%s10 + $0x104] sm:$0xf]
        %v674 = vld [vmem:[%s10 + $0x108] sm:$0xf]
        %v675 = vld [vmem:[%s10 + $0x10c] sm:$0xf]
        %v676 = vld [vmem:[%s10 + $0x110] sm:$0xf]
        %v677 = vld [vmem:[%s10 + $0x114] sm:$0xf]
        %v678 = vld [vmem:[%s10 + $0x118] sm:$0xf]
        %v679 = vld [vmem:[%s10 + $0x11c] sm:$0xf]
        %v680 = vld [vmem:[%s10 + $0x120] sm:$0xf]
        %v681 = vld [vmem:[%s10 + $0x124] sm:$0xf]
        %v682 = vld [vmem:[%s10 + $0x128] sm:$0xf]
        %v683 = vld [vmem:[%s10 + $0x12c] sm:$0xf]
        %v684 = vld [vmem:[%s10 + $0x130] sm:$0xf]
        %v685 = vld [vmem:[%s10 + $0x134] sm:$0xf]
        %v686 = vld [vmem:[%s10 + $0x138] sm:$0xf]
        %v687 = vld [vmem:[%s10 + $0x13c] sm:$0xf]
        %v688 = vld [vmem:[%s10 + $0x140] sm:$0xf]
        %v689 = vld [vmem:[%s10 + $0x144] sm:$0xf]
        %v690 = vld [vmem:[%s10 + $0x148] sm:$0xf]
        %v691 = vld [vmem:[%s10 + $0x14c] sm:$0xf]
        %v692 = vld [vmem:[%s10 + $0x150] sm:$0xf]
        %v693 = vld [vmem:[%s10 + $0x154] sm:$0xf]
        %v694 = vld [vmem:[%s10 + $0x158] sm:$0xf]
        %v695 = vld [vmem:[%s10 + $0x15c] sm:$0xf]
        %v696 = vld [vmem:[%s10 + $0x160] sm:$0xf]
        %v697 = vld [vmem:[%s10 + $0x164] sm:$0xf]
        %v698 = vld [vmem:[%s10 + $0x168] sm:$0xf]
        %v699 = vld [vmem:[%s10 + $0x16c] sm:$0xf]
        %v700 = vld [vmem:[%s10 + $0x170] sm:$0xf]
        %v701 = vld [vmem:[%s10 + $0x174] sm:$0xf]
        %v702 = vld [vmem:[%s10 + $0x178] sm:$0xf]
        %v703 = vld [vmem:[%s10 + $0x17c] sm:$0xf]
        %v704 = vld [vmem:[%s10 + $0x180] sm:$0xf]
        %v705 = vld [vmem:[%s10 + $0x184] sm:$0xf]
        %v706 = vld [vmem:[%s10 + $0x188] sm:$0xf]
        %v707 = vld [vmem:[%s10 + $0x18c] sm:$0xf]
        %v708 = vld [vmem:[%s10 + $0x190] sm:$0xf]
        %v709 = vld [vmem:[%s10 + $0x194] sm:$0xf]
        %v710 = vld [vmem:[%s10 + $0x198] sm:$0xf]
        %v711 = vld [vmem:[%s10 + $0x19c] sm:$0xf]
        %v712 = vld [vmem:[%s10 + $0x1a0] sm:$0xf]
        %v713 = vld [vmem:[%s10 + $0x1a4] sm:$0xf]
        %v714 = vld [vmem:[%s10 + $0x1a8] sm:$0xf]
        %v715 = vld [vmem:[%s10 + $0x1ac] sm:$0xf]
        %v716 = vld [vmem:[%s10 + $0x1b0] sm:$0xf]
        %v717 = vld [vmem:[%s10 + $0x1b4] sm:$0xf]
        %v718 = vld [vmem:[%s10 + $0x1b8] sm:$0xf]
        %v719 = vld [vmem:[%s10 + $0x1bc] sm:$0xf]
        %v720 = vld [vmem:[%s10 + $0x1c0] sm:$0xf]
        %v721 = vld [vmem:[%s10 + $0x1c4] sm:$0xf]
        %v722 = vld [vmem:[%s10 + $0x1c8] sm:$0xf]
        %v723 = vld [vmem:[%s10 + $0x1cc] sm:$0xf]
        %v724 = vld [vmem:[%s10 + $0x1d0] sm:$0xf]
        %v725 = vld [vmem:[%s10 + $0x1d4] sm:$0xf]
        %v726 = vld [vmem:[%s10 + $0x1d8] sm:$0xf]
        %v727 = vld [vmem:[%s10 + $0x1dc] sm:$0xf]
        %v728 = vld [vmem:[%s10 + $0x1e0] sm:$0xf]
        %v729 = vld [vmem:[%s10 + $0x1e4] sm:$0xf]
        %v730 = vld [vmem:[%s10 + $0x1e8] sm:$0xf]
        %v731 = vld [vmem:[%s10 + $0x1ec] sm:$0xf]
        %v732 = vld [vmem:[%s10 + $0x1f0] sm:$0xf]
        %v733 = vld [vmem:[%s10 + $0x1f4] sm:$0xf]
        %v734 = vld [vmem:[%s10 + $0x1f8] sm:$0xf]
        %v735 = vld [vmem:[%s10 + $0x1fc] sm:$0xf]
        %v736 = vld [vmem:[%s10 + $0x200] sm:$0xf]
        %v737 = vld [vmem:[%s10 + $0x204] sm:$0xf]
        %v738 = vld [vmem:[%s10 + $0x208] sm:$0xf]
        %v739 = vld [vmem:[%s10 + $0x20c] sm:$0xf]
        %v740 = vld [vmem:[%s10 + $0x210] sm:$0xf]
        %v741 = vld [vmem:[%s10 + $0x214] sm:$0xf]
        %v742 = vld [vmem:[%s10 + $0x218] sm:$0xf]
        %v743 = vld [vmem:[%s10 + $0x21c] sm:$0xf]
        %v744 = vld [vmem:[%s10 + $0x220] sm:$0xf]
        %v745 = vld [vmem:[%s10 + $0x224] sm:$0xf]
        %v746 = vld [vmem:[%s10 + $0x228] sm:$0xf]
        %v747 = vld [vmem:[%s10 + $0x22c] sm:$0xf]
        %v748 = vld [vmem:[%s10 + $0x230] sm:$0xf]
        %v749 = vld [vmem:[%s10 + $0x234] sm:$0xf]
        %v750 = vld [vmem:[%s10 + $0x238] sm:$0xf]
        %v751 = vld [vmem:[%s10 + $0x23c] sm:$0xf]
        %v752 = vld [vmem:[%s10 + $0x240] sm:$0xf]
        %v753 = vld [vmem:[%s10 + $0x244] sm:$0xf]
        %v754 = vld [vmem:[%s10 + $0x248] sm:$0xf]
        %v755 = vld [vmem:[%s10 + $0x24c] sm:$0xf]
        %v756 = vld [vmem:[%s10 + $0x250] sm:$0xf]
        %v757 = vld [vmem:[%s10 + $0x254] sm:$0xf]
        %v758 = vld [vmem:[%s10 + $0x258] sm:$0xf]
        %v759 = vld [vmem:[%s10 + $0x25c] sm:$0xf]
        %v760 = vld [vmem:[%s10 + $0x260] sm:$0xf]
        %v761 = vld [vmem:[%s10 + $0x264] sm:$0xf]
        %v762 = vld [vmem:[%s10 + $0x268] sm:$0xf]
        %v763 = vld [vmem:[%s10 + $0x26c] sm:$0xf]
        %v764 = vld [vmem:[%s10 + $0x270] sm:$0xf]
        %v765 = vld [vmem:[%s10 + $0x274] sm:$0xf]
        %v766 = vld [vmem:[%s10 + $0x278] sm:$0xf]
        %v767 = vld [vmem:[%s10 + $0x27c] sm:$0xf]
        %v768 = vld [vmem:[%s10 + $0x280] sm:$0xf]
        %v769 = vld [vmem:[%s10 + $0x284] sm:$0xf]
        %v770 = vld [vmem:[%s10 + $0x288] sm:$0xf]
        %v771 = vld [vmem:[%s10 + $0x28c] sm:$0xf]
        %v772 = vld [vmem:[%s10 + $0x290] sm:$0xf]
        %v773 = vld [vmem:[%s10 + $0x294] sm:$0xf]
        %v774 = vld [vmem:[%s10 + $0x298] sm:$0xf]
        %v775 = vld [vmem:[%s10 + $0x29c] sm:$0xf]
        %v776 = vld [vmem:[%s10 + $0x2a0] sm:$0xf]
        %v777 = vld [vmem:[%s10 + $0x2a4] sm:$0xf]
        %v778 = vld [vmem:[%s10 + $0x2a8] sm:$0xf]
        %v779 = vld [vmem:[%s10 + $0x2ac] sm:$0xf]
        %v780 = vld [vmem:[%s10 + $0x2b0] sm:$0xf]
        %v781 = vld [vmem:[%s10 + $0x2b4] sm:$0xf]
        %v782 = vld [vmem:[%s10 + $0x2b8] sm:$0xf]
        %v783 = vld [vmem:[%s10 + $0x2bc] sm:$0xf]
        %v784 = vld [vmem:[%s10 + $0x2c0] sm:$0xf]
        %v785 = vld [vmem:[%s10 + $0x2c4] sm:$0xf]
        %v786 = vld [vmem:[%s10 + $0x2c8] sm:$0xf]
        %v787 = vld [vmem:[%s10 + $0x2cc] sm:$0xf]
        %v788 = vld [vmem:[%s10 + $0x2d0] sm:$0xf]
        %v789 = vld [vmem:[%s10 + $0x2d4] sm:$0xf]
        %v790 = vld [vmem:[%s10 + $0x2d8] sm:$0xf]
        %v791 = vld [vmem:[%s10 + $0x2dc] sm:$0xf]
        %v792 = vld [vmem:[%s10 + $0x2e0] sm:$0xf]
        %v793 = vld [vmem:[%s10 + $0x2e4] sm:$0xf]
        %v794 = vld [vmem:[%s10 + $0x2e8] sm:$0xf]
        %v795 = vld [vmem:[%s10 + $0x2ec] sm:$0xf]
        %v796 = vld [vmem:[%s10 + $0x2f0] sm:$0xf]
        %v797 = vld [vmem:[%s10 + $0x2f4] sm:$0xf]
        %v798 = vld [vmem:[%s10 + $0x2f8] sm:$0xf]
        %v799 = vld [vmem:[%s10 + $0x2fc] sm:$0xf]
        %v800 = vld [vmem:[%s10 + $0x300] sm:$0xf]
        %v801 = vld [vmem:[%s10 + $0x304] sm:$0xf]
        %v802 = vld [vmem:[%s10 + $0x308] sm:$0xf]
        %v803 = vld [vmem:[%s10 + $0x30c] sm:$0xf]
        %v804 = vld [vmem:[%s10 + $0x310] sm:$0xf]
        %v805 = vld [vmem:[%s10 + $0x314] sm:$0xf]
        %v806 = vld [vmem:[%s10 + $0x318] sm:$0xf]
        %v807 = vld [vmem:[%s10 + $0x31c] sm:$0xf]
        %v808 = vld [vmem:[%s10 + $0x320] sm:$0xf]
        %v809 = vld [vmem:[%s10 + $0x324] sm:$0xf]
        %v810 = vld [vmem:[%s10 + $0x328] sm:$0xf]
        %v811 = vld [vmem:[%s10 + $0x32c] sm:$0xf]
        %v812 = vld [vmem:[%s10 + $0x330] sm:$0xf]
        %v813 = vld [vmem:[%s10 + $0x334] sm:$0xf]
        %v814 = vld [vmem:[%s10 + $0x338] sm:$0xf]
        %v815 = vld [vmem:[%s10 + $0x33c] sm:$0xf]
        %v816 = vld [vmem:[%s10 + $0x340] sm:$0xf]
        %v817 = vld [vmem:[%s10 + $0x344] sm:$0xf]
        %v818 = vld [vmem:[%s10 + $0x348] sm:$0xf]
        %v819 = vld [vmem:[%s10 + $0x34c] sm:$0xf]
        %v820 = vld [vmem:[%s10 + $0x350] sm:$0xf]
        %v821 = vld [vmem:[%s10 + $0x354] sm:$0xf]
        %v822 = vld [vmem:[%s10 + $0x358] sm:$0xf]
        %v823 = vld [vmem:[%s10 + $0x35c] sm:$0xf]
        %v824 = vld [vmem:[%s10 + $0x360] sm:$0xf]
        %v825 = vld [vmem:[%s10 + $0x364] sm:$0xf]
        %v826 = vld [vmem:[%s10 + $0x368] sm:$0xf]
        %v827 = vld [vmem:[%s10 + $0x36c] sm:$0xf]
        %v828 = vld [vmem:[%s10 + $0x370] sm:$0xf]
        %v829 = vld [vmem:[%s10 + $0x374] sm:$0xf]
        %v830 = vld [vmem:[%s10 + $0x378] sm:$0xf]
        %v831 = vld [vmem:[%s10 + $0x37c] sm:$0xf]
        %v832 = vld [vmem:[%s10 + $0x380] sm:$0xf]
        %v833 = vld [vmem:[%s10 + $0x384] sm:$0xf]
        %v834 = vld [vmem:[%s10 + $0x388] sm:$0xf]
        %v835 = vld [vmem:[%s10 + $0x38c] sm:$0xf]
        %v836 = vld [vmem:[%s10 + $0x390] sm:$0xf]
        %v837 = vld [vmem:[%s10 + $0x394] sm:$0xf]
        %v838 = vld [vmem:[%s10 + $0x398] sm:$0xf]
        %v839 = vld [vmem:[%s10 + $0x39c] sm:$0xf]
        %v840 = vld [vmem:[%s10 + $0x3a0] sm:$0xf]
        %v841 = vld [vmem:[%s10 + $0x3a4] sm:$0xf]
        %v842 = vld [vmem:[%s10 + $0x3a8] sm:$0xf]
        %v843 = vld [vmem:[%s10 + $0x3ac] sm:$0xf]
        %v844 = vld [vmem:[%s10 + $0x3b0] sm:$0xf]
        %v845 = vld [vmem:[%s10 + $0x3b4] sm:$0xf]
        %v846 = vld [vmem:[%s10 + $0x3b8] sm:$0xf]
        %v847 = vld [vmem:[%s10 + $0x3bc] sm:$0xf]
        %v848 = vld [vmem:[%s10 + $0x3c0] sm:$0xf]
        %v849 = vld [vmem:[%s10 + $0x3c4] sm:$0xf]
        %v850 = vld [vmem:[%s10 + $0x3c8] sm:$0xf]
        %v851 = vld [vmem:[%s10 + $0x3cc] sm:$0xf]
        %v852 = vld [vmem:[%s10 + $0x3d0] sm:$0xf]
        %v853 = vld [vmem:[%s10 + $0x3d4] sm:$0xf]
        %v854 = vld [vmem:[%s10 + $0x3d8] sm:$0xf]
        %v855 = vld [vmem:[%s10 + $0x3dc] sm:$0xf]
        %v856 = vld [vmem:[%s10 + $0x3e0] sm:$0xf]
        %v857 = vld [vmem:[%s10 + $0x3e4] sm:$0xf]
        %v858 = vld [vmem:[%s10 + $0x3e8] sm:$0xf]
        %v859 = vld [vmem:[%s10 + $0x3ec] sm:$0xf]
        %v860 = vld [vmem:[%s10 + $0x3f0] sm:$0xf]
        %v861 = vld [vmem:[%s10 + $0x3f4] sm:$0xf]
        %v862 = vld [vmem:[%s10 + $0x3f8] sm:$0xf]
        %v863 = vld [vmem:[%s10 + $0x3fc] sm:$0xf]
        %v864 = vld [vmem:[%s11] sm:$0x1]
        %v865 = vld [vmem:[%s12] sm:$0x1]
        %v866 = vld [vmem:[%s13] sm:$0x1]
        %868 = vrot.lane.b32.xlu0 %v561, 112
        %v869 = vpop.permute.xlu0 %868
        %v871 = vcombine.high %v561, 0.0
        %v873 = vunpack.c.l.s4 1983009808
        %v874 = vunpack.c.0.s8 %v873
        %v875 = vlaneseq
        %v876 = vshrl.u32 %v875, 7
        %v877 = vsub.s32 %v874, %v876
        %v878 = vrot.slane %v561, %v877
        %v880 = vunpack.c.l.s4 1983009808
        %v881 = vunpack.c.0.s8 %v880
        %v882 = vlaneseq
        %v883 = vshrl.u32 %v882, 7
        %v884 = vsub.s32 %v881, %v883
        %v885 = vrot.slane %v871, %v884
        %v886 = vcombine.high %v869, 0.0
        %v888 = vunpack.c.l.s4 1983009808
        %v889 = vunpack.c.0.s8 %v888
        %v890 = vlaneseq
        %v891 = vshrl.u32 %v890, 7
        %v892 = vsub.s32 %v889, %v891
        %v893 = vrot.slane %v869, %v892
        %v895 = vunpack.c.l.s4 1983009808
        %v896 = vunpack.c.0.s8 %v895
        %v897 = vlaneseq
        %v898 = vshrl.u32 %v897, 7
        %v899 = vsub.s32 %v896, %v898
        %v900 = vrot.slane %v886, %v899
        %v901 = vcombine.low %v878, %v893
        %v902 = vcombine.high %v878, %v893
        %v904 = vunpack.c.l.s4 1934713408
        %v905 = vunpack.c.0.s8 %v904
        %v906 = vlaneseq
        %v907 = vshrl.u32 %v906, 7
        %v908 = vsub.s32 %v905, %v907
        %v909 = vrot.slane %v901, %v908
        %v911 = vunpack.c.l.s4 1934713408
        %v912 = vunpack.c.0.s8 %v911
        %v913 = vlaneseq
        %v914 = vshrl.u32 %v913, 7
        %v915 = vsub.s32 %v912, %v914
        %v916 = vrot.slane %v902, %v915
        %v917 = vcombine.low %v885, %v900
        %v918 = vcombine.high %v885, %v900
        %v920 = vunpack.c.l.s4 1934713408
        %v921 = vunpack.c.0.s8 %v920
        %v922 = vlaneseq
        %v923 = vshrl.u32 %v922, 7
        %v924 = vsub.s32 %v921, %v923
        %v925 = vrot.slane %v917, %v924
        %v927 = vunpack.c.l.s4 1934713408
        %v928 = vunpack.c.0.s8 %v927
        %v929 = vlaneseq
        %v930 = vshrl.u32 %v929, 7
        %v931 = vsub.s32 %v928, %v930
        %v932 = vrot.slane %v918, %v931
        %v933 = vcombine.high %v909, 0.0
        %v934 = vcombine.high %v916, 0.0
        %v935 = vcombine.high %v925, 0.0
        %v936 = vcombine.high %v932, 0.0
        %v937 = vcombine.low %v909, %v916
        %v939 = vunpack.c.l.s4 1983009808
        %v940 = vunpack.c.0.s8 %v939
        %v941 = vlaneseq
        %v942 = vshrl.u32 %v941, 7
        %v943 = vsub.s32 %v940, %v942
        %v944 = vrot.slane %v937, %v943
        %v945 = vcombine.low %v933, %v934
        %v947 = vunpack.c.l.s4 1983009808
        %v948 = vunpack.c.0.s8 %v947
        %v949 = vlaneseq
        %v950 = vshrl.u32 %v949, 7
        %v951 = vsub.s32 %v948, %v950
        %v952 = vrot.slane %v945, %v951
        %v953 = vcombine.low %v925, %v932
        %v955 = vunpack.c.l.s4 1983009808
        %v956 = vunpack.c.0.s8 %v955
        %v957 = vlaneseq
        %v958 = vshrl.u32 %v957, 7
        %v959 = vsub.s32 %v956, %v958
        %v960 = vrot.slane %v953, %v959
        %v961 = vcombine.low %v935, %v936
        %v963 = vunpack.c.l.s4 1983009808
        %v964 = vunpack.c.0.s8 %v963
        %v965 = vlaneseq
        %v966 = vshrl.u32 %v965, 7
        %v967 = vsub.s32 %v964, %v966
        %v968 = vrot.slane %v961, %v967
        %v969 = vcombine.low %v944, %v952
        %v971 = vunpack.c.l.s4 1934713408
        %v972 = vunpack.c.0.s8 %v971
        %v973 = vlaneseq
        %v974 = vshrl.u32 %v973, 7
        %v975 = vsub.s32 %v972, %v974
        %v976 = vrot.slane %v969, %v975
        %v977 = vcombine.low %v960, %v968
        %v979 = vunpack.c.l.s4 1934713408
        %v980 = vunpack.c.0.s8 %v979
        %v981 = vlaneseq
        %v982 = vshrl.u32 %v981, 7
        %v983 = vsub.s32 %v980, %v982
        %v984 = vrot.slane %v977, %v983
        %v985 = vcombine.low %v976, %v984
        %v986 = vcombine.high %v976, %v984
        %v987 = vpack.c.bf16 %v985, %v985
        %v988 = vpack.c.bf16 %v986, %v986
        %989 = vrot.lane.b32.xlu0 %v561, 96
        %v990 = vpop.permute.xlu0 %989
        %991 = vrot.lane.b32.xlu0 %v869, 96
        %v992 = vpop.permute.xlu0 %991
        %v995 = vcombine.high %v990, 0.0
        %v997 = vunpack.c.l.s4 1983009808
        %v998 = vunpack.c.0.s8 %v997
        %v999 = vlaneseq
        %v1000 = vshrl.u32 %v999, 7
        %v1001 = vsub.s32 %v998, %v1000
        %v1002 = vrot.slane %v990, %v1001
        %v1004 = vunpack.c.l.s4 1983009808
        %v1005 = vunpack.c.0.s8 %v1004
        %v1006 = vlaneseq
        %v1007 = vshrl.u32 %v1006, 7
        %v1008 = vsub.s32 %v1005, %v1007
        %v1009 = vrot.slane %v995, %v1008
        %v1010 = vcombine.high %v992, 0.0
        %v1012 = vunpack.c.l.s4 1983009808
        %v1013 = vunpack.c.0.s8 %v1012
        %v1014 = vlaneseq
        %v1015 = vshrl.u32 %v1014, 7
        %v1016 = vsub.s32 %v1013, %v1015
        %v1017 = vrot.slane %v992, %v1016
        %v1019 = vunpack.c.l.s4 1983009808
        %v1020 = vunpack.c.0.s8 %v1019
        %v1021 = vlaneseq
        %v1022 = vshrl.u32 %v1021, 7
        %v1023 = vsub.s32 %v1020, %v1022
        %v1024 = vrot.slane %v1010, %v1023
        %v1025 = vcombine.low %v1002, %v1017
        %v1026 = vcombine.high %v1002, %v1017
        %v1028 = vunpack.c.l.s4 1934713408
        %v1029 = vunpack.c.0.s8 %v1028
        %v1030 = vlaneseq
        %v1031 = vshrl.u32 %v1030, 7
        %v1032 = vsub.s32 %v1029, %v1031
        %v1033 = vrot.slane %v1025, %v1032
        %v1035 = vunpack.c.l.s4 1934713408
        %v1036 = vunpack.c.0.s8 %v1035
        %v1037 = vlaneseq
        %v1038 = vshrl.u32 %v1037, 7
        %v1039 = vsub.s32 %v1036, %v1038
        %v1040 = vrot.slane %v1026, %v1039
        %v1041 = vcombine.low %v1009, %v1024
        %v1042 = vcombine.high %v1009, %v1024
        %v1044 = vunpack.c.l.s4 1934713408
        %v1045 = vunpack.c.0.s8 %v1044
        %v1046 = vlaneseq
        %v1047 = vshrl.u32 %v1046, 7
        %v1048 = vsub.s32 %v1045, %v1047
        %v1049 = vrot.slane %v1041, %v1048
        %v1051 = vunpack.c.l.s4 1934713408
        %v1052 = vunpack.c.0.s8 %v1051
        %v1053 = vlaneseq
        %v1054 = vshrl.u32 %v1053, 7
        %v1055 = vsub.s32 %v1052, %v1054
        %v1056 = vrot.slane %v1042, %v1055
        %v1057 = vcombine.high %v1033, 0.0
        %v1058 = vcombine.high %v1040, 0.0
        %v1059 = vcombine.high %v1049, 0.0
        %v1060 = vcombine.high %v1056, 0.0
        %v1061 = vcombine.low %v1033, %v1040
        %v1063 = vunpack.c.l.s4 1983009808
        %v1064 = vunpack.c.0.s8 %v1063
        %v1065 = vlaneseq
        %v1066 = vshrl.u32 %v1065, 7
        %v1067 = vsub.s32 %v1064, %v1066
        %v1068 = vrot.slane %v1061, %v1067
        %v1069 = vcombine.low %v1057, %v1058
        %v1071 = vunpack.c.l.s4 1983009808
        %v1072 = vunpack.c.0.s8 %v1071
        %v1073 = vlaneseq
        %v1074 = vshrl.u32 %v1073, 7
        %v1075 = vsub.s32 %v1072, %v1074
        %v1076 = vrot.slane %v1069, %v1075
        %v1077 = vcombine.low %v1049, %v1056
        %v1079 = vunpack.c.l.s4 1983009808
        %v1080 = vunpack.c.0.s8 %v1079
        %v1081 = vlaneseq
        %v1082 = vshrl.u32 %v1081, 7
        %v1083 = vsub.s32 %v1080, %v1082
        %v1084 = vrot.slane %v1077, %v1083
        %v1085 = vcombine.low %v1059, %v1060
        %v1087 = vunpack.c.l.s4 1983009808
        %v1088 = vunpack.c.0.s8 %v1087
        %v1089 = vlaneseq
        %v1090 = vshrl.u32 %v1089, 7
        %v1091 = vsub.s32 %v1088, %v1090
        %v1092 = vrot.slane %v1085, %v1091
        %v1093 = vcombine.low %v1068, %v1076
        %v1095 = vunpack.c.l.s4 1934713408
        %v1096 = vunpack.c.0.s8 %v1095
        %v1097 = vlaneseq
        %v1098 = vshrl.u32 %v1097, 7
        %v1099 = vsub.s32 %v1096, %v1098
        %v1100 = vrot.slane %v1093, %v1099
        %v1101 = vcombine.low %v1084, %v1092
        %v1103 = vunpack.c.l.s4 1934713408
        %v1104 = vunpack.c.0.s8 %v1103
        %v1105 = vlaneseq
        %v1106 = vshrl.u32 %v1105, 7
        %v1107 = vsub.s32 %v1104, %v1106
        %v1108 = vrot.slane %v1101, %v1107
        %v1109 = vcombine.low %v1100, %v1108
        %v1110 = vcombine.high %v1100, %v1108
        %v1111 = vpack.c.bf16 %v1109, %v1109
        %v1112 = vpack.c.bf16 %v1110, %v1110
        %1113 = vrot.lane.b32.xlu0 %v561, 64
        %v1114 = vpop.permute.xlu0 %1113
        %1115 = vrot.lane.b32.xlu0 %v869, 64
        %v1116 = vpop.permute.xlu0 %1115
        %v1119 = vcombine.high %v1114, 0.0
        %v1121 = vunpack.c.l.s4 1983009808
        %v1122 = vunpack.c.0.s8 %v1121
        %v1123 = vlaneseq
        %v1124 = vshrl.u32 %v1123, 7
        %v1125 = vsub.s32 %v1122, %v1124
        %v1126 = vrot.slane %v1114, %v1125
        %v1128 = vunpack.c.l.s4 1983009808
        %v1129 = vunpack.c.0.s8 %v1128
        %v1130 = vlaneseq
        %v1131 = vshrl.u32 %v1130, 7
        %v1132 = vsub.s32 %v1129, %v1131
        %v1133 = vrot.slane %v1119, %v1132
        %v1134 = vcombine.high %v1116, 0.0
        %v1136 = vunpack.c.l.s4 1983009808
        %v1137 = vunpack.c.0.s8 %v1136
        %v1138 = vlaneseq
        %v1139 = vshrl.u32 %v1138, 7
        %v1140 = vsub.s32 %v1137, %v1139
        %v1141 = vrot.slane %v1116, %v1140
        %v1143 = vunpack.c.l.s4 1983009808
        %v1144 = vunpack.c.0.s8 %v1143
        %v1145 = vlaneseq
        %v1146 = vshrl.u32 %v1145, 7
        %v1147 = vsub.s32 %v1144, %v1146
        %v1148 = vrot.slane %v1134, %v1147
        %v1149 = vcombine.low %v1126, %v1141
        %v1150 = vcombine.high %v1126, %v1141
        %v1152 = vunpack.c.l.s4 1934713408
        %v1153 = vunpack.c.0.s8 %v1152
        %v1154 = vlaneseq
        %v1155 = vshrl.u32 %v1154, 7
        %v1156 = vsub.s32 %v1153, %v1155
        %v1157 = vrot.slane %v1149, %v1156
        %v1159 = vunpack.c.l.s4 1934713408
        %v1160 = vunpack.c.0.s8 %v1159
        %v1161 = vlaneseq
        %v1162 = vshrl.u32 %v1161, 7
        %v1163 = vsub.s32 %v1160, %v1162
        %v1164 = vrot.slane %v1150, %v1163
        %v1165 = vcombine.low %v1133, %v1148
        %v1166 = vcombine.high %v1133, %v1148
        %v1168 = vunpack.c.l.s4 1934713408
        %v1169 = vunpack.c.0.s8 %v1168
        %v1170 = vlaneseq
        %v1171 = vshrl.u32 %v1170, 7
        %v1172 = vsub.s32 %v1169, %v1171
        %v1173 = vrot.slane %v1165, %v1172
        %v1175 = vunpack.c.l.s4 1934713408
        %v1176 = vunpack.c.0.s8 %v1175
        %v1177 = vlaneseq
        %v1178 = vshrl.u32 %v1177, 7
        %v1179 = vsub.s32 %v1176, %v1178
        %v1180 = vrot.slane %v1166, %v1179
        %v1181 = vcombine.high %v1157, 0.0
        %v1182 = vcombine.high %v1164, 0.0
        %v1183 = vcombine.high %v1173, 0.0
        %v1184 = vcombine.high %v1180, 0.0
        %v1185 = vcombine.low %v1157, %v1164
        %v1187 = vunpack.c.l.s4 1983009808
        %v1188 = vunpack.c.0.s8 %v1187
        %v1189 = vlaneseq
        %v1190 = vshrl.u32 %v1189, 7
        %v1191 = vsub.s32 %v1188, %v1190
        %v1192 = vrot.slane %v1185, %v1191
        %v1193 = vcombine.low %v1181, %v1182
        %v1195 = vunpack.c.l.s4 1983009808
        %v1196 = vunpack.c.0.s8 %v1195
        %v1197 = vlaneseq
        %v1198 = vshrl.u32 %v1197, 7
        %v1199 = vsub.s32 %v1196, %v1198
        %v1200 = vrot.slane %v1193, %v1199
        %v1201 = vcombine.low %v1173, %v1180
        %v1203 = vunpack.c.l.s4 1983009808
        %v1204 = vunpack.c.0.s8 %v1203
        %v1205 = vlaneseq
        %v1206 = vshrl.u32 %v1205, 7
        %v1207 = vsub.s32 %v1204, %v1206
        %v1208 = vrot.slane %v1201, %v1207
        %v1209 = vcombine.low %v1183, %v1184
        %v1211 = vunpack.c.l.s4 1983009808
        %v1212 = vunpack.c.0.s8 %v1211
        %v1213 = vlaneseq
        %v1214 = vshrl.u32 %v1213, 7
        %v1215 = vsub.s32 %v1212, %v1214
        %v1216 = vrot.slane %v1209, %v1215
        %v1217 = vcombine.low %v1192, %v1200
        %v1219 = vunpack.c.l.s4 1934713408
        %v1220 = vunpack.c.0.s8 %v1219
        %v1221 = vlaneseq
        %v1222 = vshrl.u32 %v1221, 7
        %v1223 = vsub.s32 %v1220, %v1222
        %v1224 = vrot.slane %v1217, %v1223
        %v1225 = vcombine.low %v1208, %v1216
        %v1227 = vunpack.c.l.s4 1934713408
        %v1228 = vunpack.c.0.s8 %v1227
        %v1229 = vlaneseq
        %v1230 = vshrl.u32 %v1229, 7
        %v1231 = vsub.s32 %v1228, %v1230
        %v1232 = vrot.slane %v1225, %v1231
        %v1233 = vcombine.low %v1224, %v1232
        %v1234 = vcombine.high %v1224, %v1232
        %v1235 = vpack.c.bf16 %v1233, %v1233
        %v1236 = vpack.c.bf16 %v1234, %v1234
        %v1238 = vlaneseq
        %v1239 = vshrl.u32 %v1238, 7
        %v1240 = vsub.s32 0, %v1239
        %v1241 = vrot.slane %v566, %v1240
        %vm1243 = vcmask 130048
        %v1245 = vsel %vm1243, %v987, 0
        %v1248 = vsel %vm1243, %v1111, 0
        %1250 = vmatprep.subr.bf16.mxu0 0
        %1251 = vmatpush1.bf16.xpose.msra.mxu0 0
        %1252 = vmatprep.subr.bf16.mxu0 0
        %1253 = vmatpush1.bf16.xpose.msra.mxu0 0
        %1254 = vmatprep.subr.bf16.mxu0 0
        %1255 = vmatpush1.bf16.xpose.msra.mxu0 0
        %1256 = vmatprep.subr.bf16.mxu0 0
        %1257 = vmatpush1.bf16.xpose.msra.mxu0 0
        %1258 = vmatprep.subr.bf16.mxu0 0
        %1259 = vmatpush1.bf16.xpose.msra.mxu0 0
        %1260 = vmatprep.subr.bf16.mxu0 0
        %1261 = vmatpush1.bf16.xpose.msra.mxu0 0
        %1262 = vmatprep.subr.bf16.mxu0 0
        %1263 = vmatpush1.bf16.xpose.msra.mxu0 0
        %1264 = vmatprep.subr.bf16.mxu0 0
        %1265 = vmatpush1.bf16.xpose.msra.mxu0 %v1248
        %1266 = vmatprep.subr.bf16.mxu0 0
        %1267 = vmatpush2.bf16.xpose.msra.mxu0 0
        %1268 = vmatprep.subr.bf16.mxu0 0
        %1269 = vmatpush2.bf16.xpose.msra.mxu0 0
        %1270 = vmatprep.subr.bf16.mxu0 0
        %1271 = vmatpush2.bf16.xpose.msra.mxu0 0
        %1272 = vmatprep.subr.bf16.mxu0 0
        %1273 = vmatpush2.bf16.xpose.msra.mxu0 0
        %1274 = vmatprep.subr.bf16.mxu0 0
        %1275 = vmatpush2.bf16.xpose.msra.mxu0 0
        %1276 = vmatprep.subr.bf16.mxu0 0
        %1277 = vmatpush2.bf16.xpose.msra.mxu0 0
        %1278 = vmatprep.subr.bf16.mxu0 0
        %1279 = vmatpush2.bf16.xpose.msra.mxu0 0
        %1280 = vmatprep.subr.bf16.mxu0 0
        %1281 = vmatpush2.bf16.xpose.msra.mxu0 0
        %1282 = vmatprep.mubr.bf16.mxu0 0
        %1283 = vmatmul.mubr.bf16.gmra.mxu0 %v1245
        %v1284 = vpop.f32.mrf.mxu0
        %v1285 = vadd.f32 %v1241, %v1284
        %v1286 = vpop.f32.mrf.mxu0
        %v1287 = vpop.f32.mrf.mxu0
        %v1288 = vpop.f32.mrf.mxu0
        %1289 = vdwg.mxu0
        %v1291 = vsel %vm1243, %v988, 0
        %v1294 = vsel %vm1243, %v1112, 0
        %1296 = vmatprep.subr.bf16.mxu0 0
        %1297 = vmatpush1.bf16.xpose.msra.mxu0 0
        %1298 = vmatprep.subr.bf16.mxu0 0
        %1299 = vmatpush1.bf16.xpose.msra.mxu0 0
        %1300 = vmatprep.subr.bf16.mxu0 0
        %1301 = vmatpush1.bf16.xpose.msra.mxu0 0
        %1302 = vmatprep.subr.bf16.mxu0 0
        %1303 = vmatpush1.bf16.xpose.msra.mxu0 0
        %1304 = vmatprep.subr.bf16.mxu0 0
        %1305 = vmatpush1.bf16.xpose.msra.mxu0 0
        %1306 = vmatprep.subr.bf16.mxu0 0
        %1307 = vmatpush1.bf16.xpose.msra.mxu0 0
        %1308 = vmatprep.subr.bf16.mxu0 0
        %1309 = vmatpush1.bf16.xpose.msra.mxu0 0
        %1310 = vmatprep.subr.bf16.mxu0 0
        %1311 = vmatpush1.bf16.xpose.msra.mxu0 %v1294
        %1312 = vmatprep.subr.bf16.mxu0 0
        %1313 = vmatpush2.bf16.xpose.msra.mxu0 0
        %1314 = vmatprep.subr.bf16.mxu0 0
        %1315 = vmatpush2.bf16.xpose.msra.mxu0 0
        %1316 = vmatprep.subr.bf16.mxu0 0
        %1317 = vmatpush2.bf16.xpose.msra.mxu0 0
        %1318 = vmatprep.subr.bf16.mxu0 0
        %1319 = vmatpush2.bf16.xpose.msra.mxu0 0
        %1320 = vmatprep.subr.bf16.mxu0 0
        %1321 = vmatpush2.bf16.xpose.msra.mxu0 0
        %1322 = vmatprep.subr.bf16.mxu0 0
        %1323 = vmatpush2.bf16.xpose.msra.mxu0 0
        %1324 = vmatprep.subr.bf16.mxu0 0
        %1325 = vmatpush2.bf16.xpose.msra.mxu0 0
        %1326 = vmatprep.subr.bf16.mxu0 0
        %1327 = vmatpush2.bf16.xpose.msra.mxu0 0
        %1328 = vmatprep.mubr.bf16.mxu0 0
        %1329 = vmatmul.mubr.bf16.gmra.mxu0 %v1291
        %v1330 = vpop.f32.mrf.mxu0
        %v1331 = vadd.f32 %v1241, %v1330
        %v1332 = vpop.f32.mrf.mxu0
        %v1333 = vpop.f32.mrf.mxu0
        %v1334 = vpop.f32.mrf.mxu0
        %1335 = vdwg.mxu0
        %vm1336 = vcmask 64512
        %v1337 = vsel %vm1336, %v1285, -inf
        %1338 = vmax.xlane.f32.xlu0 %v1337
        %v1339 = vpop.xlane.xlu0 %1338
        %v1340 = vsel %vm1336, %v1331, -inf
        %1341 = vmax.xlane.f32.xlu0 %v1340
        %v1342 = vpop.xlane.xlu0 %1341
        %v1343 = vsub.f32 %v1285, %v1339
        %v1344 = vsub.f32 %v1331, %v1342
        %v1345 = vmul.f32 %v1343, 1.442695
        %v1346 = vpow.pop %v1345
        %v1347 = vmul.f32 %v1344, 1.442695
        %v1348 = vpow.pop %v1347
        %v1349 = vsel %vm1336, %v1346, 0.0
        %1350 = vadd.xlane.f32.xlu0 %v1349
        %v1351 = vpop.xlane.xlu0 %1350
        %v1352 = vsel %vm1336, %v1348, 0.0
        %1353 = vadd.xlane.f32.xlu0 %v1352
        %v1354 = vpop.xlane.xlu0 %1353
        %v1355 = vrcp.pop %v1351
        %v1356 = vmul.f32 %v1346, %v1355
        %v1357 = vrcp.pop %v1354
        %v1358 = vmul.f32 %v1348, %v1357
        %v1359 = vpack.c.bf16 %v1356, %v1356
        %v1360 = vpack.c.bf16 %v1358, %v1358
        %v1362 = vsel %vm1336, %v1359, 0
        %vm1364 = vcmask 1043456
        %v1366 = vsel %vm1364, %v1235, 0
        %1368 = vmatprep.subr.bf16.mxu0 0
        %1369 = vmatpush1.bf16.msra.mxu0 0
        %1370 = vmatprep.subr.bf16.mxu0 0
        %1371 = vmatpush1.bf16.msra.mxu0 0
        %1372 = vmatprep.subr.bf16.mxu0 0
        %1373 = vmatpush1.bf16.msra.mxu0 0
        %1374 = vmatprep.subr.bf16.mxu0 0
        %1375 = vmatpush1.bf16.msra.mxu0 0
        %1376 = vmatprep.subr.bf16.mxu0 0
        %1377 = vmatpush1.bf16.msra.mxu0 0
        %1378 = vmatprep.subr.bf16.mxu0 0
        %1379 = vmatpush1.bf16.msra.mxu0 0
        %1380 = vmatprep.subr.bf16.mxu0 0
        %1381 = vmatpush1.bf16.msra.mxu0 0
        %1382 = vmatprep.subr.bf16.mxu0 0
        %1383 = vmatpush1.bf16.msra.mxu0 %v1366
        %1384 = vmatprep.subr.bf16.mxu0 0
        %1385 = vmatpush2.bf16.msra.mxu0 0
        %1386 = vmatprep.subr.bf16.mxu0 0
        %1387 = vmatpush2.bf16.msra.mxu0 0
        %1388 = vmatprep.subr.bf16.mxu0 0
        %1389 = vmatpush2.bf16.msra.mxu0 0
        %1390 = vmatprep.subr.bf16.mxu0 0
        %1391 = vmatpush2.bf16.msra.mxu0 0
        %1392 = vmatprep.subr.bf16.mxu0 0
        %1393 = vmatpush2.bf16.msra.mxu0 0
        %1394 = vmatprep.subr.bf16.mxu0 0
        %1395 = vmatpush2.bf16.msra.mxu0 0
        %1396 = vmatprep.subr.bf16.mxu0 0
        %1397 = vmatpush2.bf16.msra.mxu0 0
        %1398 = vmatprep.subr.bf16.mxu0 0
        %1399 = vmatpush2.bf16.msra.mxu0 0
        %1400 = vmatprep.mubr.bf16.mxu0 0
        %1401 = vmatmul.mubr.bf16.gmra.mxu0 %v1362
        %v1402 = vpop.f32.mrf.mxu0
        %v1403 = vadd.f32 0.0, %v1402
        %v1404 = vpop.f32.mrf.mxu0
        %v1405 = vpop.f32.mrf.mxu0
        %v1406 = vpop.f32.mrf.mxu0
        %1407 = vdwg.mxu0
        %v1409 = vsel %vm1336, %v1360, 0
        %v1412 = vsel %vm1364, %v1236, 0
        %1414 = vmatprep.subr.bf16.mxu0 0
        %1415 = vmatpush1.bf16.msra.mxu0 0
        %1416 = vmatprep.subr.bf16.mxu0 0
        %1417 = vmatpush1.bf16.msra.mxu0 0
        %1418 = vmatprep.subr.bf16.mxu0 0
        %1419 = vmatpush1.bf16.msra.mxu0 0
        %1420 = vmatprep.subr.bf16.mxu0 0
        %1421 = vmatpush1.bf16.msra.mxu0 0
        %1422 = vmatprep.subr.bf16.mxu0 0
        %1423 = vmatpush1.bf16.msra.mxu0 0
        %1424 = vmatprep.subr.bf16.mxu0 0
        %1425 = vmatpush1.bf16.msra.mxu0 0
        %1426 = vmatprep.subr.bf16.mxu0 0
        %1427 = vmatpush1.bf16.msra.mxu0 0
        %1428 = vmatprep.subr.bf16.mxu0 0
        %1429 = vmatpush1.bf16.msra.mxu0 %v1412
        %1430 = vmatprep.subr.bf16.mxu0 0
        %1431 = vmatpush2.bf16.msra.mxu0 0
        %1432 = vmatprep.subr.bf16.mxu0 0
        %1433 = vmatpush2.bf16.msra.mxu0 0
        %1434 = vmatprep.subr.bf16.mxu0 0
        %1435 = vmatpush2.bf16.msra.mxu0 0
        %1436 = vmatprep.subr.bf16.mxu0 0
        %1437 = vmatpush2.bf16.msra.mxu0 0
        %1438 = vmatprep.subr.bf16.mxu0 0
        %1439 = vmatpush2.bf16.msra.mxu0 0
        %1440 = vmatprep.subr.bf16.mxu0 0
        %1441 = vmatpush2.bf16.msra.mxu0 0
        %1442 = vmatprep.subr.bf16.mxu0 0
        %1443 = vmatpush2.bf16.msra.mxu0 0
        %1444 = vmatprep.subr.bf16.mxu0 0
        %1445 = vmatpush2.bf16.msra.mxu0 0
        %1446 = vmatprep.mubr.bf16.mxu0 0
        %1447 = vmatmul.mubr.bf16.gmra.mxu0 %v1409
        %v1448 = vpop.f32.mrf.mxu0
        %v1449 = vadd.f32 0.0, %v1448
        %v1450 = vpop.f32.mrf.mxu0
        %v1451 = vpop.f32.mrf.mxu0
        %v1452 = vpop.f32.mrf.mxu0
        %1453 = vdwg.mxu0
        %v1454 = vcombine.high %v1403, 0.0
        %v1456 = vunpack.c.l.s4 1983009808
        %v1457 = vunpack.c.0.s8 %v1456
        %v1458 = vlaneseq
        %v1459 = vshrl.u32 %v1458, 7
        %v1460 = vsub.s32 %v1457, %v1459
        %v1461 = vrot.slane %v1403, %v1460
        %v1463 = vunpack.c.l.s4 1983009808
        %v1464 = vunpack.c.0.s8 %v1463
        %v1465 = vlaneseq
        %v1466 = vshrl.u32 %v1465, 7
        %v1467 = vsub.s32 %v1464, %v1466
        %v1468 = vrot.slane %v1454, %v1467
        %v1469 = vcombine.high %v1449, 0.0
        %v1471 = vunpack.c.l.s4 1983009808
        %v1472 = vunpack.c.0.s8 %v1471
        %v1473 = vlaneseq
        %v1474 = vshrl.u32 %v1473, 7
        %v1475 = vsub.s32 %v1472, %v1474
        %v1476 = vrot.slane %v1449, %v1475
        %v1478 = vunpack.c.l.s4 1983009808
        %v1479 = vunpack.c.0.s8 %v1478
        %v1480 = vlaneseq
        %v1481 = vshrl.u32 %v1480, 7
        %v1482 = vsub.s32 %v1479, %v1481
        %v1483 = vrot.slane %v1469, %v1482
        %v1484 = vcombine.low %v1461, %v1476
        %v1485 = vcombine.high %v1461, %v1476
        %v1487 = vunpack.c.l.s4 1934713408
        %v1488 = vunpack.c.0.s8 %v1487
        %v1489 = vlaneseq
        %v1490 = vshrl.u32 %v1489, 7
        %v1491 = vsub.s32 %v1488, %v1490
        %v1492 = vrot.slane %v1484, %v1491
        %v1494 = vunpack.c.l.s4 1934713408
        %v1495 = vunpack.c.0.s8 %v1494
        %v1496 = vlaneseq
        %v1497 = vshrl.u32 %v1496, 7
        %v1498 = vsub.s32 %v1495, %v1497
        %v1499 = vrot.slane %v1485, %v1498
        %v1500 = vcombine.low %v1468, %v1483
        %v1501 = vcombine.high %v1468, %v1483
        %v1503 = vunpack.c.l.s4 1934713408
        %v1504 = vunpack.c.0.s8 %v1503
        %v1505 = vlaneseq
        %v1506 = vshrl.u32 %v1505, 7
        %v1507 = vsub.s32 %v1504, %v1506
        %v1508 = vrot.slane %v1500, %v1507
        %v1510 = vunpack.c.l.s4 1934713408
        %v1511 = vunpack.c.0.s8 %v1510
        %v1512 = vlaneseq
        %v1513 = vshrl.u32 %v1512, 7
        %v1514 = vsub.s32 %v1511, %v1513
        %v1515 = vrot.slane %v1501, %v1514
        %v1516 = vcombine.high %v1492, 0.0
        %v1517 = vcombine.high %v1499, 0.0
        %v1518 = vcombine.high %v1508, 0.0
        %v1519 = vcombine.high %v1515, 0.0
        %v1520 = vcombine.low %v1492, %v1499
        %v1522 = vunpack.c.l.s4 1983009808
        %v1523 = vunpack.c.0.s8 %v1522
        %v1524 = vlaneseq
        %v1525 = vshrl.u32 %v1524, 7
        %v1526 = vsub.s32 %v1523, %v1525
        %v1527 = vrot.slane %v1520, %v1526
        %v1528 = vcombine.low %v1516, %v1517
        %v1530 = vunpack.c.l.s4 1983009808
        %v1531 = vunpack.c.0.s8 %v1530
        %v1532 = vlaneseq
        %v1533 = vshrl.u32 %v1532, 7
        %v1534 = vsub.s32 %v1531, %v1533
        %v1535 = vrot.slane %v1528, %v1534
        %v1536 = vcombine.low %v1508, %v1515
        %v1538 = vunpack.c.l.s4 1983009808
        %v1539 = vunpack.c.0.s8 %v1538
        %v1540 = vlaneseq
        %v1541 = vshrl.u32 %v1540, 7
        %v1542 = vsub.s32 %v1539, %v1541
        %v1543 = vrot.slane %v1536, %v1542
        %v1544 = vcombine.low %v1518, %v1519
        %v1546 = vunpack.c.l.s4 1983009808
        %v1547 = vunpack.c.0.s8 %v1546
        %v1548 = vlaneseq
        %v1549 = vshrl.u32 %v1548, 7
        %v1550 = vsub.s32 %v1547, %v1549
        %v1551 = vrot.slane %v1544, %v1550
        %v1552 = vcombine.low %v1527, %v1535
        %v1554 = vunpack.c.l.s4 1934713408
        %v1555 = vunpack.c.0.s8 %v1554
        %v1556 = vlaneseq
        %v1557 = vshrl.u32 %v1556, 7
        %v1558 = vsub.s32 %v1555, %v1557
        %v1559 = vrot.slane %v1552, %v1558
        %v1560 = vcombine.low %v1543, %v1551
        %v1562 = vunpack.c.l.s4 1934713408
        %v1563 = vunpack.c.0.s8 %v1562
        %v1564 = vlaneseq
        %v1565 = vshrl.u32 %v1564, 7
        %v1566 = vsub.s32 %v1563, %v1565
        %v1567 = vrot.slane %v1560, %v1566
        %v1568 = vcombine.low %v1559, %v1567
        %v1569 = vcombine.high %v1559, %v1567
        %1571 = vrot.lane.b32.xlu0 %v1569, 16
        %v1572 = vpop.permute.xlu0 %1571
        %v1574 = vsel %vm1243, %v1568, %v1572
        %v1575 = vpack.c.bf16 %v1574, %v1574
        %v1577 = vlaneseq
        %v1578 = vshrl.u32 %v1577, 7
        %v1579 = vsub.s32 0, %v1578
        %v1580 = vrot.slane %v571, %v1579
        %v1586 = vunpack.c.l.b16 %v567
        %v1587 = vunpack.c.l.b16 %v568
        %v1588 = vunpack.c.l.b16 %v569
        %v1589 = vunpack.c.l.b16 %v570
        %v1590 = vpack.c.b16 %v1587, %v1586
        %v1591 = vpack.c.b16 %v1589, %v1588
        %v1595 = vsel %vm522, %v1575, 0
        %1597 = vmatprep.subr.bf16.mxu0 0
        %1598 = vmatpush1.bf16.msra.mxu0 0
        %1599 = vmatprep.subr.bf16.mxu0 0
        %1600 = vmatpush1.bf16.msra.mxu0 0
        %1601 = vmatprep.subr.bf16.mxu0 0
        %1602 = vmatpush1.bf16.msra.mxu0 0
        %1603 = vmatprep.subr.bf16.mxu0 0
        %1604 = vmatpush1.bf16.msra.mxu0 0
        %1605 = vmatprep.subr.bf16.mxu0 0
        %1606 = vmatpush1.bf16.msra.mxu0 0
        %1607 = vmatprep.subr.bf16.mxu0 0
        %1608 = vmatpush1.bf16.msra.mxu0 0
        %1609 = vmatprep.subr.bf16.mxu0 0
        %1610 = vmatpush1.bf16.msra.mxu0 %v1591
        %1611 = vmatprep.subr.bf16.mxu0 0
        %1612 = vmatpush1.bf16.msra.mxu0 %v1590
        %1613 = vmatprep.subr.bf16.mxu0 0
        %1614 = vmatpush2.bf16.msra.mxu0 0
        %1615 = vmatprep.subr.bf16.mxu0 0
        %1616 = vmatpush2.bf16.msra.mxu0 0
        %1617 = vmatprep.subr.bf16.mxu0 0
        %1618 = vmatpush2.bf16.msra.mxu0 0
        %1619 = vmatprep.subr.bf16.mxu0 0
        %1620 = vmatpush2.bf16.msra.mxu0 0
        %1621 = vmatprep.subr.bf16.mxu0 0
        %1622 = vmatpush2.bf16.msra.mxu0 0
        %1623 = vmatprep.subr.bf16.mxu0 0
        %1624 = vmatpush2.bf16.msra.mxu0 0
        %1625 = vmatprep.subr.bf16.mxu0 0
        %1626 = vmatpush2.bf16.msra.mxu0 0
        %1627 = vmatprep.subr.bf16.mxu0 0
        %1628 = vmatpush2.bf16.msra.mxu0 0
        %1629 = vmatprep.mubr.bf16.mxu0 0
        %1630 = vmatmul.mubr.bf16.gmra.mxu0 %v1595
        %v1631 = vpop.f32.mrf.mxu0
        %v1632 = vadd.f32 %v1580, %v1631
        %v1633 = vpop.f32.mrf.mxu0
        %v1634 = vpop.f32.mrf.mxu0
        %v1635 = vpop.f32.mrf.mxu0
        %1636 = vdwg.mxu0
        %v1637 = vadd.f32 %v497, %v1632
        %v1638 = vsel %vm522, %v1637, 0.0
        %1639 = vadd.xlane.f32.xlu0 %v1638
        %v1640 = vpop.xlane.xlu0 %1639
        %v1641 = vrcp.pop 32.0
        %v1642 = vmul.f32 %v1640, %v1641
        %v1643 = vsub.f32 %v1637, %v1642
        %v1644 = vmul.f32 %v1643, %v1643
        %v1645 = vsel %vm522, %v1644, 0.0
        %1646 = vadd.xlane.f32.xlu0 %v1645
        %v1647 = vpop.xlane.xlu0 %1646
        %v1648 = vmul.f32 %v1647, %v1641
        %v1649 = vadd.f32 %v1648, 1e-05
        %v1650 = vrsqrt.pop %v1649
        %v1651 = vmul.f32 %v1643, %v1650
        %v1653 = vlaneseq
        %v1654 = vshrl.u32 %v1653, 7
        %v1655 = vsub.s32 0, %v1654
        %v1656 = vrot.slane %v572, %v1655
        %v1658 = vmul.f32 %v1651, %v1656
        %v1660 = vlaneseq
        %v1661 = vshrl.u32 %v1660, 7
        %v1662 = vsub.s32 0, %v1661
        %v1663 = vrot.slane %v573, %v1662
        %v1665 = vadd.f32 %v1658, %v1663
        %v1666 = vpack.c.bf16 %v1665, %v1665
        %v1669 = vlaneseq
        %v1670 = vshrl.u32 %v1669, 7
        %v1671 = vsub.s32 0, %v1670
        %v1672 = vrot.slane %v606, %v1671
        %v1673 = vlaneseq
        %v1674 = vshrl.u32 %v1673, 7
        %v1675 = vsub.s32 1, %v1674
        %v1676 = vrot.slane %v606, %v1675
        %v1677 = vlaneseq
        %v1678 = vshrl.u32 %v1677, 7
        %v1679 = vsub.s32 2, %v1678
        %v1680 = vrot.slane %v606, %v1679
        %v1681 = vlaneseq
        %v1682 = vshrl.u32 %v1681, 7
        %v1683 = vsub.s32 3, %v1682
        %v1684 = vrot.slane %v606, %v1683
        %v1685 = vlaneseq
        %v1686 = vshrl.u32 %v1685, 7
        %v1687 = vsub.s32 4, %v1686
        %v1688 = vrot.slane %v606, %v1687
        %v1689 = vlaneseq
        %v1690 = vshrl.u32 %v1689, 7
        %v1691 = vsub.s32 5, %v1690
        %v1692 = vrot.slane %v606, %v1691
        %v1693 = vlaneseq
        %v1694 = vshrl.u32 %v1693, 7
        %v1695 = vsub.s32 6, %v1694
        %v1696 = vrot.slane %v606, %v1695
        %v1697 = vlaneseq
        %v1698 = vshrl.u32 %v1697, 7
        %v1699 = vsub.s32 7, %v1698
        %v1700 = vrot.slane %v606, %v1699
        %v1701 = vlaneseq
        %v1702 = vshrl.u32 %v1701, 7
        %v1703 = vsub.s32 0, %v1702
        %v1704 = vrot.slane %v607, %v1703
        %v1705 = vlaneseq
        %v1706 = vshrl.u32 %v1705, 7
        %v1707 = vsub.s32 1, %v1706
        %v1708 = vrot.slane %v607, %v1707
        %v1709 = vlaneseq
        %v1710 = vshrl.u32 %v1709, 7
        %v1711 = vsub.s32 2, %v1710
        %v1712 = vrot.slane %v607, %v1711
        %v1713 = vlaneseq
        %v1714 = vshrl.u32 %v1713, 7
        %v1715 = vsub.s32 3, %v1714
        %v1716 = vrot.slane %v607, %v1715
        %v1717 = vlaneseq
        %v1718 = vshrl.u32 %v1717, 7
        %v1719 = vsub.s32 4, %v1718
        %v1720 = vrot.slane %v607, %v1719
        %v1721 = vlaneseq
        %v1722 = vshrl.u32 %v1721, 7
        %v1723 = vsub.s32 5, %v1722
        %v1724 = vrot.slane %v607, %v1723
        %v1725 = vlaneseq
        %v1726 = vshrl.u32 %v1725, 7
        %v1727 = vsub.s32 6, %v1726
        %v1728 = vrot.slane %v607, %v1727
        %v1729 = vlaneseq
        %v1730 = vshrl.u32 %v1729, 7
        %v1731 = vsub.s32 7, %v1730
        %v1732 = vrot.slane %v607, %v1731
        %v1781 = vunpack.c.l.b16 %v574
        %v1782 = vunpack.c.h.b16 %v574
        %v1783 = vunpack.c.l.b16 %v575
        %v1784 = vunpack.c.h.b16 %v575
        %v1785 = vunpack.c.l.b16 %v576
        %v1786 = vunpack.c.h.b16 %v576
        %v1787 = vunpack.c.l.b16 %v577
        %v1788 = vunpack.c.h.b16 %v577
        %v1789 = vunpack.c.l.b16 %v578
        %v1790 = vunpack.c.h.b16 %v578
        %v1791 = vunpack.c.l.b16 %v579
        %v1792 = vunpack.c.h.b16 %v579
        %v1793 = vunpack.c.l.b16 %v580
        %v1794 = vunpack.c.h.b16 %v580
        %v1795 = vunpack.c.l.b16 %v581
        %v1796 = vunpack.c.h.b16 %v581
        %v1797 = vunpack.c.l.b16 %v582
        %v1798 = vunpack.c.h.b16 %v582
        %v1799 = vunpack.c.l.b16 %v583
        %v1800 = vunpack.c.h.b16 %v583
        %v1801 = vunpack.c.l.b16 %v584
        %v1802 = vunpack.c.h.b16 %v584
        %v1803 = vunpack.c.l.b16 %v585
        %v1804 = vunpack.c.h.b16 %v585
        %v1805 = vunpack.c.l.b16 %v586
        %v1806 = vunpack.c.h.b16 %v586
        %v1807 = vunpack.c.l.b16 %v587
        %v1808 = vunpack.c.h.b16 %v587
        %v1809 = vunpack.c.l.b16 %v588
        %v1810 = vunpack.c.h.b16 %v588
        %v1811 = vunpack.c.l.b16 %v589
        %v1812 = vunpack.c.h.b16 %v589
        %v1813 = vunpack.c.l.b16 %v590
        %v1814 = vunpack.c.h.b16 %v590
        %v1815 = vunpack.c.l.b16 %v591
        %v1816 = vunpack.c.h.b16 %v591
        %v1817 = vunpack.c.l.b16 %v592
        %v1818 = vunpack.c.h.b16 %v592
        %v1819 = vunpack.c.l.b16 %v593
        %v1820 = vunpack.c.h.b16 %v593
        %v1821 = vunpack.c.l.b16 %v594
        %v1822 = vunpack.c.h.b16 %v594
        %v1823 = vunpack.c.l.b16 %v595
        %v1824 = vunpack.c.h.b16 %v595
        %v1825 = vunpack.c.l.b16 %v596
        %v1826 = vunpack.c.h.b16 %v596
        %v1827 = vunpack.c.l.b16 %v597
        %v1828 = vunpack.c.h.b16 %v597
        %v1829 = vunpack.c.l.b16 %v598
        %v1830 = vunpack.c.h.b16 %v598
        %v1831 = vunpack.c.l.b16 %v599
        %v1832 = vunpack.c.h.b16 %v599
        %v1833 = vunpack.c.l.b16 %v600
        %v1834 = vunpack.c.h.b16 %v600
        %v1835 = vunpack.c.l.b16 %v601
        %v1836 = vunpack.c.h.b16 %v601
        %v1837 = vunpack.c.l.b16 %v602
        %v1838 = vunpack.c.h.b16 %v602
        %v1839 = vunpack.c.l.b16 %v603
        %v1840 = vunpack.c.h.b16 %v603
        %v1841 = vunpack.c.l.b16 %v604
        %v1842 = vunpack.c.h.b16 %v604
        %v1843 = vunpack.c.l.b16 %v605
        %v1844 = vunpack.c.h.b16 %v605
        %v1845 = vpack.c.b16 %v1797, %v1781
        %v1846 = vpack.c.b16 %v1798, %v1782
        %v1847 = vpack.c.b16 %v1799, %v1783
        %v1848 = vpack.c.b16 %v1800, %v1784
        %v1849 = vpack.c.b16 %v1801, %v1785
        %v1850 = vpack.c.b16 %v1802, %v1786
        %v1851 = vpack.c.b16 %v1803, %v1787
        %v1852 = vpack.c.b16 %v1804, %v1788
        %v1853 = vpack.c.b16 %v1805, %v1789
        %v1854 = vpack.c.b16 %v1806, %v1790
        %v1855 = vpack.c.b16 %v1807, %v1791
        %v1856 = vpack.c.b16 %v1808, %v1792
        %v1857 = vpack.c.b16 %v1809, %v1793
        %v1858 = vpack.c.b16 %v1810, %v1794
        %v1859 = vpack.c.b16 %v1811, %v1795
        %v1860 = vpack.c.b16 %v1812, %v1796
        %v1861 = vpack.c.b16 %v1829, %v1813
        %v1862 = vpack.c.b16 %v1830, %v1814
        %v1863 = vpack.c.b16 %v1831, %v1815
        %v1864 = vpack.c.b16 %v1832, %v1816
        %v1865 = vpack.c.b16 %v1833, %v1817
        %v1866 = vpack.c.b16 %v1834, %v1818
        %v1867 = vpack.c.b16 %v1835, %v1819
        %v1868 = vpack.c.b16 %v1836, %v1820
        %v1869 = vpack.c.b16 %v1837, %v1821
        %v1870 = vpack.c.b16 %v1838, %v1822
        %v1871 = vpack.c.b16 %v1839, %v1823
        %v1872 = vpack.c.b16 %v1840, %v1824
        %v1873 = vpack.c.b16 %v1841, %v1825
        %v1874 = vpack.c.b16 %v1842, %v1826
        %v1875 = vpack.c.b16 %v1843, %v1827
        %v1876 = vpack.c.b16 %v1844, %v1828
        %v1910 = vsel %vm522, %v1666, 0
        %1912 = vmatprep.subr.bf16.mxu0 0
        %1913 = vmatpush1.bf16.msra.mxu0 0
        %1914 = vmatprep.subr.bf16.mxu0 0
        %1915 = vmatpush1.bf16.msra.mxu0 0
        %1916 = vmatprep.subr.bf16.mxu0 0
        %1917 = vmatpush1.bf16.msra.mxu0 0
        %1918 = vmatprep.subr.bf16.mxu0 0
        %1919 = vmatpush1.bf16.msra.mxu0 0
        %1920 = vmatprep.subr.bf16.mxu0 0
        %1921 = vmatpush1.bf16.msra.mxu0 0
        %1922 = vmatprep.subr.bf16.mxu0 0
        %1923 = vmatpush1.bf16.msra.mxu0 0
        %1924 = vmatprep.subr.bf16.mxu0 %v1862
        %1925 = vmatpush1.bf16.msra.mxu0 %v1861
        %1926 = vmatprep.subr.bf16.mxu0 %v1846
        %1927 = vmatpush1.bf16.msra.mxu0 %v1845
        %1928 = vmatprep.subr.bf16.mxu0 0
        %1929 = vmatpush2.bf16.msra.mxu0 0
        %1930 = vmatprep.subr.bf16.mxu0 0
        %1931 = vmatpush2.bf16.msra.mxu0 0
        %1932 = vmatprep.subr.bf16.mxu0 0
        %1933 = vmatpush2.bf16.msra.mxu0 0
        %1934 = vmatprep.subr.bf16.mxu0 0
        %1935 = vmatpush2.bf16.msra.mxu0 0
        %1936 = vmatprep.subr.bf16.mxu0 0
        %1937 = vmatpush2.bf16.msra.mxu0 0
        %1938 = vmatprep.subr.bf16.mxu0 0
        %1939 = vmatpush2.bf16.msra.mxu0 0
        %1940 = vmatprep.subr.bf16.mxu0 0
        %1941 = vmatpush2.bf16.msra.mxu0 0
        %1942 = vmatprep.subr.bf16.mxu0 0
        %1943 = vmatpush2.bf16.msra.mxu0 0
        %1944 = vmatprep.mubr.bf16.mxu0 0
        %1945 = vmatmul.mubr.bf16.gmra.mxu0 %v1910
        %v1946 = vpop.f32.mrf.mxu0
        %v1947 = vadd.f32 %v1672, %v1946
        %v1948 = vpop.f32.mrf.mxu0
        %v1949 = vadd.f32 %v1676, %v1948
        %v1950 = vpop.f32.mrf.mxu0
        %v1951 = vpop.f32.mrf.mxu0
        %1952 = vdwg.mxu0
        %1953 = vmatprep.subr.bf16.mxu0 0
        %1954 = vmatpush1.bf16.msra.mxu0 0
        %1955 = vmatprep.subr.bf16.mxu0 0
        %1956 = vmatpush1.bf16.msra.mxu0 0
        %1957 = vmatprep.subr.bf16.mxu0 0
        %1958 = vmatpush1.bf16.msra.mxu0 0
        %1959 = vmatprep.subr.bf16.mxu0 0
        %1960 = vmatpush1.bf16.msra.mxu0 0
        %1961 = vmatprep.subr.bf16.mxu0 0
        %1962 = vmatpush1.bf16.msra.mxu0 0
        %1963 = vmatprep.subr.bf16.mxu0 0
        %1964 = vmatpush1.bf16.msra.mxu0 0
        %1965 = vmatprep.subr.bf16.mxu0 %v1864
        %1966 = vmatpush1.bf16.msra.mxu0 %v1863
        %1967 = vmatprep.subr.bf16.mxu0 %v1848
        %1968 = vmatpush1.bf16.msra.mxu0 %v1847
        %1969 = vmatprep.subr.bf16.mxu0 0
        %1970 = vmatpush2.bf16.msra.mxu0 0
        %1971 = vmatprep.subr.bf16.mxu0 0
        %1972 = vmatpush2.bf16.msra.mxu0 0
        %1973 = vmatprep.subr.bf16.mxu0 0
        %1974 = vmatpush2.bf16.msra.mxu0 0
        %1975 = vmatprep.subr.bf16.mxu0 0
        %1976 = vmatpush2.bf16.msra.mxu0 0
        %1977 = vmatprep.subr.bf16.mxu0 0
        %1978 = vmatpush2.bf16.msra.mxu0 0
        %1979 = vmatprep.subr.bf16.mxu0 0
        %1980 = vmatpush2.bf16.msra.mxu0 0
        %1981 = vmatprep.subr.bf16.mxu0 0
        %1982 = vmatpush2.bf16.msra.mxu0 0
        %1983 = vmatprep.subr.bf16.mxu0 0
        %1984 = vmatpush2.bf16.msra.mxu0 0
        %1985 = vmatprep.mubr.bf16.mxu0 0
        %1986 = vmatmul.mubr.bf16.gmra.mxu0 %v1910
        %v1987 = vpop.f32.mrf.mxu0
        %v1988 = vadd.f32 %v1680, %v1987
        %v1989 = vpop.f32.mrf.mxu0
        %v1990 = vadd.f32 %v1684, %v1989
        %v1991 = vpop.f32.mrf.mxu0
        %v1992 = vpop.f32.mrf.mxu0
        %1993 = vdwg.mxu0
        %1994 = vmatprep.subr.bf16.mxu0 0
        %1995 = vmatpush1.bf16.msra.mxu0 0
        %1996 = vmatprep.subr.bf16.mxu0 0
        %1997 = vmatpush1.bf16.msra.mxu0 0
        %1998 = vmatprep.subr.bf16.mxu0 0
        %1999 = vmatpush1.bf16.msra.mxu0 0
        %2000 = vmatprep.subr.bf16.mxu0 0
        %2001 = vmatpush1.bf16.msra.mxu0 0
        %2002 = vmatprep.subr.bf16.mxu0 0
        %2003 = vmatpush1.bf16.msra.mxu0 0
        %2004 = vmatprep.subr.bf16.mxu0 0
        %2005 = vmatpush1.bf16.msra.mxu0 0
        %2006 = vmatprep.subr.bf16.mxu0 %v1866
        %2007 = vmatpush1.bf16.msra.mxu0 %v1865
        %2008 = vmatprep.subr.bf16.mxu0 %v1850
        %2009 = vmatpush1.bf16.msra.mxu0 %v1849
        %2010 = vmatprep.subr.bf16.mxu0 0
        %2011 = vmatpush2.bf16.msra.mxu0 0
        %2012 = vmatprep.subr.bf16.mxu0 0
        %2013 = vmatpush2.bf16.msra.mxu0 0
        %2014 = vmatprep.subr.bf16.mxu0 0
        %2015 = vmatpush2.bf16.msra.mxu0 0
        %2016 = vmatprep.subr.bf16.mxu0 0
        %2017 = vmatpush2.bf16.msra.mxu0 0
        %2018 = vmatprep.subr.bf16.mxu0 0
        %2019 = vmatpush2.bf16.msra.mxu0 0
        %2020 = vmatprep.subr.bf16.mxu0 0
        %2021 = vmatpush2.bf16.msra.mxu0 0
        %2022 = vmatprep.subr.bf16.mxu0 0
        %2023 = vmatpush2.bf16.msra.mxu0 0
        %2024 = vmatprep.subr.bf16.mxu0 0
        %2025 = vmatpush2.bf16.msra.mxu0 0
        %2026 = vmatprep.mubr.bf16.mxu0 0
        %2027 = vmatmul.mubr.bf16.gmra.mxu0 %v1910
        %v2028 = vpop.f32.mrf.mxu0
        %v2029 = vadd.f32 %v1688, %v2028
        %v2030 = vpop.f32.mrf.mxu0
        %v2031 = vadd.f32 %v1692, %v2030
        %v2032 = vpop.f32.mrf.mxu0
        %v2033 = vpop.f32.mrf.mxu0
        %2034 = vdwg.mxu0
        %2035 = vmatprep.subr.bf16.mxu0 0
        %2036 = vmatpush1.bf16.msra.mxu0 0
        %2037 = vmatprep.subr.bf16.mxu0 0
        %2038 = vmatpush1.bf16.msra.mxu0 0
        %2039 = vmatprep.subr.bf16.mxu0 0
        %2040 = vmatpush1.bf16.msra.mxu0 0
        %2041 = vmatprep.subr.bf16.mxu0 0
        %2042 = vmatpush1.bf16.msra.mxu0 0
        %2043 = vmatprep.subr.bf16.mxu0 0
        %2044 = vmatpush1.bf16.msra.mxu0 0
        %2045 = vmatprep.subr.bf16.mxu0 0
        %2046 = vmatpush1.bf16.msra.mxu0 0
        %2047 = vmatprep.subr.bf16.mxu0 %v1868
        %2048 = vmatpush1.bf16.msra.mxu0 %v1867
        %2049 = vmatprep.subr.bf16.mxu0 %v1852
        %2050 = vmatpush1.bf16.msra.mxu0 %v1851
        %2051 = vmatprep.subr.bf16.mxu0 0
        %2052 = vmatpush2.bf16.msra.mxu0 0
        %2053 = vmatprep.subr.bf16.mxu0 0
        %2054 = vmatpush2.bf16.msra.mxu0 0
        %2055 = vmatprep.subr.bf16.mxu0 0
        %2056 = vmatpush2.bf16.msra.mxu0 0
        %2057 = vmatprep.subr.bf16.mxu0 0
        %2058 = vmatpush2.bf16.msra.mxu0 0
        %2059 = vmatprep.subr.bf16.mxu0 0
        %2060 = vmatpush2.bf16.msra.mxu0 0
        %2061 = vmatprep.subr.bf16.mxu0 0
        %2062 = vmatpush2.bf16.msra.mxu0 0
        %2063 = vmatprep.subr.bf16.mxu0 0
        %2064 = vmatpush2.bf16.msra.mxu0 0
        %2065 = vmatprep.subr.bf16.mxu0 0
        %2066 = vmatpush2.bf16.msra.mxu0 0
        %2067 = vmatprep.mubr.bf16.mxu0 0
        %2068 = vmatmul.mubr.bf16.gmra.mxu0 %v1910
        %v2069 = vpop.f32.mrf.mxu0
        %v2070 = vadd.f32 %v1696, %v2069
        %v2071 = vpop.f32.mrf.mxu0
        %v2072 = vadd.f32 %v1700, %v2071
        %v2073 = vpop.f32.mrf.mxu0
        %v2074 = vpop.f32.mrf.mxu0
        %2075 = vdwg.mxu0
        %2076 = vmatprep.subr.bf16.mxu0 0
        %2077 = vmatpush1.bf16.msra.mxu0 0
        %2078 = vmatprep.subr.bf16.mxu0 0
        %2079 = vmatpush1.bf16.msra.mxu0 0
        %2080 = vmatprep.subr.bf16.mxu0 0
        %2081 = vmatpush1.bf16.msra.mxu0 0
        %2082 = vmatprep.subr.bf16.mxu0 0
        %2083 = vmatpush1.bf16.msra.mxu0 0
        %2084 = vmatprep.subr.bf16.mxu0 0
        %2085 = vmatpush1.bf16.msra.mxu0 0
        %2086 = vmatprep.subr.bf16.mxu0 0
        %2087 = vmatpush1.bf16.msra.mxu0 0
        %2088 = vmatprep.subr.bf16.mxu0 %v1870
        %2089 = vmatpush1.bf16.msra.mxu0 %v1869
        %2090 = vmatprep.subr.bf16.mxu0 %v1854
        %2091 = vmatpush1.bf16.msra.mxu0 %v1853
        %2092 = vmatprep.subr.bf16.mxu0 0
        %2093 = vmatpush2.bf16.msra.mxu0 0
        %2094 = vmatprep.subr.bf16.mxu0 0
        %2095 = vmatpush2.bf16.msra.mxu0 0
        %2096 = vmatprep.subr.bf16.mxu0 0
        %2097 = vmatpush2.bf16.msra.mxu0 0
        %2098 = vmatprep.subr.bf16.mxu0 0
        %2099 = vmatpush2.bf16.msra.mxu0 0
        %2100 = vmatprep.subr.bf16.mxu0 0
        %2101 = vmatpush2.bf16.msra.mxu0 0
        %2102 = vmatprep.subr.bf16.mxu0 0
        %2103 = vmatpush2.bf16.msra.mxu0 0
        %2104 = vmatprep.subr.bf16.mxu0 0
        %2105 = vmatpush2.bf16.msra.mxu0 0
        %2106 = vmatprep.subr.bf16.mxu0 0
        %2107 = vmatpush2.bf16.msra.mxu0 0
        %2108 = vmatprep.mubr.bf16.mxu0 0
        %2109 = vmatmul.mubr.bf16.gmra.mxu0 %v1910
        %v2110 = vpop.f32.mrf.mxu0
        %v2111 = vadd.f32 %v1704, %v2110
        %v2112 = vpop.f32.mrf.mxu0
        %v2113 = vadd.f32 %v1708, %v2112
        %v2114 = vpop.f32.mrf.mxu0
        %v2115 = vpop.f32.mrf.mxu0
        %2116 = vdwg.mxu0
        %2117 = vmatprep.subr.bf16.mxu0 0
        %2118 = vmatpush1.bf16.msra.mxu0 0
        %2119 = vmatprep.subr.bf16.mxu0 0
        %2120 = vmatpush1.bf16.msra.mxu0 0
        %2121 = vmatprep.subr.bf16.mxu0 0
        %2122 = vmatpush1.bf16.msra.mxu0 0
        %2123 = vmatprep.subr.bf16.mxu0 0
        %2124 = vmatpush1.bf16.msra.mxu0 0
        %2125 = vmatprep.subr.bf16.mxu0 0
        %2126 = vmatpush1.bf16.msra.mxu0 0
        %2127 = vmatprep.subr.bf16.mxu0 0
        %2128 = vmatpush1.bf16.msra.mxu0 0
        %2129 = vmatprep.subr.bf16.mxu0 %v1872
        %2130 = vmatpush1.bf16.msra.mxu0 %v1871
        %2131 = vmatprep.subr.bf16.mxu0 %v1856
        %2132 = vmatpush1.bf16.msra.mxu0 %v1855
        %2133 = vmatprep.subr.bf16.mxu0 0
        %2134 = vmatpush2.bf16.msra.mxu0 0
        %2135 = vmatprep.subr.bf16.mxu0 0
        %2136 = vmatpush2.bf16.msra.mxu0 0
        %2137 = vmatprep.subr.bf16.mxu0 0
        %2138 = vmatpush2.bf16.msra.mxu0 0
        %2139 = vmatprep.subr.bf16.mxu0 0
        %2140 = vmatpush2.bf16.msra.mxu0 0
        %2141 = vmatprep.subr.bf16.mxu0 0
        %2142 = vmatpush2.bf16.msra.mxu0 0
        %2143 = vmatprep.subr.bf16.mxu0 0
        %2144 = vmatpush2.bf16.msra.mxu0 0
        %2145 = vmatprep.subr.bf16.mxu0 0
        %2146 = vmatpush2.bf16.msra.mxu0 0
        %2147 = vmatprep.subr.bf16.mxu0 0
        %2148 = vmatpush2.bf16.msra.mxu0 0
        %2149 = vmatprep.mubr.bf16.mxu0 0
        %2150 = vmatmul.mubr.bf16.gmra.mxu0 %v1910
        %v2151 = vpop.f32.mrf.mxu0
        %v2152 = vadd.f32 %v1712, %v2151
        %v2153 = vpop.f32.mrf.mxu0
        %v2154 = vadd.f32 %v1716, %v2153
        %v2155 = vpop.f32.mrf.mxu0
        %v2156 = vpop.f32.mrf.mxu0
        %2157 = vdwg.mxu0
        %2158 = vmatprep.subr.bf16.mxu0 0
        %2159 = vmatpush1.bf16.msra.mxu0 0
        %2160 = vmatprep.subr.bf16.mxu0 0
        %2161 = vmatpush1.bf16.msra.mxu0 0
        %2162 = vmatprep.subr.bf16.mxu0 0
        %2163 = vmatpush1.bf16.msra.mxu0 0
        %2164 = vmatprep.subr.bf16.mxu0 0
        %2165 = vmatpush1.bf16.msra.mxu0 0
        %2166 = vmatprep.subr.bf16.mxu0 0
        %2167 = vmatpush1.bf16.msra.mxu0 0
        %2168 = vmatprep.subr.bf16.mxu0 0
        %2169 = vmatpush1.bf16.msra.mxu0 0
        %2170 = vmatprep.subr.bf16.mxu0 %v1874
        %2171 = vmatpush1.bf16.msra.mxu0 %v1873
        %2172 = vmatprep.subr.bf16.mxu0 %v1858
        %2173 = vmatpush1.bf16.msra.mxu0 %v1857
        %2174 = vmatprep.subr.bf16.mxu0 0
        %2175 = vmatpush2.bf16.msra.mxu0 0
        %2176 = vmatprep.subr.bf16.mxu0 0
        %2177 = vmatpush2.bf16.msra.mxu0 0
        %2178 = vmatprep.subr.bf16.mxu0 0
        %2179 = vmatpush2.bf16.msra.mxu0 0
        %2180 = vmatprep.subr.bf16.mxu0 0
        %2181 = vmatpush2.bf16.msra.mxu0 0
        %2182 = vmatprep.subr.bf16.mxu0 0
        %2183 = vmatpush2.bf16.msra.mxu0 0
        %2184 = vmatprep.subr.bf16.mxu0 0
        %2185 = vmatpush2.bf16.msra.mxu0 0
        %2186 = vmatprep.subr.bf16.mxu0 0
        %2187 = vmatpush2.bf16.msra.mxu0 0
        %2188 = vmatprep.subr.bf16.mxu0 0
        %2189 = vmatpush2.bf16.msra.mxu0 0
        %2190 = vmatprep.mubr.bf16.mxu0 0
        %2191 = vmatmul.mubr.bf16.gmra.mxu0 %v1910
        %v2192 = vpop.f32.mrf.mxu0
        %v2193 = vadd.f32 %v1720, %v2192
        %v2194 = vpop.f32.mrf.mxu0
        %v2195 = vadd.f32 %v1724, %v2194
        %v2196 = vpop.f32.mrf.mxu0
        %v2197 = vpop.f32.mrf.mxu0
        %2198 = vdwg.mxu0
        %2199 = vmatprep.subr.bf16.mxu0 0
        %2200 = vmatpush1.bf16.msra.mxu0 0
        %2201 = vmatprep.subr.bf16.mxu0 0
        %2202 = vmatpush1.bf16.msra.mxu0 0
        %2203 = vmatprep.subr.bf16.mxu0 0
        %2204 = vmatpush1.bf16.msra.mxu0 0
        %2205 = vmatprep.subr.bf16.mxu0 0
        %2206 = vmatpush1.bf16.msra.mxu0 0
        %2207 = vmatprep.subr.bf16.mxu0 0
        %2208 = vmatpush1.bf16.msra.mxu0 0
        %2209 = vmatprep.subr.bf16.mxu0 0
        %2210 = vmatpush1.bf16.msra.mxu0 0
        %2211 = vmatprep.subr.bf16.mxu0 %v1876
        %2212 = vmatpush1.bf16.msra.mxu0 %v1875
        %2213 = vmatprep.subr.bf16.mxu0 %v1860
        %2214 = vmatpush1.bf16.msra.mxu0 %v1859
        %2215 = vmatprep.subr.bf16.mxu0 0
        %2216 = vmatpush2.bf16.msra.mxu0 0
        %2217 = vmatprep.subr.bf16.mxu0 0
        %2218 = vmatpush2.bf16.msra.mxu0 0
        %2219 = vmatprep.subr.bf16.mxu0 0
        %2220 = vmatpush2.bf16.msra.mxu0 0
        %2221 = vmatprep.subr.bf16.mxu0 0
        %2222 = vmatpush2.bf16.msra.mxu0 0
        %2223 = vmatprep.subr.bf16.mxu0 0
        %2224 = vmatpush2.bf16.msra.mxu0 0
        %2225 = vmatprep.subr.bf16.mxu0 0
        %2226 = vmatpush2.bf16.msra.mxu0 0
        %2227 = vmatprep.subr.bf16.mxu0 0
        %2228 = vmatpush2.bf16.msra.mxu0 0
        %2229 = vmatprep.subr.bf16.mxu0 0
        %2230 = vmatpush2.bf16.msra.mxu0 0
        %2231 = vmatprep.mubr.bf16.mxu0 0
        %2232 = vmatmul.mubr.bf16.gmra.mxu0 %v1910
        %v2233 = vpop.f32.mrf.mxu0
        %v2234 = vadd.f32 %v1728, %v2233
        %v2235 = vpop.f32.mrf.mxu0
        %v2236 = vadd.f32 %v1732, %v2235
        %v2237 = vpop.f32.mrf.mxu0
        %v2238 = vpop.f32.mrf.mxu0
        %2239 = vdwg.mxu0
        %v2240 = vmul.f32 %v1947, 0.5
        %v2241 = vmul.f32 %v1949, 0.5
        %v2242 = vmul.f32 %v1988, 0.5
        %v2243 = vmul.f32 %v1990, 0.5
        %v2244 = vmul.f32 %v2029, 0.5
        %v2245 = vmul.f32 %v2031, 0.5
        %v2246 = vmul.f32 %v2070, 0.5
        %v2247 = vmul.f32 %v2072, 0.5
        %v2248 = vmul.f32 %v2111, 0.5
        %v2249 = vmul.f32 %v2113, 0.5
        %v2250 = vmul.f32 %v2152, 0.5
        %v2251 = vmul.f32 %v2154, 0.5
        %v2252 = vmul.f32 %v2193, 0.5
        %v2253 = vmul.f32 %v2195, 0.5
        %v2254 = vmul.f32 %v2234, 0.5
        %v2255 = vmul.f32 %v2236, 0.5
        %v2256 = vmul.f32 %v1947, 0.70710677
        %v2257 = vmul.f32 %v1949, 0.70710677
        %v2258 = vmul.f32 %v1988, 0.70710677
        %v2259 = vmul.f32 %v1990, 0.70710677
        %v2260 = vmul.f32 %v2029, 0.70710677
        %v2261 = vmul.f32 %v2031, 0.70710677
        %v2262 = vmul.f32 %v2070, 0.70710677
        %v2263 = vmul.f32 %v2072, 0.70710677
        %v2264 = vmul.f32 %v2111, 0.70710677
        %v2265 = vmul.f32 %v2113, 0.70710677
        %v2266 = vmul.f32 %v2152, 0.70710677
        %v2267 = vmul.f32 %v2154, 0.70710677
        %v2268 = vmul.f32 %v2193, 0.70710677
        %v2269 = vmul.f32 %v2195, 0.70710677
        %v2270 = vmul.f32 %v2234, 0.70710677
        %v2271 = vmul.f32 %v2236, 0.70710677
        %v2272 = vand.u32 2147483647, %v2256
        %v2273 = vand.u32 2147483647, %v2257
        %v2274 = vand.u32 2147483647, %v2258
        %v2275 = vand.u32 2147483647, %v2259
        %v2276 = vand.u32 2147483647, %v2260
        %v2277 = vand.u32 2147483647, %v2261
        %v2278 = vand.u32 2147483647, %v2262
        %v2279 = vand.u32 2147483647, %v2263
        %v2280 = vand.u32 2147483647, %v2264
        %v2281 = vand.u32 2147483647, %v2265
        %v2282 = vand.u32 2147483647, %v2266
        %v2283 = vand.u32 2147483647, %v2267
        %v2284 = vand.u32 2147483647, %v2268
        %v2285 = vand.u32 2147483647, %v2269
        %v2286 = vand.u32 2147483647, %v2270
        %v2287 = vand.u32 2147483647, %v2271
        %v2288 = vmul.f32 %v2272, 0.3275911
        %v2289 = vmul.f32 %v2273, 0.3275911
        %v2290 = vmul.f32 %v2274, 0.3275911
        %v2291 = vmul.f32 %v2275, 0.3275911
        %v2292 = vmul.f32 %v2276, 0.3275911
        %v2293 = vmul.f32 %v2277, 0.3275911
        %v2294 = vmul.f32 %v2278, 0.3275911
        %v2295 = vmul.f32 %v2279, 0.3275911
        %v2296 = vmul.f32 %v2280, 0.3275911
        %v2297 = vmul.f32 %v2281, 0.3275911
        %v2298 = vmul.f32 %v2282, 0.3275911
        %v2299 = vmul.f32 %v2283, 0.3275911
        %v2300 = vmul.f32 %v2284, 0.3275911
        %v2301 = vmul.f32 %v2285, 0.3275911
        %v2302 = vmul.f32 %v2286, 0.3275911
        %v2303 = vmul.f32 %v2287, 0.3275911
        %v2304 = vadd.f32 %v2288, 1.0
        %v2305 = vadd.f32 %v2289, 1.0
        %v2306 = vadd.f32 %v2290, 1.0
        %v2307 = vadd.f32 %v2291, 1.0
        %v2308 = vadd.f32 %v2292, 1.0
        %v2309 = vadd.f32 %v2293, 1.0
        %v2310 = vadd.f32 %v2294, 1.0
        %v2311 = vadd.f32 %v2295, 1.0
        %v2312 = vadd.f32 %v2296, 1.0
        %v2313 = vadd.f32 %v2297, 1.0
        %v2314 = vadd.f32 %v2298, 1.0
        %v2315 = vadd.f32 %v2299, 1.0
        %v2316 = vadd.f32 %v2300, 1.0
        %v2317 = vadd.f32 %v2301, 1.0
        %v2318 = vadd.f32 %v2302, 1.0
        %v2319 = vadd.f32 %v2303, 1.0
        %v2320 = vrcp.pop %v2304
        %v2321 = vmul.f32 1.0, %v2320
        %v2322 = vrcp.pop %v2305
        %v2323 = vmul.f32 1.0, %v2322
        %v2324 = vrcp.pop %v2306
        %v2325 = vmul.f32 1.0, %v2324
        %v2326 = vrcp.pop %v2307
        %v2327 = vmul.f32 1.0, %v2326
        %v2328 = vrcp.pop %v2308
        %v2329 = vmul.f32 1.0, %v2328
        %v2330 = vrcp.pop %v2309
        %v2331 = vmul.f32 1.0, %v2330
        %v2332 = vrcp.pop %v2310
        %v2333 = vmul.f32 1.0, %v2332
        %v2334 = vrcp.pop %v2311
        %v2335 = vmul.f32 1.0, %v2334
        %v2336 = vrcp.pop %v2312
        %v2337 = vmul.f32 1.0, %v2336
        %v2338 = vrcp.pop %v2313
        %v2339 = vmul.f32 1.0, %v2338
        %v2340 = vrcp.pop %v2314
        %v2341 = vmul.f32 1.0, %v2340
        %v2342 = vrcp.pop %v2315
        %v2343 = vmul.f32 1.0, %v2342
        %v2344 = vrcp.pop %v2316
        %v2345 = vmul.f32 1.0, %v2344
        %v2346 = vrcp.pop %v2317
        %v2347 = vmul.f32 1.0, %v2346
        %v2348 = vrcp.pop %v2318
        %v2349 = vmul.f32 1.0, %v2348
        %v2350 = vrcp.pop %v2319
        %v2351 = vmul.f32 1.0, %v2350
        %v2352 = vmul.f32 %v2321, 1.0614054
        %v2353 = vmul.f32 %v2323, 1.0614054
        %v2354 = vmul.f32 %v2325, 1.0614054
        %v2355 = vmul.f32 %v2327, 1.0614054
        %v2356 = vmul.f32 %v2329, 1.0614054
        %v2357 = vmul.f32 %v2331, 1.0614054
        %v2358 = vmul.f32 %v2333, 1.0614054
        %v2359 = vmul.f32 %v2335, 1.0614054
        %v2360 = vmul.f32 %v2337, 1.0614054
        %v2361 = vmul.f32 %v2339, 1.0614054
        %v2362 = vmul.f32 %v2341, 1.0614054
        %v2363 = vmul.f32 %v2343, 1.0614054
        %v2364 = vmul.f32 %v2345, 1.0614054
        %v2365 = vmul.f32 %v2347, 1.0614054
        %v2366 = vmul.f32 %v2349, 1.0614054
        %v2367 = vmul.f32 %v2351, 1.0614054
        %v2368 = vadd.f32 %v2352, -1.4531521
        %v2369 = vadd.f32 %v2353, -1.4531521
        %v2370 = vadd.f32 %v2354, -1.4531521
        %v2371 = vadd.f32 %v2355, -1.4531521
        %v2372 = vadd.f32 %v2356, -1.4531521
        %v2373 = vadd.f32 %v2357, -1.4531521
        %v2374 = vadd.f32 %v2358, -1.4531521
        %v2375 = vadd.f32 %v2359, -1.4531521
        %v2376 = vadd.f32 %v2360, -1.4531521
        %v2377 = vadd.f32 %v2361, -1.4531521
        %v2378 = vadd.f32 %v2362, -1.4531521
        %v2379 = vadd.f32 %v2363, -1.4531521
        %v2380 = vadd.f32 %v2364, -1.4531521
        %v2381 = vadd.f32 %v2365, -1.4531521
        %v2382 = vadd.f32 %v2366, -1.4531521
        %v2383 = vadd.f32 %v2367, -1.4531521
        %v2384 = vmul.f32 %v2368, %v2321
        %v2385 = vmul.f32 %v2369, %v2323
        %v2386 = vmul.f32 %v2370, %v2325
        %v2387 = vmul.f32 %v2371, %v2327
        %v2388 = vmul.f32 %v2372, %v2329
        %v2389 = vmul.f32 %v2373, %v2331
        %v2390 = vmul.f32 %v2374, %v2333
        %v2391 = vmul.f32 %v2375, %v2335
        %v2392 = vmul.f32 %v2376, %v2337
        %v2393 = vmul.f32 %v2377, %v2339
        %v2394 = vmul.f32 %v2378, %v2341
        %v2395 = vmul.f32 %v2379, %v2343
        %v2396 = vmul.f32 %v2380, %v2345
        %v2397 = vmul.f32 %v2381, %v2347
        %v2398 = vmul.f32 %v2382, %v2349
        %v2399 = vmul.f32 %v2383, %v2351
        %v2400 = vadd.f32 %v2384, 1.4214138
        %v2401 = vadd.f32 %v2385, 1.4214138
        %v2402 = vadd.f32 %v2386, 1.4214138
        %v2403 = vadd.f32 %v2387, 1.4214138
        %v2404 = vadd.f32 %v2388, 1.4214138
        %v2405 = vadd.f32 %v2389, 1.4214138
        %v2406 = vadd.f32 %v2390, 1.4214138
        %v2407 = vadd.f32 %v2391, 1.4214138
        %v2408 = vadd.f32 %v2392, 1.4214138
        %v2409 = vadd.f32 %v2393, 1.4214138
        %v2410 = vadd.f32 %v2394, 1.4214138
        %v2411 = vadd.f32 %v2395, 1.4214138
        %v2412 = vadd.f32 %v2396, 1.4214138
        %v2413 = vadd.f32 %v2397, 1.4214138
        %v2414 = vadd.f32 %v2398, 1.4214138
        %v2415 = vadd.f32 %v2399, 1.4214138
        %v2416 = vmul.f32 %v2400, %v2321
        %v2417 = vmul.f32 %v2401, %v2323
        %v2418 = vmul.f32 %v2402, %v2325
        %v2419 = vmul.f32 %v2403, %v2327
        %v2420 = vmul.f32 %v2404, %v2329
        %v2421 = vmul.f32 %v2405, %v2331
        %v2422 = vmul.f32 %v2406, %v2333
        %v2423 = vmul.f32 %v2407, %v2335
        %v2424 = vmul.f32 %v2408, %v2337
        %v2425 = vmul.f32 %v2409, %v2339
        %v2426 = vmul.f32 %v2410, %v2341
        %v2427 = vmul.f32 %v2411, %v2343
        %v2428 = vmul.f32 %v2412, %v2345
        %v2429 = vmul.f32 %v2413, %v2347
        %v2430 = vmul.f32 %v2414, %v2349
        %v2431 = vmul.f32 %v2415, %v2351
        %v2432 = vadd.f32 %v2416, -0.28449672
        %v2433 = vadd.f32 %v2417, -0.28449672
        %v2434 = vadd.f32 %v2418, -0.28449672
        %v2435 = vadd.f32 %v2419, -0.28449672
        %v2436 = vadd.f32 %v2420, -0.28449672
        %v2437 = vadd.f32 %v2421, -0.28449672
        %v2438 = vadd.f32 %v2422, -0.28449672
        %v2439 = vadd.f32 %v2423, -0.28449672
        %v2440 = vadd.f32 %v2424, -0.28449672
        %v2441 = vadd.f32 %v2425, -0.28449672
        %v2442 = vadd.f32 %v2426, -0.28449672
        %v2443 = vadd.f32 %v2427, -0.28449672
        %v2444 = vadd.f32 %v2428, -0.28449672
        %v2445 = vadd.f32 %v2429, -0.28449672
        %v2446 = vadd.f32 %v2430, -0.28449672
        %v2447 = vadd.f32 %v2431, -0.28449672
        %v2448 = vmul.f32 %v2432, %v2321
        %v2449 = vmul.f32 %v2433, %v2323
        %v2450 = vmul.f32 %v2434, %v2325
        %v2451 = vmul.f32 %v2435, %v2327
        %v2452 = vmul.f32 %v2436, %v2329
        %v2453 = vmul.f32 %v2437, %v2331
        %v2454 = vmul.f32 %v2438, %v2333
        %v2455 = vmul.f32 %v2439, %v2335
        %v2456 = vmul.f32 %v2440, %v2337
        %v2457 = vmul.f32 %v2441, %v2339
        %v2458 = vmul.f32 %v2442, %v2341
        %v2459 = vmul.f32 %v2443, %v2343
        %v2460 = vmul.f32 %v2444, %v2345
        %v2461 = vmul.f32 %v2445, %v2347
        %v2462 = vmul.f32 %v2446, %v2349
        %v2463 = vmul.f32 %v2447, %v2351
        %v2464 = vadd.f32 %v2448, 0.2548296
        %v2465 = vadd.f32 %v2449, 0.2548296
        %v2466 = vadd.f32 %v2450, 0.2548296
        %v2467 = vadd.f32 %v2451, 0.2548296
        %v2468 = vadd.f32 %v2452, 0.2548296
        %v2469 = vadd.f32 %v2453, 0.2548296
        %v2470 = vadd.f32 %v2454, 0.2548296
        %v2471 = vadd.f32 %v2455, 0.2548296
        %v2472 = vadd.f32 %v2456, 0.2548296
        %v2473 = vadd.f32 %v2457, 0.2548296
        %v2474 = vadd.f32 %v2458, 0.2548296
        %v2475 = vadd.f32 %v2459, 0.2548296
        %v2476 = vadd.f32 %v2460, 0.2548296
        %v2477 = vadd.f32 %v2461, 0.2548296
        %v2478 = vadd.f32 %v2462, 0.2548296
        %v2479 = vadd.f32 %v2463, 0.2548296
        %v2480 = vmul.f32 %v2464, %v2321
        %v2481 = vmul.f32 %v2465, %v2323
        %v2482 = vmul.f32 %v2466, %v2325
        %v2483 = vmul.f32 %v2467, %v2327
        %v2484 = vmul.f32 %v2468, %v2329
        %v2485 = vmul.f32 %v2469, %v2331
        %v2486 = vmul.f32 %v2470, %v2333
        %v2487 = vmul.f32 %v2471, %v2335
        %v2488 = vmul.f32 %v2472, %v2337
        %v2489 = vmul.f32 %v2473, %v2339
        %v2490 = vmul.f32 %v2474, %v2341
        %v2491 = vmul.f32 %v2475, %v2343
        %v2492 = vmul.f32 %v2476, %v2345
        %v2493 = vmul.f32 %v2477, %v2347
        %v2494 = vmul.f32 %v2478, %v2349
        %v2495 = vmul.f32 %v2479, %v2351
        %v2496 = vsub.f32 0.0, %v2272
        %v2497 = vsub.f32 0.0, %v2273
        %v2498 = vsub.f32 0.0, %v2274
        %v2499 = vsub.f32 0.0, %v2275
        %v2500 = vsub.f32 0.0, %v2276
        %v2501 = vsub.f32 0.0, %v2277
        %v2502 = vsub.f32 0.0, %v2278
        %v2503 = vsub.f32 0.0, %v2279
        %v2504 = vsub.f32 0.0, %v2280
        %v2505 = vsub.f32 0.0, %v2281
        %v2506 = vsub.f32 0.0, %v2282
        %v2507 = vsub.f32 0.0, %v2283
        %v2508 = vsub.f32 0.0, %v2284
        %v2509 = vsub.f32 0.0, %v2285
        %v2510 = vsub.f32 0.0, %v2286
        %v2511 = vsub.f32 0.0, %v2287
        %v2512 = vmul.f32 %v2496, %v2272
        %v2513 = vmul.f32 %v2497, %v2273
        %v2514 = vmul.f32 %v2498, %v2274
        %v2515 = vmul.f32 %v2499, %v2275
        %v2516 = vmul.f32 %v2500, %v2276
        %v2517 = vmul.f32 %v2501, %v2277
        %v2518 = vmul.f32 %v2502, %v2278
        %v2519 = vmul.f32 %v2503, %v2279
        %v2520 = vmul.f32 %v2504, %v2280
        %v2521 = vmul.f32 %v2505, %v2281
        %v2522 = vmul.f32 %v2506, %v2282
        %v2523 = vmul.f32 %v2507, %v2283
        %v2524 = vmul.f32 %v2508, %v2284
        %v2525 = vmul.f32 %v2509, %v2285
        %v2526 = vmul.f32 %v2510, %v2286
        %v2527 = vmul.f32 %v2511, %v2287
        %v2528 = vmul.f32 %v2512, 1.442695
        %v2529 = vpow.pop %v2528
        %v2530 = vmul.f32 %v2513, 1.442695
        %v2531 = vpow.pop %v2530
        %v2532 = vmul.f32 %v2514, 1.442695
        %v2533 = vpow.pop %v2532
        %v2534 = vmul.f32 %v2515, 1.442695
        %v2535 = vpow.pop %v2534
        %v2536 = vmul.f32 %v2516, 1.442695
        %v2537 = vpow.pop %v2536
        %v2538 = vmul.f32 %v2517, 1.442695
        %v2539 = vpow.pop %v2538
        %v2540 = vmul.f32 %v2518, 1.442695
        %v2541 = vpow.pop %v2540
        %v2542 = vmul.f32 %v2519, 1.442695
        %v2543 = vpow.pop %v2542
        %v2544 = vmul.f32 %v2520, 1.442695
        %v2545 = vpow.pop %v2544
        %v2546 = vmul.f32 %v2521, 1.442695
        %v2547 = vpow.pop %v2546
        %v2548 = vmul.f32 %v2522, 1.442695
        %v2549 = vpow.pop %v2548
        %v2550 = vmul.f32 %v2523, 1.442695
        %v2551 = vpow.pop %v2550
        %v2552 = vmul.f32 %v2524, 1.442695
        %v2553 = vpow.pop %v2552
        %v2554 = vmul.f32 %v2525, 1.442695
        %v2555 = vpow.pop %v2554
        %v2556 = vmul.f32 %v2526, 1.442695
        %v2557 = vpow.pop %v2556
        %v2558 = vmul.f32 %v2527, 1.442695
        %v2559 = vpow.pop %v2558
        %v2560 = vmul.f32 %v2480, %v2529
        %v2561 = vmul.f32 %v2481, %v2531
        %v2562 = vmul.f32 %v2482, %v2533
        %v2563 = vmul.f32 %v2483, %v2535
        %v2564 = vmul.f32 %v2484, %v2537
        %v2565 = vmul.f32 %v2485, %v2539
        %v2566 = vmul.f32 %v2486, %v2541
        %v2567 = vmul.f32 %v2487, %v2543
        %v2568 = vmul.f32 %v2488, %v2545
        %v2569 = vmul.f32 %v2489, %v2547
        %v2570 = vmul.f32 %v2490, %v2549
        %v2571 = vmul.f32 %v2491, %v2551
        %v2572 = vmul.f32 %v2492, %v2553
        %v2573 = vmul.f32 %v2493, %v2555
        %v2574 = vmul.f32 %v2494, %v2557
        %v2575 = vmul.f32 %v2495, %v2559
        %v2576 = vsub.f32 1.0, %v2560
        %v2577 = vsub.f32 1.0, %v2561
        %v2578 = vsub.f32 1.0, %v2562
        %v2579 = vsub.f32 1.0, %v2563
        %v2580 = vsub.f32 1.0, %v2564
        %v2581 = vsub.f32 1.0, %v2565
        %v2582 = vsub.f32 1.0, %v2566
        %v2583 = vsub.f32 1.0, %v2567
        %v2584 = vsub.f32 1.0, %v2568
        %v2585 = vsub.f32 1.0, %v2569
        %v2586 = vsub.f32 1.0, %v2570
        %v2587 = vsub.f32 1.0, %v2571
        %v2588 = vsub.f32 1.0, %v2572
        %v2589 = vsub.f32 1.0, %v2573
        %v2590 = vsub.f32 1.0, %v2574
        %v2591 = vsub.f32 1.0, %v2575
        %vm2592 = vcmp.lt.f32.partialorder %v2256, 0.0
        %vm2593 = vcmp.lt.f32.partialorder %v2257, 0.0
        %vm2594 = vcmp.lt.f32.partialorder %v2258, 0.0
        %vm2595 = vcmp.lt.f32.partialorder %v2259, 0.0
        %vm2596 = vcmp.lt.f32.partialorder %v2260, 0.0
        %vm2597 = vcmp.lt.f32.partialorder %v2261, 0.0
        %vm2598 = vcmp.lt.f32.partialorder %v2262, 0.0
        %vm2599 = vcmp.lt.f32.partialorder %v2263, 0.0
        %vm2600 = vcmp.lt.f32.partialorder %v2264, 0.0
        %vm2601 = vcmp.lt.f32.partialorder %v2265, 0.0
        %vm2602 = vcmp.lt.f32.partialorder %v2266, 0.0
        %vm2603 = vcmp.lt.f32.partialorder %v2267, 0.0
        %vm2604 = vcmp.lt.f32.partialorder %v2268, 0.0
        %vm2605 = vcmp.lt.f32.partialorder %v2269, 0.0
        %vm2606 = vcmp.lt.f32.partialorder %v2270, 0.0
        %vm2607 = vcmp.lt.f32.partialorder %v2271, 0.0
        %v2608 = vsub.f32 0.0, %v2576
        %v2609 = vsub.f32 0.0, %v2577
        %v2610 = vsub.f32 0.0, %v2578
        %v2611 = vsub.f32 0.0, %v2579
        %v2612 = vsub.f32 0.0, %v2580
        %v2613 = vsub.f32 0.0, %v2581
        %v2614 = vsub.f32 0.0, %v2582
        %v2615 = vsub.f32 0.0, %v2583
        %v2616 = vsub.f32 0.0, %v2584
        %v2617 = vsub.f32 0.0, %v2585
        %v2618 = vsub.f32 0.0, %v2586
        %v2619 = vsub.f32 0.0, %v2587
        %v2620 = vsub.f32 0.0, %v2588
        %v2621 = vsub.f32 0.0, %v2589
        %v2622 = vsub.f32 0.0, %v2590
        %v2623 = vsub.f32 0.0, %v2591
        %v2624 = vsel %vm2592, %v2608, %v2576
        %v2625 = vsel %vm2593, %v2609, %v2577
        %v2626 = vsel %vm2594, %v2610, %v2578
        %v2627 = vsel %vm2595, %v2611, %v2579
        %v2628 = vsel %vm2596, %v2612, %v2580
        %v2629 = vsel %vm2597, %v2613, %v2581
        %v2630 = vsel %vm2598, %v2614, %v2582
        %v2631 = vsel %vm2599, %v2615, %v2583
        %v2632 = vsel %vm2600, %v2616, %v2584
        %v2633 = vsel %vm2601, %v2617, %v2585
        %v2634 = vsel %vm2602, %v2618, %v2586
        %v2635 = vsel %vm2603, %v2619, %v2587
        %v2636 = vsel %vm2604, %v2620, %v2588
        %v2637 = vsel %vm2605, %v2621, %v2589
        %v2638 = vsel %vm2606, %v2622, %v2590
        %v2639 = vsel %vm2607, %v2623, %v2591
        %v2640 = vadd.f32 %v2624, 1.0
        %v2641 = vadd.f32 %v2625, 1.0
        %v2642 = vadd.f32 %v2626, 1.0
        %v2643 = vadd.f32 %v2627, 1.0
        %v2644 = vadd.f32 %v2628, 1.0
        %v2645 = vadd.f32 %v2629, 1.0
        %v2646 = vadd.f32 %v2630, 1.0
        %v2647 = vadd.f32 %v2631, 1.0
        %v2648 = vadd.f32 %v2632, 1.0
        %v2649 = vadd.f32 %v2633, 1.0
        %v2650 = vadd.f32 %v2634, 1.0
        %v2651 = vadd.f32 %v2635, 1.0
        %v2652 = vadd.f32 %v2636, 1.0
        %v2653 = vadd.f32 %v2637, 1.0
        %v2654 = vadd.f32 %v2638, 1.0
        %v2655 = vadd.f32 %v2639, 1.0
        %v2656 = vmul.f32 %v2240, %v2640
        %v2657 = vmul.f32 %v2241, %v2641
        %v2658 = vmul.f32 %v2242, %v2642
        %v2659 = vmul.f32 %v2243, %v2643
        %v2660 = vmul.f32 %v2244, %v2644
        %v2661 = vmul.f32 %v2245, %v2645
        %v2662 = vmul.f32 %v2246, %v2646
        %v2663 = vmul.f32 %v2247, %v2647
        %v2664 = vmul.f32 %v2248, %v2648
        %v2665 = vmul.f32 %v2249, %v2649
        %v2666 = vmul.f32 %v2250, %v2650
        %v2667 = vmul.f32 %v2251, %v2651
        %v2668 = vmul.f32 %v2252, %v2652
        %v2669 = vmul.f32 %v2253, %v2653
        %v2670 = vmul.f32 %v2254, %v2654
        %v2671 = vmul.f32 %v2255, %v2655
        %v2672 = vpack.c.bf16 %v2656, %v2656
        %v2673 = vpack.c.bf16 %v2657, %v2657
        %v2674 = vpack.c.bf16 %v2658, %v2658
        %v2675 = vpack.c.bf16 %v2659, %v2659
        %v2676 = vpack.c.bf16 %v2660, %v2660
        %v2677 = vpack.c.bf16 %v2661, %v2661
        %v2678 = vpack.c.bf16 %v2662, %v2662
        %v2679 = vpack.c.bf16 %v2663, %v2663
        %v2680 = vpack.c.bf16 %v2664, %v2664
        %v2681 = vpack.c.bf16 %v2665, %v2665
        %v2682 = vpack.c.bf16 %v2666, %v2666
        %v2683 = vpack.c.bf16 %v2667, %v2667
        %v2684 = vpack.c.bf16 %v2668, %v2668
        %v2685 = vpack.c.bf16 %v2669, %v2669
        %v2686 = vpack.c.bf16 %v2670, %v2670
        %v2687 = vpack.c.bf16 %v2671, %v2671
        %v2689 = vlaneseq
        %v2690 = vshrl.u32 %v2689, 7
        %v2691 = vsub.s32 0, %v2690
        %v2692 = vrot.slane %v864, %v2691
        %v2950 = vunpack.c.l.b16 %v608
        %v2951 = vunpack.c.l.b16 %v609
        %v2952 = vunpack.c.l.b16 %v610
        %v2953 = vunpack.c.l.b16 %v611
        %v2954 = vunpack.c.l.b16 %v612
        %v2955 = vunpack.c.l.b16 %v613
        %v2956 = vunpack.c.l.b16 %v614
        %v2957 = vunpack.c.l.b16 %v615
        %v2958 = vunpack.c.l.b16 %v616
        %v2959 = vunpack.c.l.b16 %v617
        %v2960 = vunpack.c.l.b16 %v618
        %v2961 = vunpack.c.l.b16 %v619
        %v2962 = vunpack.c.l.b16 %v620
        %v2963 = vunpack.c.l.b16 %v621
        %v2964 = vunpack.c.l.b16 %v622
        %v2965 = vunpack.c.l.b16 %v623
        %v2966 = vunpack.c.l.b16 %v624
        %v2967 = vunpack.c.l.b16 %v625
        %v2968 = vunpack.c.l.b16 %v626
        %v2969 = vunpack.c.l.b16 %v627
        %v2970 = vunpack.c.l.b16 %v628
        %v2971 = vunpack.c.l.b16 %v629
        %v2972 = vunpack.c.l.b16 %v630
        %v2973 = vunpack.c.l.b16 %v631
        %v2974 = vunpack.c.l.b16 %v632
        %v2975 = vunpack.c.l.b16 %v633
        %v2976 = vunpack.c.l.b16 %v634
        %v2977 = vunpack.c.l.b16 %v635
        %v2978 = vunpack.c.l.b16 %v636
        %v2979 = vunpack.c.l.b16 %v637
        %v2980 = vunpack.c.l.b16 %v638
        %v2981 = vunpack.c.l.b16 %v639
        %v2982 = vunpack.c.l.b16 %v640
        %v2983 = vunpack.c.l.b16 %v641
        %v2984 = vunpack.c.l.b16 %v642
        %v2985 = vunpack.c.l.b16 %v643
        %v2986 = vunpack.c.l.b16 %v644
        %v2987 = vunpack.c.l.b16 %v645
        %v2988 = vunpack.c.l.b16 %v646
        %v2989 = vunpack.c.l.b16 %v647
        %v2990 = vunpack.c.l.b16 %v648
        %v2991 = vunpack.c.l.b16 %v649
        %v2992 = vunpack.c.l.b16 %v650
        %v2993 = vunpack.c.l.b16 %v651
        %v2994 = vunpack.c.l.b16 %v652
        %v2995 = vunpack.c.l.b16 %v653
        %v2996 = vunpack.c.l.b16 %v654
        %v2997 = vunpack.c.l.b16 %v655
        %v2998 = vunpack.c.l.b16 %v656
        %v2999 = vunpack.c.l.b16 %v657
        %v3000 = vunpack.c.l.b16 %v658
        %v3001 = vunpack.c.l.b16 %v659
        %v3002 = vunpack.c.l.b16 %v660
        %v3003 = vunpack.c.l.b16 %v661
        %v3004 = vunpack.c.l.b16 %v662
        %v3005 = vunpack.c.l.b16 %v663
        %v3006 = vunpack.c.l.b16 %v664
        %v3007 = vunpack.c.l.b16 %v665
        %v3008 = vunpack.c.l.b16 %v666
        %v3009 = vunpack.c.l.b16 %v667
        %v3010 = vunpack.c.l.b16 %v668
        %v3011 = vunpack.c.l.b16 %v669
        %v3012 = vunpack.c.l.b16 %v670
        %v3013 = vunpack.c.l.b16 %v671
        %v3014 = vunpack.c.l.b16 %v672
        %v3015 = vunpack.c.l.b16 %v673
        %v3016 = vunpack.c.l.b16 %v674
        %v3017 = vunpack.c.l.b16 %v675
        %v3018 = vunpack.c.l.b16 %v676
        %v3019 = vunpack.c.l.b16 %v677
        %v3020 = vunpack.c.l.b16 %v678
        %v3021 = vunpack.c.l.b16 %v679
        %v3022 = vunpack.c.l.b16 %v680
        %v3023 = vunpack.c.l.b16 %v681
        %v3024 = vunpack.c.l.b16 %v682
        %v3025 = vunpack.c.l.b16 %v683
        %v3026 = vunpack.c.l.b16 %v684
        %v3027 = vunpack.c.l.b16 %v685
        %v3028 = vunpack.c.l.b16 %v686
        %v3029 = vunpack.c.l.b16 %v687
        %v3030 = vunpack.c.l.b16 %v688
        %v3031 = vunpack.c.l.b16 %v689
        %v3032 = vunpack.c.l.b16 %v690
        %v3033 = vunpack.c.l.b16 %v691
        %v3034 = vunpack.c.l.b16 %v692
        %v3035 = vunpack.c.l.b16 %v693
        %v3036 = vunpack.c.l.b16 %v694
        %v3037 = vunpack.c.l.b16 %v695
        %v3038 = vunpack.c.l.b16 %v696
        %v3039 = vunpack.c.l.b16 %v697
        %v3040 = vunpack.c.l.b16 %v698
        %v3041 = vunpack.c.l.b16 %v699
        %v3042 = vunpack.c.l.b16 %v700
        %v3043 = vunpack.c.l.b16 %v701
        %v3044 = vunpack.c.l.b16 %v702
        %v3045 = vunpack.c.l.b16 %v703
        %v3046 = vunpack.c.l.b16 %v704
        %v3047 = vunpack.c.l.b16 %v705
        %v3048 = vunpack.c.l.b16 %v706
        %v3049 = vunpack.c.l.b16 %v707
        %v3050 = vunpack.c.l.b16 %v708
        %v3051 = vunpack.c.l.b16 %v709
        %v3052 = vunpack.c.l.b16 %v710
        %v3053 = vunpack.c.l.b16 %v711
        %v3054 = vunpack.c.l.b16 %v712
        %v3055 = vunpack.c.l.b16 %v713
        %v3056 = vunpack.c.l.b16 %v714
        %v3057 = vunpack.c.l.b16 %v715
        %v3058 = vunpack.c.l.b16 %v716
        %v3059 = vunpack.c.l.b16 %v717
        %v3060 = vunpack.c.l.b16 %v718
        %v3061 = vunpack.c.l.b16 %v719
        %v3062 = vunpack.c.l.b16 %v720
        %v3063 = vunpack.c.l.b16 %v721
        %v3064 = vunpack.c.l.b16 %v722
        %v3065 = vunpack.c.l.b16 %v723
        %v3066 = vunpack.c.l.b16 %v724
        %v3067 = vunpack.c.l.b16 %v725
        %v3068 = vunpack.c.l.b16 %v726
        %v3069 = vunpack.c.l.b16 %v727
        %v3070 = vunpack.c.l.b16 %v728
        %v3071 = vunpack.c.l.b16 %v729
        %v3072 = vunpack.c.l.b16 %v730
        %v3073 = vunpack.c.l.b16 %v731
        %v3074 = vunpack.c.l.b16 %v732
        %v3075 = vunpack.c.l.b16 %v733
        %v3076 = vunpack.c.l.b16 %v734
        %v3077 = vunpack.c.l.b16 %v735
        %v3078 = vunpack.c.l.b16 %v736
        %v3079 = vunpack.c.l.b16 %v737
        %v3080 = vunpack.c.l.b16 %v738
        %v3081 = vunpack.c.l.b16 %v739
        %v3082 = vunpack.c.l.b16 %v740
        %v3083 = vunpack.c.l.b16 %v741
        %v3084 = vunpack.c.l.b16 %v742
        %v3085 = vunpack.c.l.b16 %v743
        %v3086 = vunpack.c.l.b16 %v744
        %v3087 = vunpack.c.l.b16 %v745
        %v3088 = vunpack.c.l.b16 %v746
        %v3089 = vunpack.c.l.b16 %v747
        %v3090 = vunpack.c.l.b16 %v748
        %v3091 = vunpack.c.l.b16 %v749
        %v3092 = vunpack.c.l.b16 %v750
        %v3093 = vunpack.c.l.b16 %v751
        %v3094 = vunpack.c.l.b16 %v752
        %v3095 = vunpack.c.l.b16 %v753
        %v3096 = vunpack.c.l.b16 %v754
        %v3097 = vunpack.c.l.b16 %v755
        %v3098 = vunpack.c.l.b16 %v756
        %v3099 = vunpack.c.l.b16 %v757
        %v3100 = vunpack.c.l.b16 %v758
        %v3101 = vunpack.c.l.b16 %v759
        %v3102 = vunpack.c.l.b16 %v760
        %v3103 = vunpack.c.l.b16 %v761
        %v3104 = vunpack.c.l.b16 %v762
        %v3105 = vunpack.c.l.b16 %v763
        %v3106 = vunpack.c.l.b16 %v764
        %v3107 = vunpack.c.l.b16 %v765
        %v3108 = vunpack.c.l.b16 %v766
        %v3109 = vunpack.c.l.b16 %v767
        %v3110 = vunpack.c.l.b16 %v768
        %v3111 = vunpack.c.l.b16 %v769
        %v3112 = vunpack.c.l.b16 %v770
        %v3113 = vunpack.c.l.b16 %v771
        %v3114 = vunpack.c.l.b16 %v772
        %v3115 = vunpack.c.l.b16 %v773
        %v3116 = vunpack.c.l.b16 %v774
        %v3117 = vunpack.c.l.b16 %v775
        %v3118 = vunpack.c.l.b16 %v776
        %v3119 = vunpack.c.l.b16 %v777
        %v3120 = vunpack.c.l.b16 %v778
        %v3121 = vunpack.c.l.b16 %v779
        %v3122 = vunpack.c.l.b16 %v780
        %v3123 = vunpack.c.l.b16 %v781
        %v3124 = vunpack.c.l.b16 %v782
        %v3125 = vunpack.c.l.b16 %v783
        %v3126 = vunpack.c.l.b16 %v784
        %v3127 = vunpack.c.l.b16 %v785
        %v3128 = vunpack.c.l.b16 %v786
        %v3129 = vunpack.c.l.b16 %v787
        %v3130 = vunpack.c.l.b16 %v788
        %v3131 = vunpack.c.l.b16 %v789
        %v3132 = vunpack.c.l.b16 %v790
        %v3133 = vunpack.c.l.b16 %v791
        %v3134 = vunpack.c.l.b16 %v792
        %v3135 = vunpack.c.l.b16 %v793
        %v3136 = vunpack.c.l.b16 %v794
        %v3137 = vunpack.c.l.b16 %v795
        %v3138 = vunpack.c.l.b16 %v796
        %v3139 = vunpack.c.l.b16 %v797
        %v3140 = vunpack.c.l.b16 %v798
        %v3141 = vunpack.c.l.b16 %v799
        %v3142 = vunpack.c.l.b16 %v800
        %v3143 = vunpack.c.l.b16 %v801
        %v3144 = vunpack.c.l.b16 %v802
        %v3145 = vunpack.c.l.b16 %v803
        %v3146 = vunpack.c.l.b16 %v804
        %v3147 = vunpack.c.l.b16 %v805
        %v3148 = vunpack.c.l.b16 %v806
        %v3149 = vunpack.c.l.b16 %v807
        %v3150 = vunpack.c.l.b16 %v808
        %v3151 = vunpack.c.l.b16 %v809
        %v3152 = vunpack.c.l.b16 %v810
        %v3153 = vunpack.c.l.b16 %v811
        %v3154 = vunpack.c.l.b16 %v812
        %v3155 = vunpack.c.l.b16 %v813
        %v3156 = vunpack.c.l.b16 %v814
        %v3157 = vunpack.c.l.b16 %v815
        %v3158 = vunpack.c.l.b16 %v816
        %v3159 = vunpack.c.l.b16 %v817
        %v3160 = vunpack.c.l.b16 %v818
        %v3161 = vunpack.c.l.b16 %v819
        %v3162 = vunpack.c.l.b16 %v820
        %v3163 = vunpack.c.l.b16 %v821
        %v3164 = vunpack.c.l.b16 %v822
        %v3165 = vunpack.c.l.b16 %v823
        %v3166 = vunpack.c.l.b16 %v824
        %v3167 = vunpack.c.l.b16 %v825
        %v3168 = vunpack.c.l.b16 %v826
        %v3169 = vunpack.c.l.b16 %v827
        %v3170 = vunpack.c.l.b16 %v828
        %v3171 = vunpack.c.l.b16 %v829
        %v3172 = vunpack.c.l.b16 %v830
        %v3173 = vunpack.c.l.b16 %v831
        %v3174 = vunpack.c.l.b16 %v832
        %v3175 = vunpack.c.l.b16 %v833
        %v3176 = vunpack.c.l.b16 %v834
        %v3177 = vunpack.c.l.b16 %v835
        %v3178 = vunpack.c.l.b16 %v836
        %v3179 = vunpack.c.l.b16 %v837
        %v3180 = vunpack.c.l.b16 %v838
        %v3181 = vunpack.c.l.b16 %v839
        %v3182 = vunpack.c.l.b16 %v840
        %v3183 = vunpack.c.l.b16 %v841
        %v3184 = vunpack.c.l.b16 %v842
        %v3185 = vunpack.c.l.b16 %v843
        %v3186 = vunpack.c.l.b16 %v844
        %v3187 = vunpack.c.l.b16 %v845
        %v3188 = vunpack.c.l.b16 %v846
        %v3189 = vunpack.c.l.b16 %v847
        %v3190 = vunpack.c.l.b16 %v848
        %v3191 = vunpack.c.l.b16 %v849
        %v3192 = vunpack.c.l.b16 %v850
        %v3193 = vunpack.c.l.b16 %v851
        %v3194 = vunpack.c.l.b16 %v852
        %v3195 = vunpack.c.l.b16 %v853
        %v3196 = vunpack.c.l.b16 %v854
        %v3197 = vunpack.c.l.b16 %v855
        %v3198 = vunpack.c.l.b16 %v856
        %v3199 = vunpack.c.l.b16 %v857
        %v3200 = vunpack.c.l.b16 %v858
        %v3201 = vunpack.c.l.b16 %v859
        %v3202 = vunpack.c.l.b16 %v860
        %v3203 = vunpack.c.l.b16 %v861
        %v3204 = vunpack.c.l.b16 %v862
        %v3205 = vunpack.c.l.b16 %v863
        %v3206 = vpack.c.b16 %v2951, %v2950
        %v3207 = vpack.c.b16 %v2953, %v2952
        %v3208 = vpack.c.b16 %v2955, %v2954
        %v3209 = vpack.c.b16 %v2957, %v2956
        %v3210 = vpack.c.b16 %v2959, %v2958
        %v3211 = vpack.c.b16 %v2961, %v2960
        %v3212 = vpack.c.b16 %v2963, %v2962
        %v3213 = vpack.c.b16 %v2965, %v2964
        %v3214 = vpack.c.b16 %v2967, %v2966
        %v3215 = vpack.c.b16 %v2969, %v2968
        %v3216 = vpack.c.b16 %v2971, %v2970
        %v3217 = vpack.c.b16 %v2973, %v2972
        %v3218 = vpack.c.b16 %v2975, %v2974
        %v3219 = vpack.c.b16 %v2977, %v2976
        %v3220 = vpack.c.b16 %v2979, %v2978
        %v3221 = vpack.c.b16 %v2981, %v2980
        %v3222 = vpack.c.b16 %v2983, %v2982
        %v3223 = vpack.c.b16 %v2985, %v2984
        %v3224 = vpack.c.b16 %v2987, %v2986
        %v3225 = vpack.c.b16 %v2989, %v2988
        %v3226 = vpack.c.b16 %v2991, %v2990
        %v3227 = vpack.c.b16 %v2993, %v2992
        %v3228 = vpack.c.b16 %v2995, %v2994
        %v3229 = vpack.c.b16 %v2997, %v2996
        %v3230 = vpack.c.b16 %v2999, %v2998
        %v3231 = vpack.c.b16 %v3001, %v3000
        %v3232 = vpack.c.b16 %v3003, %v3002
        %v3233 = vpack.c.b16 %v3005, %v3004
        %v3234 = vpack.c.b16 %v3007, %v3006
        %v3235 = vpack.c.b16 %v3009, %v3008
        %v3236 = vpack.c.b16 %v3011, %v3010
        %v3237 = vpack.c.b16 %v3013, %v3012
        %v3238 = vpack.c.b16 %v3015, %v3014
        %v3239 = vpack.c.b16 %v3017, %v3016
        %v3240 = vpack.c.b16 %v3019, %v3018
        %v3241 = vpack.c.b16 %v3021, %v3020
        %v3242 = vpack.c.b16 %v3023, %v3022
        %v3243 = vpack.c.b16 %v3025, %v3024
        %v3244 = vpack.c.b16 %v3027, %v3026
        %v3245 = vpack.c.b16 %v3029, %v3028
        %v3246 = vpack.c.b16 %v3031, %v3030
        %v3247 = vpack.c.b16 %v3033, %v3032
        %v3248 = vpack.c.b16 %v3035, %v3034
        %v3249 = vpack.c.b16 %v3037, %v3036
        %v3250 = vpack.c.b16 %v3039, %v3038
        %v3251 = vpack.c.b16 %v3041, %v3040
        %v3252 = vpack.c.b16 %v3043, %v3042
        %v3253 = vpack.c.b16 %v3045, %v3044
        %v3254 = vpack.c.b16 %v3047, %v3046
        %v3255 = vpack.c.b16 %v3049, %v3048
        %v3256 = vpack.c.b16 %v3051, %v3050
        %v3257 = vpack.c.b16 %v3053, %v3052
        %v3258 = vpack.c.b16 %v3055, %v3054
        %v3259 = vpack.c.b16 %v3057, %v3056
        %v3260 = vpack.c.b16 %v3059, %v3058
        %v3261 = vpack.c.b16 %v3061, %v3060
        %v3262 = vpack.c.b16 %v3063, %v3062
        %v3263 = vpack.c.b16 %v3065, %v3064
        %v3264 = vpack.c.b16 %v3067, %v3066
        %v3265 = vpack.c.b16 %v3069, %v3068
        %v3266 = vpack.c.b16 %v3071, %v3070
        %v3267 = vpack.c.b16 %v3073, %v3072
        %v3268 = vpack.c.b16 %v3075, %v3074
        %v3269 = vpack.c.b16 %v3077, %v3076
        %v3270 = vpack.c.b16 %v3079, %v3078
        %v3271 = vpack.c.b16 %v3081, %v3080
        %v3272 = vpack.c.b16 %v3083, %v3082
        %v3273 = vpack.c.b16 %v3085, %v3084
        %v3274 = vpack.c.b16 %v3087, %v3086
        %v3275 = vpack.c.b16 %v3089, %v3088
        %v3276 = vpack.c.b16 %v3091, %v3090
        %v3277 = vpack.c.b16 %v3093, %v3092
        %v3278 = vpack.c.b16 %v3095, %v3094
        %v3279 = vpack.c.b16 %v3097, %v3096
        %v3280 = vpack.c.b16 %v3099, %v3098
        %v3281 = vpack.c.b16 %v3101, %v3100
        %v3282 = vpack.c.b16 %v3103, %v3102
        %v3283 = vpack.c.b16 %v3105, %v3104
        %v3284 = vpack.c.b16 %v3107, %v3106
        %v3285 = vpack.c.b16 %v3109, %v3108
        %v3286 = vpack.c.b16 %v3111, %v3110
        %v3287 = vpack.c.b16 %v3113, %v3112
        %v3288 = vpack.c.b16 %v3115, %v3114
        %v3289 = vpack.c.b16 %v3117, %v3116
        %v3290 = vpack.c.b16 %v3119, %v3118
        %v3291 = vpack.c.b16 %v3121, %v3120
        %v3292 = vpack.c.b16 %v3123, %v3122
        %v3293 = vpack.c.b16 %v3125, %v3124
        %v3294 = vpack.c.b16 %v3127, %v3126
        %v3295 = vpack.c.b16 %v3129, %v3128
        %v3296 = vpack.c.b16 %v3131, %v3130
        %v3297 = vpack.c.b16 %v3133, %v3132
        %v3298 = vpack.c.b16 %v3135, %v3134
        %v3299 = vpack.c.b16 %v3137, %v3136
        %v3300 = vpack.c.b16 %v3139, %v3138
        %v3301 = vpack.c.b16 %v3141, %v3140
        %v3302 = vpack.c.b16 %v3143, %v3142
        %v3303 = vpack.c.b16 %v3145, %v3144
        %v3304 = vpack.c.b16 %v3147, %v3146
        %v3305 = vpack.c.b16 %v3149, %v3148
        %v3306 = vpack.c.b16 %v3151, %v3150
        %v3307 = vpack.c.b16 %v3153, %v3152
        %v3308 = vpack.c.b16 %v3155, %v3154
        %v3309 = vpack.c.b16 %v3157, %v3156
        %v3310 = vpack.c.b16 %v3159, %v3158
        %v3311 = vpack.c.b16 %v3161, %v3160
        %v3312 = vpack.c.b16 %v3163, %v3162
        %v3313 = vpack.c.b16 %v3165, %v3164
        %v3314 = vpack.c.b16 %v3167, %v3166
        %v3315 = vpack.c.b16 %v3169, %v3168
        %v3316 = vpack.c.b16 %v3171, %v3170
        %v3317 = vpack.c.b16 %v3173, %v3172
        %v3318 = vpack.c.b16 %v3175, %v3174
        %v3319 = vpack.c.b16 %v3177, %v3176
        %v3320 = vpack.c.b16 %v3179, %v3178
        %v3321 = vpack.c.b16 %v3181, %v3180
        %v3322 = vpack.c.b16 %v3183, %v3182
        %v3323 = vpack.c.b16 %v3185, %v3184
        %v3324 = vpack.c.b16 %v3187, %v3186
        %v3325 = vpack.c.b16 %v3189, %v3188
        %v3326 = vpack.c.b16 %v3191, %v3190
        %v3327 = vpack.c.b16 %v3193, %v3192
        %v3328 = vpack.c.b16 %v3195, %v3194
        %v3329 = vpack.c.b16 %v3197, %v3196
        %v3330 = vpack.c.b16 %v3199, %v3198
        %v3331 = vpack.c.b16 %v3201, %v3200
        %v3332 = vpack.c.b16 %v3203, %v3202
        %v3333 = vpack.c.b16 %v3205, %v3204
        %3462 = vmatprep.subr.bf16.mxu0 0
        %3463 = vmatpush1.bf16.msra.mxu0 %v3213
        %3464 = vmatprep.subr.bf16.mxu0 0
        %3465 = vmatpush1.bf16.msra.mxu0 %v3212
        %3466 = vmatprep.subr.bf16.mxu0 0
        %3467 = vmatpush1.bf16.msra.mxu0 %v3211
        %3468 = vmatprep.subr.bf16.mxu0 0
        %3469 = vmatpush1.bf16.msra.mxu0 %v3210
        %3470 = vmatprep.subr.bf16.mxu0 0
        %3471 = vmatpush1.bf16.msra.mxu0 %v3209
        %3472 = vmatprep.subr.bf16.mxu0 0
        %3473 = vmatpush1.bf16.msra.mxu0 %v3208
        %3474 = vmatprep.subr.bf16.mxu0 0
        %3475 = vmatpush1.bf16.msra.mxu0 %v3207
        %3476 = vmatprep.subr.bf16.mxu0 0
        %3477 = vmatpush1.bf16.msra.mxu0 %v3206
        %3478 = vmatprep.subr.bf16.mxu0 0
        %3479 = vmatpush2.bf16.msra.mxu0 %v3221
        %3480 = vmatprep.subr.bf16.mxu0 0
        %3481 = vmatpush2.bf16.msra.mxu0 %v3220
        %3482 = vmatprep.subr.bf16.mxu0 0
        %3483 = vmatpush2.bf16.msra.mxu0 %v3219
        %3484 = vmatprep.subr.bf16.mxu0 0
        %3485 = vmatpush2.bf16.msra.mxu0 %v3218
        %3486 = vmatprep.subr.bf16.mxu0 0
        %3487 = vmatpush2.bf16.msra.mxu0 %v3217
        %3488 = vmatprep.subr.bf16.mxu0 0
        %3489 = vmatpush2.bf16.msra.mxu0 %v3216
        %3490 = vmatprep.subr.bf16.mxu0 0
        %3491 = vmatpush2.bf16.msra.mxu0 %v3215
        %3492 = vmatprep.subr.bf16.mxu0 0
        %3493 = vmatpush2.bf16.msra.mxu0 %v3214
        %3494 = vmatprep.mubr.bf16.mxu0 %v2673
        %3495 = vmatmul.mubr.bf16.gmra.mxu0 %v2672
        %v3496 = vpop.f32.mrf.mxu0
        %v3497 = vadd.f32 %v2692, %v3496
        %v3498 = vpop.f32.mrf.mxu0
        %v3499 = vpop.f32.mrf.mxu0
        %v3500 = vpop.f32.mrf.mxu0
        %3501 = vdwg.mxu0
        %3502 = vmatprep.subr.bf16.mxu0 0
        %3503 = vmatpush1.bf16.msra.mxu0 %v3229
        %3504 = vmatprep.subr.bf16.mxu0 0
        %3505 = vmatpush1.bf16.msra.mxu0 %v3228
        %3506 = vmatprep.subr.bf16.mxu0 0
        %3507 = vmatpush1.bf16.msra.mxu0 %v3227
        %3508 = vmatprep.subr.bf16.mxu0 0
        %3509 = vmatpush1.bf16.msra.mxu0 %v3226
        %3510 = vmatprep.subr.bf16.mxu0 0
        %3511 = vmatpush1.bf16.msra.mxu0 %v3225
        %3512 = vmatprep.subr.bf16.mxu0 0
        %3513 = vmatpush1.bf16.msra.mxu0 %v3224
        %3514 = vmatprep.subr.bf16.mxu0 0
        %3515 = vmatpush1.bf16.msra.mxu0 %v3223
        %3516 = vmatprep.subr.bf16.mxu0 0
        %3517 = vmatpush1.bf16.msra.mxu0 %v3222
        %3518 = vmatprep.subr.bf16.mxu0 0
        %3519 = vmatpush2.bf16.msra.mxu0 %v3237
        %3520 = vmatprep.subr.bf16.mxu0 0
        %3521 = vmatpush2.bf16.msra.mxu0 %v3236
        %3522 = vmatprep.subr.bf16.mxu0 0
        %3523 = vmatpush2.bf16.msra.mxu0 %v3235
        %3524 = vmatprep.subr.bf16.mxu0 0
        %3525 = vmatpush2.bf16.msra.mxu0 %v3234
        %3526 = vmatprep.subr.bf16.mxu0 0
        %3527 = vmatpush2.bf16.msra.mxu0 %v3233
        %3528 = vmatprep.subr.bf16.mxu0 0
        %3529 = vmatpush2.bf16.msra.mxu0 %v3232
        %3530 = vmatprep.subr.bf16.mxu0 0
        %3531 = vmatpush2.bf16.msra.mxu0 %v3231
        %3532 = vmatprep.subr.bf16.mxu0 0
        %3533 = vmatpush2.bf16.msra.mxu0 %v3230
        %3534 = vmatprep.mubr.bf16.mxu0 %v2675
        %3535 = vmatmul.mubr.bf16.gmra.mxu0 %v2674
        %v3536 = vpop.f32.mrf.mxu0
        %v3537 = vadd.f32 %v3497, %v3536
        %v3538 = vpop.f32.mrf.mxu0
        %v3539 = vpop.f32.mrf.mxu0
        %v3540 = vpop.f32.mrf.mxu0
        %3541 = vdwg.mxu0
        %3542 = vmatprep.subr.bf16.mxu0 0
        %3543 = vmatpush1.bf16.msra.mxu0 %v3245
        %3544 = vmatprep.subr.bf16.mxu0 0
        %3545 = vmatpush1.bf16.msra.mxu0 %v3244
        %3546 = vmatprep.subr.bf16.mxu0 0
        %3547 = vmatpush1.bf16.msra.mxu0 %v3243
        %3548 = vmatprep.subr.bf16.mxu0 0
        %3549 = vmatpush1.bf16.msra.mxu0 %v3242
        %3550 = vmatprep.subr.bf16.mxu0 0
        %3551 = vmatpush1.bf16.msra.mxu0 %v3241
        %3552 = vmatprep.subr.bf16.mxu0 0
        %3553 = vmatpush1.bf16.msra.mxu0 %v3240
        %3554 = vmatprep.subr.bf16.mxu0 0
        %3555 = vmatpush1.bf16.msra.mxu0 %v3239
        %3556 = vmatprep.subr.bf16.mxu0 0
        %3557 = vmatpush1.bf16.msra.mxu0 %v3238
        %3558 = vmatprep.subr.bf16.mxu0 0
        %3559 = vmatpush2.bf16.msra.mxu0 %v3253
        %3560 = vmatprep.subr.bf16.mxu0 0
        %3561 = vmatpush2.bf16.msra.mxu0 %v3252
        %3562 = vmatprep.subr.bf16.mxu0 0
        %3563 = vmatpush2.bf16.msra.mxu0 %v3251
        %3564 = vmatprep.subr.bf16.mxu0 0
        %3565 = vmatpush2.bf16.msra.mxu0 %v3250
        %3566 = vmatprep.subr.bf16.mxu0 0
        %3567 = vmatpush2.bf16.msra.mxu0 %v3249
        %3568 = vmatprep.subr.bf16.mxu0 0
        %3569 = vmatpush2.bf16.msra.mxu0 %v3248
        %3570 = vmatprep.subr.bf16.mxu0 0
        %3571 = vmatpush2.bf16.msra.mxu0 %v3247
        %3572 = vmatprep.subr.bf16.mxu0 0
        %3573 = vmatpush2.bf16.msra.mxu0 %v3246
        %3574 = vmatprep.mubr.bf16.mxu0 %v2677
        %3575 = vmatmul.mubr.bf16.gmra.mxu0 %v2676
        %v3576 = vpop.f32.mrf.mxu0
        %v3577 = vadd.f32 %v3537, %v3576
        %v3578 = vpop.f32.mrf.mxu0
        %v3579 = vpop.f32.mrf.mxu0
        %v3580 = vpop.f32.mrf.mxu0
        %3581 = vdwg.mxu0
        %3582 = vmatprep.subr.bf16.mxu0 0
        %3583 = vmatpush1.bf16.msra.mxu0 %v3261
        %3584 = vmatprep.subr.bf16.mxu0 0
        %3585 = vmatpush1.bf16.msra.mxu0 %v3260
        %3586 = vmatprep.subr.bf16.mxu0 0
        %3587 = vmatpush1.bf16.msra.mxu0 %v3259
        %3588 = vmatprep.subr.bf16.mxu0 0
        %3589 = vmatpush1.bf16.msra.mxu0 %v3258
        %3590 = vmatprep.subr.bf16.mxu0 0
        %3591 = vmatpush1.bf16.msra.mxu0 %v3257
        %3592 = vmatprep.subr.bf16.mxu0 0
        %3593 = vmatpush1.bf16.msra.mxu0 %v3256
        %3594 = vmatprep.subr.bf16.mxu0 0
        %3595 = vmatpush1.bf16.msra.mxu0 %v3255
        %3596 = vmatprep.subr.bf16.mxu0 0
        %3597 = vmatpush1.bf16.msra.mxu0 %v3254
        %3598 = vmatprep.subr.bf16.mxu0 0
        %3599 = vmatpush2.bf16.msra.mxu0 %v3269
        %3600 = vmatprep.subr.bf16.mxu0 0
        %3601 = vmatpush2.bf16.msra.mxu0 %v3268
        %3602 = vmatprep.subr.bf16.mxu0 0
        %3603 = vmatpush2.bf16.msra.mxu0 %v3267
        %3604 = vmatprep.subr.bf16.mxu0 0
        %3605 = vmatpush2.bf16.msra.mxu0 %v3266
        %3606 = vmatprep.subr.bf16.mxu0 0
        %3607 = vmatpush2.bf16.msra.mxu0 %v3265
        %3608 = vmatprep.subr.bf16.mxu0 0
        %3609 = vmatpush2.bf16.msra.mxu0 %v3264
        %3610 = vmatprep.subr.bf16.mxu0 0
        %3611 = vmatpush2.bf16.msra.mxu0 %v3263
        %3612 = vmatprep.subr.bf16.mxu0 0
        %3613 = vmatpush2.bf16.msra.mxu0 %v3262
        %3614 = vmatprep.mubr.bf16.mxu0 %v2679
        %3615 = vmatmul.mubr.bf16.gmra.mxu0 %v2678
        %v3616 = vpop.f32.mrf.mxu0
        %v3617 = vadd.f32 %v3577, %v3616
        %v3618 = vpop.f32.mrf.mxu0
        %v3619 = vpop.f32.mrf.mxu0
        %v3620 = vpop.f32.mrf.mxu0
        %3621 = vdwg.mxu0
        %3622 = vmatprep.subr.bf16.mxu0 0
        %3623 = vmatpush1.bf16.msra.mxu0 %v3277
        %3624 = vmatprep.subr.bf16.mxu0 0
        %3625 = vmatpush1.bf16.msra.mxu0 %v3276
        %3626 = vmatprep.subr.bf16.mxu0 0
        %3627 = vmatpush1.bf16.msra.mxu0 %v3275
        %3628 = vmatprep.subr.bf16.mxu0 0
        %3629 = vmatpush1.bf16.msra.mxu0 %v3274
        %3630 = vmatprep.subr.bf16.mxu0 0
        %3631 = vmatpush1.bf16.msra.mxu0 %v3273
        %3632 = vmatprep.subr.bf16.mxu0 0
        %3633 = vmatpush1.bf16.msra.mxu0 %v3272
        %3634 = vmatprep.subr.bf16.mxu0 0
        %3635 = vmatpush1.bf16.msra.mxu0 %v3271
        %3636 = vmatprep.subr.bf16.mxu0 0
        %3637 = vmatpush1.bf16.msra.mxu0 %v3270
        %3638 = vmatprep.subr.bf16.mxu0 0
        %3639 = vmatpush2.bf16.msra.mxu0 %v3285
        %3640 = vmatprep.subr.bf16.mxu0 0
        %3641 = vmatpush2.bf16.msra.mxu0 %v3284
        %3642 = vmatprep.subr.bf16.mxu0 0
        %3643 = vmatpush2.bf16.msra.mxu0 %v3283
        %3644 = vmatprep.subr.bf16.mxu0 0
        %3645 = vmatpush2.bf16.msra.mxu0 %v3282
        %3646 = vmatprep.subr.bf16.mxu0 0
        %3647 = vmatpush2.bf16.msra.mxu0 %v3281
        %3648 = vmatprep.subr.bf16.mxu0 0
        %3649 = vmatpush2.bf16.msra.mxu0 %v3280
        %3650 = vmatprep.subr.bf16.mxu0 0
        %3651 = vmatpush2.bf16.msra.mxu0 %v3279
        %3652 = vmatprep.subr.bf16.mxu0 0
        %3653 = vmatpush2.bf16.msra.mxu0 %v3278
        %3654 = vmatprep.mubr.bf16.mxu0 %v2681
        %3655 = vmatmul.mubr.bf16.gmra.mxu0 %v2680
        %v3656 = vpop.f32.mrf.mxu0
        %v3657 = vadd.f32 %v3617, %v3656
        %v3658 = vpop.f32.mrf.mxu0
        %v3659 = vpop.f32.mrf.mxu0
        %v3660 = vpop.f32.mrf.mxu0
        %3661 = vdwg.mxu0
        %3662 = vmatprep.subr.bf16.mxu0 0
        %3663 = vmatpush1.bf16.msra.mxu0 %v3293
        %3664 = vmatprep.subr.bf16.mxu0 0
        %3665 = vmatpush1.bf16.msra.mxu0 %v3292
        %3666 = vmatprep.subr.bf16.mxu0 0
        %3667 = vmatpush1.bf16.msra.mxu0 %v3291
        %3668 = vmatprep.subr.bf16.mxu0 0
        %3669 = vmatpush1.bf16.msra.mxu0 %v3290
        %3670 = vmatprep.subr.bf16.mxu0 0
        %3671 = vmatpush1.bf16.msra.mxu0 %v3289
        %3672 = vmatprep.subr.bf16.mxu0 0
        %3673 = vmatpush1.bf16.msra.mxu0 %v3288
        %3674 = vmatprep.subr.bf16.mxu0 0
        %3675 = vmatpush1.bf16.msra.mxu0 %v3287
        %3676 = vmatprep.subr.bf16.mxu0 0
        %3677 = vmatpush1.bf16.msra.mxu0 %v3286
        %3678 = vmatprep.subr.bf16.mxu0 0
        %3679 = vmatpush2.bf16.msra.mxu0 %v3301
        %3680 = vmatprep.subr.bf16.mxu0 0
        %3681 = vmatpush2.bf16.msra.mxu0 %v3300
        %3682 = vmatprep.subr.bf16.mxu0 0
        %3683 = vmatpush2.bf16.msra.mxu0 %v3299
        %3684 = vmatprep.subr.bf16.mxu0 0
        %3685 = vmatpush2.bf16.msra.mxu0 %v3298
        %3686 = vmatprep.subr.bf16.mxu0 0
        %3687 = vmatpush2.bf16.msra.mxu0 %v3297
        %3688 = vmatprep.subr.bf16.mxu0 0
        %3689 = vmatpush2.bf16.msra.mxu0 %v3296
        %3690 = vmatprep.subr.bf16.mxu0 0
        %3691 = vmatpush2.bf16.msra.mxu0 %v3295
        %3692 = vmatprep.subr.bf16.mxu0 0
        %3693 = vmatpush2.bf16.msra.mxu0 %v3294
        %3694 = vmatprep.mubr.bf16.mxu0 %v2683
        %3695 = vmatmul.mubr.bf16.gmra.mxu0 %v2682
        %v3696 = vpop.f32.mrf.mxu0
        %v3697 = vadd.f32 %v3657, %v3696
        %v3698 = vpop.f32.mrf.mxu0
        %v3699 = vpop.f32.mrf.mxu0
        %v3700 = vpop.f32.mrf.mxu0
        %3701 = vdwg.mxu0
        %3702 = vmatprep.subr.bf16.mxu0 0
        %3703 = vmatpush1.bf16.msra.mxu0 %v3309
        %3704 = vmatprep.subr.bf16.mxu0 0
        %3705 = vmatpush1.bf16.msra.mxu0 %v3308
        %3706 = vmatprep.subr.bf16.mxu0 0
        %3707 = vmatpush1.bf16.msra.mxu0 %v3307
        %3708 = vmatprep.subr.bf16.mxu0 0
        %3709 = vmatpush1.bf16.msra.mxu0 %v3306
        %3710 = vmatprep.subr.bf16.mxu0 0
        %3711 = vmatpush1.bf16.msra.mxu0 %v3305
        %3712 = vmatprep.subr.bf16.mxu0 0
        %3713 = vmatpush1.bf16.msra.mxu0 %v3304
        %3714 = vmatprep.subr.bf16.mxu0 0
        %3715 = vmatpush1.bf16.msra.mxu0 %v3303
        %3716 = vmatprep.subr.bf16.mxu0 0
        %3717 = vmatpush1.bf16.msra.mxu0 %v3302
        %3718 = vmatprep.subr.bf16.mxu0 0
        %3719 = vmatpush2.bf16.msra.mxu0 %v3317
        %3720 = vmatprep.subr.bf16.mxu0 0
        %3721 = vmatpush2.bf16.msra.mxu0 %v3316
        %3722 = vmatprep.subr.bf16.mxu0 0
        %3723 = vmatpush2.bf16.msra.mxu0 %v3315
        %3724 = vmatprep.subr.bf16.mxu0 0
        %3725 = vmatpush2.bf16.msra.mxu0 %v3314
        %3726 = vmatprep.subr.bf16.mxu0 0
        %3727 = vmatpush2.bf16.msra.mxu0 %v3313
        %3728 = vmatprep.subr.bf16.mxu0 0
        %3729 = vmatpush2.bf16.msra.mxu0 %v3312
        %3730 = vmatprep.subr.bf16.mxu0 0
        %3731 = vmatpush2.bf16.msra.mxu0 %v3311
        %3732 = vmatprep.subr.bf16.mxu0 0
        %3733 = vmatpush2.bf16.msra.mxu0 %v3310
        %3734 = vmatprep.mubr.bf16.mxu0 %v2685
        %3735 = vmatmul.mubr.bf16.gmra.mxu0 %v2684
        %v3736 = vpop.f32.mrf.mxu0
        %v3737 = vadd.f32 %v3697, %v3736
        %v3738 = vpop.f32.mrf.mxu0
        %v3739 = vpop.f32.mrf.mxu0
        %v3740 = vpop.f32.mrf.mxu0
        %3741 = vdwg.mxu0
        %3742 = vmatprep.subr.bf16.mxu0 0
        %3743 = vmatpush1.bf16.msra.mxu0 %v3325
        %3744 = vmatprep.subr.bf16.mxu0 0
        %3745 = vmatpush1.bf16.msra.mxu0 %v3324
        %3746 = vmatprep.subr.bf16.mxu0 0
        %3747 = vmatpush1.bf16.msra.mxu0 %v3323
        %3748 = vmatprep.subr.bf16.mxu0 0
        %3749 = vmatpush1.bf16.msra.mxu0 %v3322
        %3750 = vmatprep.subr.bf16.mxu0 0
        %3751 = vmatpush1.bf16.msra.mxu0 %v3321
        %3752 = vmatprep.subr.bf16.mxu0 0
        %3753 = vmatpush1.bf16.msra.mxu0 %v3320
        %3754 = vmatprep.subr.bf16.mxu0 0
        %3755 = vmatpush1.bf16.msra.mxu0 %v3319
        %3756 = vmatprep.subr.bf16.mxu0 0
        %3757 = vmatpush1.bf16.msra.mxu0 %v3318
        %3758 = vmatprep.subr.bf16.mxu0 0
        %3759 = vmatpush2.bf16.msra.mxu0 %v3333
        %3760 = vmatprep.subr.bf16.mxu0 0
        %3761 = vmatpush2.bf16.msra.mxu0 %v3332
        %3762 = vmatprep.subr.bf16.mxu0 0
        %3763 = vmatpush2.bf16.msra.mxu0 %v3331
        %3764 = vmatprep.subr.bf16.mxu0 0
        %3765 = vmatpush2.bf16.msra.mxu0 %v3330
        %3766 = vmatprep.subr.bf16.mxu0 0
        %3767 = vmatpush2.bf16.msra.mxu0 %v3329
        %3768 = vmatprep.subr.bf16.mxu0 0
        %3769 = vmatpush2.bf16.msra.mxu0 %v3328
        %3770 = vmatprep.subr.bf16.mxu0 0
        %3771 = vmatpush2.bf16.msra.mxu0 %v3327
        %3772 = vmatprep.subr.bf16.mxu0 0
        %3773 = vmatpush2.bf16.msra.mxu0 %v3326
        %3774 = vmatprep.mubr.bf16.mxu0 %v2687
        %3775 = vmatmul.mubr.bf16.gmra.mxu0 %v2686
        %v3776 = vpop.f32.mrf.mxu0
        %v3777 = vadd.f32 %v3737, %v3776
        %v3778 = vpop.f32.mrf.mxu0
        %v3779 = vpop.f32.mrf.mxu0
        %v3780 = vpop.f32.mrf.mxu0
        %3781 = vdwg.mxu0
        %v3782 = vadd.f32 %v1665, %v3777
        %v3783 = vsel %vm522, %v3782, 0.0
        %3784 = vadd.xlane.f32.xlu0 %v3783
        %v3785 = vpop.xlane.xlu0 %3784
        %v3786 = vmul.f32 %v3785, %v1641
        %v3787 = vsub.f32 %v3782, %v3786
        %v3788 = vmul.f32 %v3787, %v3787
        %v3789 = vsel %vm522, %v3788, 0.0
        %3790 = vadd.xlane.f32.xlu0 %v3789
        %v3791 = vpop.xlane.xlu0 %3790
        %v3792 = vmul.f32 %v3791, %v1641
        %v3793 = vadd.f32 %v3792, 1e-05
        %v3794 = vrsqrt.pop %v3793
        %v3795 = vmul.f32 %v3787, %v3794
        %v3797 = vlaneseq
        %v3798 = vshrl.u32 %v3797, 7
        %v3799 = vsub.s32 0, %v3798
        %v3800 = vrot.slane %v865, %v3799
        %v3802 = vmul.f32 %v3795, %v3800
        %v3804 = vlaneseq
        %v3805 = vshrl.u32 %v3804, 7
        %v3806 = vsub.s32 0, %v3805
        %v3807 = vrot.slane %v866, %v3806
        %v3809 = vadd.f32 %v3802, %v3807
        %3810 = vst.msk [vmem:[%s481] sm:$0xff] %vm522, %v3809
        %s3811 = sand.u32 %s352, 1
        %s3812 = scalar_lea.sflag [#allocation3], %s3811
        %s3813 = sand.u32 %s352, 1
        %s3814 = smul.addr %s3813, 8
        %s3815 = scalar_lea.vmem [#allocation2], %s3814
        // Predicated region
        $region81: #{tpu_custom_call.1} parent=75 // pred_check
          %p3816 = pneg %p362
        $region82: #{tpu_custom_call.1} parent=75 // pred_check_branch
          %3818 = sbr.rel (%p3816) target = $region84
        $region83: #{tpu_custom_call.1} parent=75 // pred_region
          %s3820 = ssub.s32 128, 128
          %3821 = vsyncadd %s3812, %s3820
          %s3822 = smul.addr %s32, 128
          %s3823 = scalar_lea.hbm %s14, %s3822
          %s3825 = sshll.u32 %s3815, 4
          %s3826 = int_to_ptr.vmem [resolvable:$true] %s3825
          %3828 = dma.vmem_to_hbm [thread:$0]  %s3826, 128, %s3823, %s3812
        $region84: #{tpu_custom_call.1} parent=75 // pred_fallthru
          _
      $region76: #{tpu_custom_call.1} parent=5 // pred_fallthru
        _
      %p3829 = scmp.le.s32.totalorder 2, %s23
      // Predicated region
      $region85: #{tpu_custom_call.1} parent=5 // pred_check
        %p3830 = pneg %p3829
      $region86: #{tpu_custom_call.1} parent=5 // pred_check_branch
        %3832 = sbr.rel (%p3830) target = $region88
      $region87: #{tpu_custom_call.1} parent=5 // pred_region
        %s3833 = ssub.s32 %s23, 2
        // Predicated region
        $region89: #{tpu_custom_call.1} parent=87 // pred_check
          %p3834 = pneg %p368
        $region90: #{tpu_custom_call.1} parent=87 // pred_check_branch
          %3836 = sbr.rel (%p3834) target = $region92
        $region91: #{tpu_custom_call.1} parent=87 // pred_region
          %s3837 = sand.u32 %s353, 1
          %s3838 = scalar_lea.sflag [#allocation3], %s3837
          %s3839 = sand.u32 %s353, 1
          %s3840 = smul.addr %s3839, 8
          %s3841 = scalar_lea.vmem [#allocation2], %s3840
          %3842 = dma.done %s3838, 128
        $region92: #{tpu_custom_call.1} parent=87 // pred_fallthru
          _
      $region88: #{tpu_custom_call.1} parent=5 // pred_fallthru
        _
    $region6: #{tpu_custom_call.1} parent=1 // loop_footer
      %s27 = sadd.s32 1, %s23
    $region7: #{tpu_custom_call.1} parent=1 // loop_footer_branch
      %22 = sbr.rel target = $region3
    $region8: #{tpu_custom_call.1} parent=1 // loop_exit
      _
    %3843 = vsyncpa [#allocation3], 1
    %s3844 = scalar_lea.sflag [#allocation3], 1
    %3845 = vsyncpa %s3844, 1

</llo_original>
